<compile_context>
chip_gen: v7x
topology: tpu7x:2x2x1
jax: 0.10.0
libtpu: 0.0.40
codegen_flags: <defaults>
</compile_context>

<pallas_src>
import math

import jax
import jax.numpy as jnp
from jax.experimental import pallas as pl
from jax.experimental.pallas import tpu as pltpu


# ----------------------------------------------------------------------------
# Kernels
# ----------------------------------------------------------------------------
def _ffn_resident_kernel(x_ref, w1_ref, b1_ref, w2_ref, b2_ref, o_ref):
    """Whole hidden dim resident in VMEM: one pass per row tile, no accumulator."""
    x = x_ref[...].astype(w1_ref.dtype)                       # cast in-kernel
    h = jnp.dot(x, w1_ref[...], preferred_element_type=jnp.float32)
    h = jnp.maximum(h + b1_ref[...], 0.0)                     # bias + ReLU
    # dropout == Identity (module default dropout=None) -> nothing to do.
    acc = jnp.dot(h.astype(w2_ref.dtype), w2_ref[...],
                  preferred_element_type=jnp.float32)
    o_ref[...] = (acc + b2_ref[...]).astype(o_ref.dtype)


def _ffn_streamed_kernel(x_ref, w1_ref, b1_ref, w2_ref, b2_ref, o_ref, acc_ref):
    """Hidden dim streamed in tiles (reduction axis last), f32 VMEM accumulator."""
    j = pl.program_id(1)

    @pl.when(j == 0)
    def _init():
        acc_ref[...] = jnp.zeros_like(acc_ref)

    x = x_ref[...].astype(w1_ref.dtype)                       # cast in-kernel
    h = jnp.dot(x, w1_ref[...], preferred_element_type=jnp.float32)
    h = jnp.maximum(h + b1_ref[...], 0.0)                     # bias + ReLU
    # dropout == Identity (module default dropout=None) -> nothing to do.
    acc_ref[...] += jnp.dot(h.astype(w2_ref.dtype), w2_ref[...],
                            preferred_element_type=jnp.float32)

    @pl.when(j == pl.num_programs(1) - 1)
    def _finalize():
        o_ref[...] = (acc_ref[...] + b2_ref[...]).astype(o_ref.dtype)


# ----------------------------------------------------------------------------
# Helpers
# ----------------------------------------------------------------------------
def _pick_block(total, target, quantum, fits=lambda t: True):
    """Largest block <= target that divides `total`, is a multiple of `quantum`
    and satisfies `fits`; falls back to `quantum` (or full extent)."""
    t = (min(target, total) // quantum) * quantum
    while t >= quantum:
        if total % t == 0 and fits(t):
            return t
        t -= quantum
    return quantum if total % quantum == 0 else total


def _vmem_capacity_bytes():
    try:
        return int(pltpu.get_tpu_info().vmem_capacity_bytes)
    except Exception:
        return 64 << 20   # conservative: v7x per-TensorCore physical VMEM


def _launch(mode, x2, w1c, b1r, w2c, b2r, Mp, D, H, tm, th, out_dtype,
            use_buffered, vmem_limit):
    if mode == "resident":
        cp = pltpu.CompilerParams(dimension_semantics=("parallel",),
                                  vmem_limit_bytes=vmem_limit)
        # Resident weights: constant index map -> fetched once. Buffered(1)
        # avoids allocating a useless second buffer for them (halves weight VMEM).
        wkw = dict(pipeline_mode=pl.Buffered(1)) if use_buffered else {}
        grid_spec = pltpu.PrefetchScalarGridSpec(
            num_scalar_prefetch=0,
            grid=(Mp // tm,),
            in_specs=[
                pl.BlockSpec((tm, D), lambda i: (i, 0)),          # x rows
                pl.BlockSpec((D, H), lambda i: (0, 0), **wkw),    # W1 (resident)
                pl.BlockSpec((1, H), lambda i: (0, 0)),           # b1
                pl.BlockSpec((H, D), lambda i: (0, 0), **wkw),    # W2 (resident)
                pl.BlockSpec((1, D), lambda i: (0, 0)),           # b2
            ],
            out_specs=pl.BlockSpec((tm, D), lambda i: (i, 0)),
        )
        kernel = _ffn_resident_kernel
    else:
        cp = pltpu.CompilerParams(dimension_semantics=("parallel", "arbitrary"),
                                  vmem_limit_bytes=vmem_limit)
        grid_spec = pltpu.PrefetchScalarGridSpec(
            num_scalar_prefetch=0,
            grid=(Mp // tm, H // th),
            in_specs=[
                pl.BlockSpec((tm, D), lambda i, j: (i, 0)),   # x rows (not re-DMA'd over j)
                pl.BlockSpec((D, th), lambda i, j: (0, j)),   # W1 hidden slab
                pl.BlockSpec((1, th), lambda i, j: (0, j)),   # b1 hidden slab
                pl.BlockSpec((th, D), lambda i, j: (j, 0)),   # W2 hidden slab
                pl.BlockSpec((1, D), lambda i, j: (0, 0)),    # b2
            ],
            out_specs=pl.BlockSpec((tm, D), lambda i, j: (i, 0)),
            scratch_shapes=[pltpu.VMEM((tm, D), jnp.float32)],
        )
        kernel = _ffn_streamed_kernel

    return pl.pallas_call(
        kernel,
        out_shape=jax.ShapeDtypeStruct((Mp, D), out_dtype),
        grid_spec=grid_spec,
        compiler_params=cp,
    )(x2, w1c, b1r, w2c, b2r)


# ----------------------------------------------------------------------------
# Fused feed-forward entry point
# ----------------------------------------------------------------------------
def feed_forward(x, w1, b1, w2, b2, *, block_m=1024, block_h=2048,
                 compute_dtype=jnp.bfloat16, out_dtype=None):
    """x: (B, L, D); w1: (D, H); b1: (H,); w2: (H, D); b2: (D,). -> (B, L, D)."""
    B, L, D = x.shape
    H = w1.shape[1]
    M = B * L
    out_dtype = x.dtype if out_dtype is None else out_dtype

    # Weights are expected pre-cast (module stores bf16 copies at init); only
    # cast here if a caller passes f32 weights directly.
    w1c = w1 if w1.dtype == compute_dtype else w1.astype(compute_dtype)
    w2c = w2 if w2.dtype == compute_dtype else w2.astype(compute_dtype)
    b1r = b1.reshape(1, H).astype(jnp.float32)
    b2r = b2.reshape(1, D).astype(jnp.float32)

    # Flatten (B, L) -> M and pad rows to a sublane (8) multiple.
    x2 = x.reshape(M, D)
    Mp = ((M + 7) // 8) * 8
    if Mp != M:
        x2 = jnp.pad(x2, ((0, Mp - M), (0, 0)))

    x_it = x2.dtype.itemsize
    o_it = jnp.dtype(out_dtype).itemsize
    w_it = jnp.dtype(compute_dtype).itemsize

    cap = _vmem_capacity_bytes()
    budget = int(cap * 0.8)

    # ---- VMEM footprint models (generous; include f32 fc1 intermediate) ----
    def resident_fp(tm, w_buf=2):
        return ((D * H + H * D) * w_it * w_buf        # resident W1 + W2
                + 2 * tm * D * (x_it + o_it)          # double-buffered x / out
                + 2 * tm * H * 4                      # f32 fc1 intermediate
                + (H + D) * 4 + (1 << 20))            # biases + slack

    def streamed_fp(tm, th):
        return (2 * (D * th + th * D) * w_it          # double-buffered weight slabs
                + 2 * tm * D * (x_it + o_it)          # double-buffered x / out
                + tm * D * 4                          # f32 accumulator scratch
                + 2 * tm * th * 4                     # f32 fc1 intermediate
                + 2 * (th + D) * 4 + (1 << 20))

    resident_possible = resident_fp(8) <= budget

    # ---- Row-tile target: as big as possible for arithmetic intensity, but
    #      leave >= 2 row tiles so the "parallel" M axis feeds both v7x TCs. ----
    tm_target = block_m
    if Mp >= 16:
        half = max((Mp // 2) // 8 * 8, 8)
        # Resident path: intensity doesn't depend on tm -> always split.
        # Streamed path: only split if tiles stay reasonably large.
        if resident_possible or half >= 256:
            tm_target = min(tm_target, half)

    plans = []
    if resident_possible:
        tm_r = _pick_block(Mp, tm_target, 8, fits=lambda t: resident_fp(t) <= budget)
        fp_r = resident_fp(tm_r)
        plans.append(("resident", tm_r, H, True, fp_r))    # Buffered(1) resident weights
        plans.append(("resident", tm_r, H, False, fp_r))   # fallback: default buffering
    # Streamed-hidden fallback (always available).
    tm_s = _pick_block(Mp, tm_target, 8,
                       fits=lambda t: streamed_fp(t, min(H, 128)) <= budget)
    th_s = _pick_block(H, block_h, 128,
                       fits=lambda t: streamed_fp(tm_s, t) <= budget)
    plans.append(("streamed", tm_s, th_s, False, streamed_fp(tm_s, th_s)))

    out = None
    last_err = None
    for mode, tm, th, use_buffered, fp in plans:
        vmem_limit = int(min(0.9 * cap, max(fp + (8 << 20), 32 << 20)))
        try:
            out = _launch(mode, x2, w1c, b1r, w2c, b2r, Mp, D, H, tm, th,
                          out_dtype, use_buffered, vmem_limit)
            break
        except Exception as e:      # lowering / VMEM failure -> try next plan
            last_err = e
            out = None
    if out is None:
        raise last_err

    if Mp != M:
        out = out[:M]
    return out.reshape(B, L, D)


# ----------------------------------------------------------------------------
# Module wrapper (parameters follow torch nn.Linear defaults).
# ----------------------------------------------------------------------------
class FeedForwardPallas:
    def __init__(self, dim, mlp_hidden_dim=2048, dropout=None, *, key,
                 compute_dtype=jnp.bfloat16):
        assert dropout is None, "dropout > 0 not implemented (module default is None)"
        self.dim = dim
        self.hidden = mlp_hidden_dim
        self.compute_dtype = compute_dtype

        k1, k2, k3, k4 = jax.random.split(key, 4)
        bound1 = 1.0 / math.sqrt(dim)              # fc1: in_features = dim
        bound2 = 1.0 / math.sqrt(mlp_hidden_dim)   # fc2: in_features = hidden

        # torch Linear stores weight as (out, in); keep it pre-transposed as
        # (in, out) so the kernel computes x @ W directly.
        self.w1 = jax.random.uniform(k1, (dim, mlp_hidden_dim), jnp.float32,
                                     -bound1, bound1)
        self.b1 = jax.random.uniform(k2, (mlp_hidden_dim,), jnp.float32,
                                     -bound1, bound1)
        self.w2 = jax.random.uniform(k3, (mlp_hidden_dim, dim), jnp.float32,
                                     -bound2, bound2)
        self.b2 = jax.random.uniform(k4, (dim,), jnp.float32, -bound2, bound2)

        # Pre-cast ONCE (perf feedback): no per-call weight casts / HBM passes.
        self.w1_c = self.w1.astype(compute_dtype)
        self.w2_c = self.w2.astype(compute_dtype)

    def __call__(self, x, *, out_dtype=None):
        return feed_forward(x, self.w1_c, self.b1, self.w2_c, self.b2,
                            compute_dtype=self.compute_dtype, out_dtype=out_dtype)

    # Pure-JAX f32 reference (mirrors the PyTorch forward).
    def reference(self, x):
        h = jnp.maximum(x @ self.w1 + self.b1, 0.0)
        return h @ self.w2 + self.b2


if __name__ == "__main__":
    B, L, D, Hid = 2, 8, 128, 1024   # batch, seq, dim, mlp_hidden_dim

    root = jax.random.PRNGKey(0)
    kx, kparam = jax.random.split(root, 2)
    x = jax.random.normal(kx, (B, L, D), jnp.float32)

    ffn = FeedForwardPallas(D, mlp_hidden_dim=Hid, dropout=None, key=kparam)

    out = jax.block_until_ready(ffn(x))

    assert out.shape == (B, L, D)
    assert out.dtype == x.dtype

    ref = ffn.reference(x)
    # bf16 MXU inputs with f32 accumulation vs. full-f32 reference.
    assert jnp.allclose(out, ref, atol=2e-2, rtol=2e-2), "FFN output mismatch"

    print("KERNEL_OK")
</pallas_src>

<mosaic_0001>
module attributes {stable_mosaic.version = 11 : i64} {
  func.func @_ffn_resident_kernel(%arg0: i32, %arg1: memref<8x128xf32, #tpu.memory_space<vmem>>, %arg2: memref<128x1024xbf16, #tpu.memory_space<vmem>>, %arg3: memref<1x1024xf32, #tpu.memory_space<vmem>>, %arg4: memref<1024x128xbf16, #tpu.memory_space<vmem>>, %arg5: memref<1x128xf32, #tpu.memory_space<vmem>>, %arg6: memref<8x128xf32, #tpu.memory_space<vmem>>) attributes {dimension_semantics = [#tpu.dimension_semantics<parallel>], iteration_bounds = array<i64: 2>, scalar_prefetch = 0 : i64, scratch_operands = 0 : i64, tpu.core_type = #tpu.core_type<tc>, window_params = [{transform_indices = @transform_0, window_bounds = array<i64: 8, 128>}, {pipeline_mode = #tpu.pipeline_mode<synchronous>, transform_indices = @transform_1, window_bounds = array<i64: 128, 1024>}, {pipeline_mode = #tpu.pipeline_mode<synchronous>, transform_indices = @transform_2, window_bounds = array<i64: 1, 1024>}, {pipeline_mode = #tpu.pipeline_mode<synchronous>, transform_indices = @transform_3, window_bounds = array<i64: 1024, 128>}, {pipeline_mode = #tpu.pipeline_mode<synchronous>, transform_indices = @transform_4, window_bounds = array<i64: 1, 128>}, {transform_indices = @transform_5, window_bounds = array<i64: 8, 128>}]} {
    %c0 = arith.constant 0 : index
    %c0_0 = arith.constant 0 : index
    %0 = vector.load %arg1[%c0, %c0_0] : memref<8x128xf32, #tpu.memory_space<vmem>>, vector<8x128xf32>
    %1 = arith.truncf %0 : vector<8x128xf32> to vector<8x128xbf16>
    %c0_1 = arith.constant 0 : index
    %c0_2 = arith.constant 0 : index
    %2 = vector.load %arg2[%c0_1, %c0_2] : memref<128x1024xbf16, #tpu.memory_space<vmem>>, vector<128x1024xbf16>
    %cst = arith.constant dense<0.000000e+00> : vector<8x1024xf32>
    %3 = tpu.matmul %1, %2, %cst {dimension_numbers = #tpu.dot_dimension_numbers<[1], [0], [0], [1], [0, 0, 1, 1], [], []>} : vector<8x128xbf16>, vector<128x1024xbf16>, vector<8x1024xf32> -> vector<8x1024xf32>
    %c0_3 = arith.constant 0 : index
    %c0_4 = arith.constant 0 : index
    %4 = vector.load %arg3[%c0_3, %c0_4] : memref<1x1024xf32, #tpu.memory_space<vmem>>, vector<1x1024xf32>
    %5 = vector.broadcast %4 : vector<1x1024xf32> to vector<8x1024xf32>
    %6 = arith.addf %3, %5 : vector<8x1024xf32>
    %cst_5 = arith.constant 0.000000e+00 : f32
    %7 = vector.broadcast %cst_5 : f32 to vector<8x1024xf32>
    %8 = arith.maximumf %6, %7 : vector<8x1024xf32>
    %9 = arith.truncf %8 : vector<8x1024xf32> to vector<8x1024xbf16>
    %c0_6 = arith.constant 0 : index
    %c0_7 = arith.constant 0 : index
    %10 = vector.load %arg4[%c0_6, %c0_7] : memref<1024x128xbf16, #tpu.memory_space<vmem>>, vector<1024x128xbf16>
    %cst_8 = arith.constant dense<0.000000e+00> : vector<8x128xf32>
    %11 = tpu.matmul %9, %10, %cst_8 {dimension_numbers = #tpu.dot_dimension_numbers<[1], [0], [0], [1], [0, 0, 1, 1], [], []>} : vector<8x1024xbf16>, vector<1024x128xbf16>, vector<8x128xf32> -> vector<8x128xf32>
    %c0_9 = arith.constant 0 : index
    %c0_10 = arith.constant 0 : index
    %12 = vector.load %arg5[%c0_9, %c0_10] : memref<1x128xf32, #tpu.memory_space<vmem>>, vector<1x128xf32>
    %13 = vector.broadcast %12 : vector<1x128xf32> to vector<8x128xf32>
    %14 = arith.addf %11, %13 : vector<8x128xf32>
    %c0_11 = arith.constant 0 : index
    %c0_12 = arith.constant 0 : index
    %15 = vector.load %arg6[%c0_11, %c0_12] : memref<8x128xf32, #tpu.memory_space<vmem>>, vector<8x128xf32>
    tpu.vector_store %arg6[%c0_11, %c0_12], %14 {strides = array<i32>} : memref<8x128xf32, #tpu.memory_space<vmem>>, vector<8x128xf32>,
    return
  }
  func.func @transform_0(%arg0: i32) -> (i32, i32) {
    %c0_i32 = arith.constant 0 : i32
    %c0_i32_0 = arith.constant 0 : i32
    return %arg0, %c0_i32 : i32, i32
  }
  func.func @transform_1(%arg0: i32) -> (i32, i32) {
    %c0_i32 = arith.constant 0 : i32
    %c0_i32_0 = arith.constant 0 : i32
    %c0_i32_1 = arith.constant 0 : i32
    return %c0_i32, %c0_i32_0 : i32, i32
  }
  func.func @transform_2(%arg0: i32) -> (i32, i32) {
    %c0_i32 = arith.constant 0 : i32
    %c0_i32_0 = arith.constant 0 : i32
    %c0_i32_1 = arith.constant 0 : i32
    return %c0_i32, %c0_i32_0 : i32, i32
  }
  func.func @transform_3(%arg0: i32) -> (i32, i32) {
    %c0_i32 = arith.constant 0 : i32
    %c0_i32_0 = arith.constant 0 : i32
    %c0_i32_1 = arith.constant 0 : i32
    return %c0_i32, %c0_i32_0 : i32, i32
  }
  func.func @transform_4(%arg0: i32) -> (i32, i32) {
    %c0_i32 = arith.constant 0 : i32
    %c0_i32_0 = arith.constant 0 : i32
    %c0_i32_1 = arith.constant 0 : i32
    return %c0_i32, %c0_i32_0 : i32, i32
  }
  func.func @transform_5(%arg0: i32) -> (i32, i32) {
    %c0_i32 = arith.constant 0 : i32
    %c0_i32_0 = arith.constant 0 : i32
    return %arg0, %c0_i32 : i32, i32
  }
}

module attributes {stable_mosaic.version = 11 : i64} {
  func.func @_ffn_resident_kernel(%arg0: i32, %arg1: memref<8x128xf32, #tpu.memory_space<vmem>>, %arg2: memref<128x1024xbf16, #tpu.memory_space<vmem>>, %arg3: memref<1x1024xf32, #tpu.memory_space<vmem>>, %arg4: memref<1024x128xbf16, #tpu.memory_space<vmem>>, %arg5: memref<1x128xf32, #tpu.memory_space<vmem>>, %arg6: memref<8x128xf32, #tpu.memory_space<vmem>>) attributes {dimension_semantics = [#tpu.dimension_semantics<parallel>], iteration_bounds = array<i64: 2>, scalar_prefetch = 0 : i64, scratch_operands = 0 : i64, tpu.core_type = #tpu.core_type<tc>, window_params = [{transform_indices = @transform_0, window_bounds = array<i64: 8, 128>}, {pipeline_mode = #tpu.pipeline_mode<synchronous>, transform_indices = @transform_1, window_bounds = array<i64: 128, 1024>}, {pipeline_mode = #tpu.pipeline_mode<synchronous>, transform_indices = @transform_2, window_bounds = array<i64: 1, 1024>}, {pipeline_mode = #tpu.pipeline_mode<synchronous>, transform_indices = @transform_3, window_bounds = array<i64: 1024, 128>}, {pipeline_mode = #tpu.pipeline_mode<synchronous>, transform_indices = @transform_4, window_bounds = array<i64: 1, 128>}, {transform_indices = @transform_5, window_bounds = array<i64: 8, 128>}]} {
    %c0 = arith.constant 0 : index
    %c0_0 = arith.constant 0 : index
    %0 = vector.load %arg1[%c0, %c0_0] : memref<8x128xf32, #tpu.memory_space<vmem>>, vector<8x128xf32>
    %1 = arith.truncf %0 : vector<8x128xf32> to vector<8x128xbf16>
    %c0_1 = arith.constant 0 : index
    %c0_2 = arith.constant 0 : index
    %2 = vector.load %arg2[%c0_1, %c0_2] : memref<128x1024xbf16, #tpu.memory_space<vmem>>, vector<128x1024xbf16>
    %cst = arith.constant dense<0.000000e+00> : vector<8x1024xf32>
    %3 = tpu.matmul %1, %2, %cst {dimension_numbers = #tpu.dot_dimension_numbers<[1], [0], [0], [1], [0, 0, 1, 1], [], []>} : vector<8x128xbf16>, vector<128x1024xbf16>, vector<8x1024xf32> -> vector<8x1024xf32>
    %c0_3 = arith.constant 0 : index
    %c0_4 = arith.constant 0 : index
    %4 = vector.load %arg3[%c0_3, %c0_4] : memref<1x1024xf32, #tpu.memory_space<vmem>>, vector<1x1024xf32>
    %5 = vector.broadcast %4 : vector<1x1024xf32> to vector<8x1024xf32>
    %6 = arith.addf %3, %5 : vector<8x1024xf32>
    %cst_5 = arith.constant 0.000000e+00 : f32
    %7 = vector.broadcast %cst_5 : f32 to vector<8x1024xf32>
    %8 = arith.maximumf %6, %7 : vector<8x1024xf32>
    %9 = arith.truncf %8 : vector<8x1024xf32> to vector<8x1024xbf16>
    %c0_6 = arith.constant 0 : index
    %c0_7 = arith.constant 0 : index
    %10 = vector.load %arg4[%c0_6, %c0_7] : memref<1024x128xbf16, #tpu.memory_space<vmem>>, vector<1024x128xbf16>
    %cst_8 = arith.constant dense<0.000000e+00> : vector<8x128xf32>
    %11 = tpu.matmul %9, %10, %cst_8 {dimension_numbers = #tpu.dot_dimension_numbers<[1], [0], [0], [1], [0, 0, 1, 1], [], []>} : vector<8x1024xbf16>, vector<1024x128xbf16>, vector<8x128xf32> -> vector<8x128xf32>
    %c0_9 = arith.constant 0 : index
    %c0_10 = arith.constant 0 : index
    %12 = vector.load %arg5[%c0_9, %c0_10] : memref<1x128xf32, #tpu.memory_space<vmem>>, vector<1x128xf32>
    %13 = vector.broadcast %12 : vector<1x128xf32> to vector<8x128xf32>
    %14 = arith.addf %11, %13 : vector<8x128xf32>
    %c0_11 = arith.constant 0 : index
    %c0_12 = arith.constant 0 : index
    %15 = vector.load %arg6[%c0_11, %c0_12] : memref<8x128xf32, #tpu.memory_space<vmem>>, vector<8x128xf32>
    tpu.vector_store %arg6[%c0_11, %c0_12], %14 {strides = array<i32>} : memref<8x128xf32, #tpu.memory_space<vmem>>, vector<8x128xf32>,
    return
  }
  func.func @transform_0(%arg0: i32) -> (i32, i32) {
    %c0_i32 = arith.constant 0 : i32
    %c0_i32_0 = arith.constant 0 : i32
    return %arg0, %c0_i32 : i32, i32
  }
  func.func @transform_1(%arg0: i32) -> (i32, i32) {
    %c0_i32 = arith.constant 0 : i32
    %c0_i32_0 = arith.constant 0 : i32
    %c0_i32_1 = arith.constant 0 : i32
    return %c0_i32, %c0_i32_0 : i32, i32
  }
  func.func @transform_2(%arg0: i32) -> (i32, i32) {
    %c0_i32 = arith.constant 0 : i32
    %c0_i32_0 = arith.constant 0 : i32
    %c0_i32_1 = arith.constant 0 : i32
    return %c0_i32, %c0_i32_0 : i32, i32
  }
  func.func @transform_3(%arg0: i32) -> (i32, i32) {
    %c0_i32 = arith.constant 0 : i32
    %c0_i32_0 = arith.constant 0 : i32
    %c0_i32_1 = arith.constant 0 : i32
    return %c0_i32, %c0_i32_0 : i32, i32
  }
  func.func @transform_4(%arg0: i32) -> (i32, i32) {
    %c0_i32 = arith.constant 0 : i32
    %c0_i32_0 = arith.constant 0 : i32
    %c0_i32_1 = arith.constant 0 : i32
    return %c0_i32, %c0_i32_0 : i32, i32
  }
  func.func @transform_5(%arg0: i32) -> (i32, i32) {
    %c0_i32 = arith.constant 0 : i32
    %c0_i32_0 = arith.constant 0 : i32
    return %arg0, %c0_i32 : i32, i32
  }
}

module attributes {stable_mosaic.version = 11 : i64} {
  func.func @_ffn_streamed_kernel(%arg0: i32, %arg1: i32, %arg2: memref<8x128xf32, #tpu.memory_space<vmem>>, %arg3: memref<128x1024xbf16, #tpu.memory_space<vmem>>, %arg4: memref<1x1024xf32, #tpu.memory_space<vmem>>, %arg5: memref<1024x128xbf16, #tpu.memory_space<vmem>>, %arg6: memref<1x128xf32, #tpu.memory_space<vmem>>, %arg7: memref<8x128xf32, #tpu.memory_space<vmem>>, %arg8: memref<8x128xf32, #tpu.memory_space<vmem>>) attributes {dimension_semantics = [#tpu.dimension_semantics<parallel>, #tpu.dimension_semantics<arbitrary>], iteration_bounds = array<i64: 2, 1>, scalar_prefetch = 0 : i64, scratch_operands = 1 : i64, tpu.core_type = #tpu.core_type<tc>, window_params = [{transform_indices = @transform_0, window_bounds = array<i64: 8, 128>}, {transform_indices = @transform_1, window_bounds = array<i64: 128, 1024>}, {transform_indices = @transform_2, window_bounds = array<i64: 1, 1024>}, {transform_indices = @transform_3, window_bounds = array<i64: 1024, 128>}, {pipeline_mode = #tpu.pipeline_mode<synchronous>, transform_indices = @transform_4, window_bounds = array<i64: 1, 128>}, {transform_indices = @transform_5, window_bounds = array<i64: 8, 128>}]} {
    %c0_i32 = arith.constant 0 : i32
    %0 = arith.cmpi eq, %arg1, %c0_i32 : i32
    %1 = arith.extui %0 : i1 to i32
    %c0_i32_0 = arith.constant 0 : i32
    %2 = arith.cmpi ne, %1, %c0_i32_0 : i32
    scf.if %2 {
      %cst_16 = arith.constant 0.000000e+00 : f32
      %21 = vector.broadcast %cst_16 : f32 to vector<8x128xf32>
      %c0_17 = arith.constant 0 : index
      %c0_18 = arith.constant 0 : index
      %22 = vector.load %arg8[%c0_17, %c0_18] : memref<8x128xf32, #tpu.memory_space<vmem>>, vector<8x128xf32>
      tpu.vector_store %arg8[%c0_17, %c0_18], %21 {strides = array<i32>} : memref<8x128xf32, #tpu.memory_space<vmem>>, vector<8x128xf32>,
    } else {
    }
    %c0 = arith.constant 0 : index
    %c0_1 = arith.constant 0 : index
    %3 = vector.load %arg2[%c0, %c0_1] : memref<8x128xf32, #tpu.memory_space<vmem>>, vector<8x128xf32>
    %4 = arith.truncf %3 : vector<8x128xf32> to vector<8x128xbf16>
    %c0_2 = arith.constant 0 : index
    %c0_3 = arith.constant 0 : index
    %5 = vector.load %arg3[%c0_2, %c0_3] : memref<128x1024xbf16, #tpu.memory_space<vmem>>, vector<128x1024xbf16>
    %cst = arith.constant dense<0.000000e+00> : vector<8x1024xf32>
    %6 = tpu.matmul %4, %5, %cst {dimension_numbers = #tpu.dot_dimension_numbers<[1], [0], [0], [1], [0, 0, 1, 1], [], []>} : vector<8x128xbf16>, vector<128x1024xbf16>, vector<8x1024xf32> -> vector<8x1024xf32>
    %c0_4 = arith.constant 0 : index
    %c0_5 = arith.constant 0 : index
    %7 = vector.load %arg4[%c0_4, %c0_5] : memref<1x1024xf32, #tpu.memory_space<vmem>>, vector<1x1024xf32>
    %8 = vector.broadcast %7 : vector<1x1024xf32> to vector<8x1024xf32>
    %9 = arith.addf %6, %8 : vector<8x1024xf32>
    %cst_6 = arith.constant 0.000000e+00 : f32
    %10 = vector.broadcast %cst_6 : f32 to vector<8x1024xf32>
    %11 = arith.maximumf %9, %10 : vector<8x1024xf32>
    %c0_7 = arith.constant 0 : index
    %c0_8 = arith.constant 0 : index
    %12 = vector.load %arg8[%c0_7, %c0_8] : memref<8x128xf32, #tpu.memory_space<vmem>>, vector<8x128xf32>
    %13 = arith.truncf %11 : vector<8x1024xf32> to vector<8x1024xbf16>
    %c0_9 = arith.constant 0 : index
    %c0_10 = arith.constant 0 : index
    %14 = vector.load %arg5[%c0_9, %c0_10] : memref<1024x128xbf16, #tpu.memory_space<vmem>>, vector<1024x128xbf16>
    %cst_11 = arith.constant dense<0.000000e+00> : vector<8x128xf32>
    %15 = tpu.matmul %13, %14, %cst_11 {dimension_numbers = #tpu.dot_dimension_numbers<[1], [0], [0], [1], [0, 0, 1, 1], [], []>} : vector<8x1024xbf16>, vector<1024x128xbf16>, vector<8x128xf32> -> vector<8x128xf32>
    %16 = arith.addf %12, %15 : vector<8x128xf32>
    %c0_12 = arith.constant 0 : index
    %c0_13 = arith.constant 0 : index
    %17 = vector.load %arg8[%c0_12, %c0_13] : memref<8x128xf32, #tpu.memory_space<vmem>>, vector<8x128xf32>
    tpu.vector_store %arg8[%c0_12, %c0_13], %16 {strides = array<i32>} : memref<8x128xf32, #tpu.memory_space<vmem>>, vector<8x128xf32>,
    %c0_i32_14 = arith.constant 0 : i32
    %18 = arith.cmpi eq, %arg1, %c0_i32_14 : i32
    %19 = arith.extui %18 : i1 to i32
    %c0_i32_15 = arith.constant 0 : i32
    %20 = arith.cmpi ne, %19, %c0_i32_15 : i32
    scf.if %20 {
      %c0_16 = arith.constant 0 : index
      %c0_17 = arith.constant 0 : index
      %21 = vector.load %arg8[%c0_16, %c0_17] : memref<8x128xf32, #tpu.memory_space<vmem>>, vector<8x128xf32>
      %c0_18 = arith.constant 0 : index
      %c0_19 = arith.constant 0 : index
      %22 = vector.load %arg6[%c0_18, %c0_19] : memref<1x128xf32, #tpu.memory_space<vmem>>, vector<1x128xf32>
      %23 = vector.broadcast %22 : vector<1x128xf32> to vector<8x128xf32>
      %24 = arith.addf %21, %23 : vector<8x128xf32>
      %c0_20 = arith.constant 0 : index
      %c0_21 = arith.constant 0 : index
      %25 = vector.load %arg7[%c0_20, %c0_21] : memref<8x128xf32, #tpu.memory_space<vmem>>, vector<8x128xf32>
      tpu.vector_store %arg7[%c0_20, %c0_21], %24 {strides = array<i32>} : memref<8x128xf32, #tpu.memory_space<vmem>>, vector<8x128xf32>,
    } else {
    }
    return
  }
  func.func @transform_0(%arg0: i32, %arg1: i32) -> (i32, i32) {
    %c0_i32 = arith.constant 0 : i32
    %c0_i32_0 = arith.constant 0 : i32
    return %arg0, %c0_i32 : i32, i32
  }
  func.func @transform_1(%arg0: i32, %arg1: i32) -> (i32, i32) {
    %c0_i32 = arith.constant 0 : i32
    %c0_i32_0 = arith.constant 0 : i32
    return %c0_i32, %arg1 : i32, i32
  }
  func.func @transform_2(%arg0: i32, %arg1: i32) -> (i32, i32) {
    %c0_i32 = arith.constant 0 : i32
    %c0_i32_0 = arith.constant 0 : i32
    return %c0_i32, %arg1 : i32, i32
  }
  func.func @transform_3(%arg0: i32, %arg1: i32) -> (i32, i32) {
    %c0_i32 = arith.constant 0 : i32
    %c0_i32_0 = arith.constant 0 : i32
    return %arg1, %c0_i32 : i32, i32
  }
  func.func @transform_4(%arg0: i32, %arg1: i32) -> (i32, i32) {
    %c0_i32 = arith.constant 0 : i32
    %c0_i32_0 = arith.constant 0 : i32
    %c0_i32_1 = arith.constant 0 : i32
    return %c0_i32, %c0_i32_0 : i32, i32
  }
  func.func @transform_5(%arg0: i32, %arg1: i32) -> (i32, i32) {
    %c0_i32 = arith.constant 0 : i32
    %c0_i32_0 = arith.constant 0 : i32
    return %arg0, %c0_i32 : i32, i32
  }
}

</mosaic_0001>

<llo_original>
// kernel: tpu_custom_call.1
$region0: #{tpu_custom_call.1}
  #allocation0 [shape = 'u32[]', space=smem, size = 0x4, offset = 0x4, fixed_abs, tag = 'smem constant byte address 0x4 - core index']
  #allocation1 [shape = 'u32[144,128]{1,0:T(1,128)}', space=vmem, size = 0x12000, scoped, tag = 'internal scratch']
  %s0 = inlined_call_operand.hbm [shape: f32[16,128], index: 0, kind: input, shape index: {}]
  %s1 = inlined_call_operand.hbm [shape: bf16[128,1024], index: 1, kind: input, shape index: {}]
  %s2 = inlined_call_operand.hbm [shape: f32[1,1024], index: 2, kind: input, shape index: {}]
  %s3 = inlined_call_operand.hbm [shape: bf16[1024,128], index: 3, kind: input, shape index: {}]
  %s4 = inlined_call_operand.vmem [shape: f32[1,128], index: 4, kind: input, shape index: {}]
  %s5 = inlined_call_operand.hbm [shape: f32[16,128], index: 5, kind: output, shape index: {}]
  %s6 = sld [smem:[#allocation0]]
  $region69: #{tpu_custom_call.1} parent=0
    _
  %s8 = ssub.s32 1, %s6
  %s9 = scalar_select 0, %s8, %s6
  $region1: #{tpu_custom_call.1} parent=0
    #allocation2 [shape = 'u8[8192]{0}', space=vmem, size = 0x2000, scoped, tag = 'input window, operand 0']
    #allocation3 [shape = 's32[2]{0}', space=sflag, size = 0x8, scoped, tag = 'scoped memory for tpu_custom_call.1']
    #allocation4 [shape = 's32[2]{0}', space=sflag, size = 0x8, scoped, tag = 'scoped memory for tpu_custom_call.1']
    #allocation5 [shape = 'u8[262144]{0}', space=vmem, size = 0x40000, scoped, tag = 'input window, operand 1, single buffered']
    #allocation6 [shape = 's32[1]{0}', space=sflag, size = 0x4, scoped, tag = 'scoped memory for tpu_custom_call.1']
    #allocation7 [shape = 'u8[4096]{0}', space=vmem, size = 0x1000, scoped, tag = 'input window, operand 2, single buffered']
    #allocation8 [shape = 'u8[262144]{0}', space=vmem, size = 0x40000, scoped, tag = 'input window, operand 3, single buffered']
    #allocation9 [shape = 's32[1]{0}', space=sflag, size = 0x4, scoped, tag = 'scoped memory for tpu_custom_call.1']
    #allocation10 [shape = 'u8[8192]{0}', space=vmem, size = 0x2000, scoped, tag = 'output window, operand 0']
    %10 = vsyncpa [#allocation3], 0
    %s11 = scalar_lea.sflag [#allocation3], 1
    %12 = vsyncpa %s11, 0
    %13 = vsyncpa [#allocation6], 0
    %14 = vsyncpa [#allocation9], 0
    %15 = vsyncpa [#allocation4], 0
    %s16 = scalar_lea.sflag [#allocation4], 1
    %17 = vsyncpa %s16, 0
    loop: start=0, step=1, limit=4
    $region2: #{tpu_custom_call.1} parent=1 // loop_pre_header
      _
    $region3: #{tpu_custom_call.1} parent=1 // loop_header
      %s19 = sphi 0, %s23
      %p20 = scmp.ge.s32.totalorder %s19, 4
      %s29 = sphi 0, %s31
      %s32 = sphi 0, %s29
      %s33 = sphi 0, %s32
      %s49 = sphi 0, %s33
      %s53 = sphi 0, %s53
      %s55 = sphi 0, %s53
      %s56 = sphi 0, %s55
      %s70 = sphi 0, %s56
      %s74 = sphi 0, %s74
      %s76 = sphi 0, %s74
      %s77 = sphi 0, %s76
      %s91 = sphi 0, %s77
      %s95 = sphi 0, %s95
      %s97 = sphi 0, %s95
      %s98 = sphi 0, %s97
      %s112 = sphi 0, %s98
      %s116 = sphi 0, %s116
      %s118 = sphi 0, %s116
      %s119 = sphi 0, %s118
      %s133 = sphi 0, %s119
      %s139 = sphi 0, %s141
      %s142 = sphi 0, %s139
      %s143 = sphi 0, %s142
      %s159 = sphi 0, %s143
    $region4: #{tpu_custom_call.1} parent=1 // loop_header_branch
      %22 = sbr.rel (%p20) target = $region8
    $region5: #{tpu_custom_call.1} parent=1 // loop_body
      %s24 = ssub.s32 %s19, 1
      %s25 = ssub.s32 %s19, 2
      %s26 = sadd.s32 %s19, 1
      %s27 = ssub.s32 %s19, %s26
      %p28 = scmp.eq.s32.totalorder %s27, 0
      %s30 = sadd.s32 %s29, 1
      %s31 = scalar_select %p28, %s29, %s30
      %p34 = pneg %p28
      %p35 = scmp.eq.s32.totalorder %s19, 1
      %p36 = por %p34, %p35
      %p37 = scmp.ne.s32.totalorder %s29, %s32
      %p38 = scmp.eq.s32.totalorder %s19, 0
      %p39 = por %p37, %p38
      %p40 = scmp.ne.s32.totalorder %s29, %s32
      %p41 = scmp.eq.s32.totalorder %s24, 1
      %p42 = por %p40, %p41
      %p43 = scmp.ne.s32.totalorder %s32, %s33
      %p44 = scmp.eq.s32.totalorder %s24, 0
      %p45 = por %p43, %p44
      %p46 = scmp.ne.s32.totalorder %s32, %s33
      %p47 = scmp.eq.s32.totalorder %s25, 1
      %p48 = por %p46, %p47
      %p50 = scmp.ne.s32.totalorder %s33, %s49
      %p51 = scmp.eq.s32.totalorder %s25, 0
      %p52 = por %p50, %p51
      %s54 = sadd.s32 %s53, 1
      %p57 = scmp.eq.s32.totalorder %s19, 1
      %p58 = scmp.ne.s32.totalorder %s53, %s55
      %p59 = scmp.eq.s32.totalorder %s19, 0
      %p60 = por %p58, %p59
      %p61 = scmp.ne.s32.totalorder %s53, %s55
      %p62 = scmp.eq.s32.totalorder %s24, 1
      %p63 = por %p61, %p62
      %p64 = scmp.ne.s32.totalorder %s55, %s56
      %p65 = scmp.eq.s32.totalorder %s24, 0
      %p66 = por %p64, %p65
      %p67 = scmp.ne.s32.totalorder %s55, %s56
      %p68 = scmp.eq.s32.totalorder %s25, 1
      %p69 = por %p67, %p68
      %p71 = scmp.ne.s32.totalorder %s56, %s70
      %p72 = scmp.eq.s32.totalorder %s25, 0
      %p73 = por %p71, %p72
      %s75 = sadd.s32 %s74, 1
      %p78 = scmp.eq.s32.totalorder %s19, 1
      %p79 = scmp.ne.s32.totalorder %s74, %s76
      %p80 = scmp.eq.s32.totalorder %s19, 0
      %p81 = por %p79, %p80
      %p82 = scmp.ne.s32.totalorder %s74, %s76
      %p83 = scmp.eq.s32.totalorder %s24, 1
      %p84 = por %p82, %p83
      %p85 = scmp.ne.s32.totalorder %s76, %s77
      %p86 = scmp.eq.s32.totalorder %s24, 0
      %p87 = por %p85, %p86
      %p88 = scmp.ne.s32.totalorder %s76, %s77
      %p89 = scmp.eq.s32.totalorder %s25, 1
      %p90 = por %p88, %p89
      %p92 = scmp.ne.s32.totalorder %s77, %s91
      %p93 = scmp.eq.s32.totalorder %s25, 0
      %p94 = por %p92, %p93
      %s96 = sadd.s32 %s95, 1
      %p99 = scmp.eq.s32.totalorder %s19, 1
      %p100 = scmp.ne.s32.totalorder %s95, %s97
      %p101 = scmp.eq.s32.totalorder %s19, 0
      %p102 = por %p100, %p101
      %p103 = scmp.ne.s32.totalorder %s95, %s97
      %p104 = scmp.eq.s32.totalorder %s24, 1
      %p105 = por %p103, %p104
      %p106 = scmp.ne.s32.totalorder %s97, %s98
      %p107 = scmp.eq.s32.totalorder %s24, 0
      %p108 = por %p106, %p107
      %p109 = scmp.ne.s32.totalorder %s97, %s98
      %p110 = scmp.eq.s32.totalorder %s25, 1
      %p111 = por %p109, %p110
      %p113 = scmp.ne.s32.totalorder %s98, %s112
      %p114 = scmp.eq.s32.totalorder %s25, 0
      %p115 = por %p113, %p114
      %s117 = sadd.s32 %s116, 1
      %p120 = scmp.eq.s32.totalorder %s19, 1
      %p121 = scmp.ne.s32.totalorder %s116, %s118
      %p122 = scmp.eq.s32.totalorder %s19, 0
      %p123 = por %p121, %p122
      %p124 = scmp.ne.s32.totalorder %s116, %s118
      %p125 = scmp.eq.s32.totalorder %s24, 1
      %p126 = por %p124, %p125
      %p127 = scmp.ne.s32.totalorder %s118, %s119
      %p128 = scmp.eq.s32.totalorder %s24, 0
      %p129 = por %p127, %p128
      %p130 = scmp.ne.s32.totalorder %s118, %s119
      %p131 = scmp.eq.s32.totalorder %s25, 1
      %p132 = por %p130, %p131
      %p134 = scmp.ne.s32.totalorder %s119, %s133
      %p135 = scmp.eq.s32.totalorder %s25, 0
      %p136 = por %p134, %p135
      %s137 = ssub.s32 %s19, %s26
      %p138 = scmp.eq.s32.totalorder %s137, 0
      %s140 = sadd.s32 %s139, 1
      %s141 = scalar_select %p138, %s139, %s140
      %p144 = pneg %p138
      %p145 = scmp.eq.s32.totalorder %s19, 1
      %p146 = por %p144, %p145
      %p147 = scmp.ne.s32.totalorder %s139, %s142
      %p148 = scmp.eq.s32.totalorder %s19, 0
      %p149 = por %p147, %p148
      %p150 = scmp.ne.s32.totalorder %s139, %s142
      %p151 = scmp.eq.s32.totalorder %s24, 1
      %p152 = por %p150, %p151
      %p153 = scmp.ne.s32.totalorder %s142, %s143
      %p154 = scmp.eq.s32.totalorder %s24, 0
      %p155 = por %p153, %p154
      %p156 = scmp.ne.s32.totalorder %s142, %s143
      %p157 = scmp.eq.s32.totalorder %s25, 1
      %p158 = por %p156, %p157
      %p160 = scmp.ne.s32.totalorder %s143, %s159
      %p161 = scmp.eq.s32.totalorder %s25, 0
      %p162 = por %p160, %p161
      %p163 = scmp.le.s32.totalorder 1, %s19
      %p164 = scmp.lt.s32.totalorder %s19, 3
      %p165 = pnand %p163, %p164
      %p166 = pneg %p165
      // Predicated region
      $region9: #{tpu_custom_call.1} parent=5 // pred_check
        _
      $region10: #{tpu_custom_call.1} parent=5 // pred_check_branch
        %168 = sbr.rel (%p165) target = $region12
      $region11: #{tpu_custom_call.1} parent=5 // pred_region
        %s169 = ssub.s32 %s19, 1
        // Predicated region
        $region13: #{tpu_custom_call.1} parent=11 // pred_check
          %p170 = pneg %p66
        $region14: #{tpu_custom_call.1} parent=11 // pred_check_branch
          %172 = sbr.rel (%p170) target = $region16
        $region15: #{tpu_custom_call.1} parent=11 // pred_region
          %s174 = ssub.s32 8192, 8192
          %175 = vsyncadd [#allocation6], %s174
          %s176 = sshll.u32 [#allocation5], 4
          %s177 = int_to_ptr.vmem [resolvable:$true] %s176
          %182 = dma.hbm_to_vmem [thread:$0]  %s1, 8192, %s177, [#allocation6], 512, 512, 32
        $region16: #{tpu_custom_call.1} parent=11 // pred_fallthru
          _
        // Predicated region
        $region17: #{tpu_custom_call.1} parent=11 // pred_check
          %p183 = pneg %p87
        $region18: #{tpu_custom_call.1} parent=11 // pred_check_branch
          %185 = sbr.rel (%p183) target = $region20
        $region19: #{tpu_custom_call.1} parent=11 // pred_region
          %s187 = ssub.s32 128, 128
          %188 = vsyncadd [#allocation6], %s187
          %s190 = sshll.u32 [#allocation7], 4
          %s191 = int_to_ptr.vmem [resolvable:$true] %s190
          %193 = dma.hbm_to_vmem [thread:$0]  %s2, 128, %s191, [#allocation6]
        $region20: #{tpu_custom_call.1} parent=11 // pred_fallthru
          _
        // Predicated region
        $region21: #{tpu_custom_call.1} parent=11 // pred_check
          %p194 = pneg %p108
        $region22: #{tpu_custom_call.1} parent=11 // pred_check_branch
          %196 = sbr.rel (%p194) target = $region24
        $region23: #{tpu_custom_call.1} parent=11 // pred_region
          %s198 = ssub.s32 8192, 8192
          %199 = vsyncadd [#allocation9], %s198
          %s200 = sshll.u32 [#allocation8], 4
          %s201 = int_to_ptr.vmem [resolvable:$true] %s200
          %206 = dma.hbm_to_vmem [thread:$0]  %s3, 8192, %s201, [#allocation9], 64, 64, 4
        $region24: #{tpu_custom_call.1} parent=11 // pred_fallthru
          _
        // Predicated region
        $region25: #{tpu_custom_call.1} parent=11 // pred_check
          %p207 = pneg %p129
        $region26: #{tpu_custom_call.1} parent=11 // pred_check_branch
          %209 = sbr.rel (%p207) target = $region28
        $region27: #{tpu_custom_call.1} parent=11 // pred_region
          _
        $region28: #{tpu_custom_call.1} parent=11 // pred_fallthru
          _
      $region12: #{tpu_custom_call.1} parent=5 // pred_fallthru
        _
      %p210 = scmp.lt.s32.totalorder %s19, 2
      // Predicated region
      $region29: #{tpu_custom_call.1} parent=5 // pred_check
        %p211 = pneg %p210
      $region30: #{tpu_custom_call.1} parent=5 // pred_check_branch
        %213 = sbr.rel (%p211) target = $region32
      $region31: #{tpu_custom_call.1} parent=5 // pred_region
        // Predicated region
        $region33: #{tpu_custom_call.1} parent=31 // pred_check
          %p214 = pneg %p39
        $region34: #{tpu_custom_call.1} parent=31 // pred_check_branch
          %216 = sbr.rel (%p214) target = $region36
        $region35: #{tpu_custom_call.1} parent=31 // pred_region
          %s217 = sand.u32 %s29, 1
          %s218 = scalar_lea.sflag [#allocation3], %s217
          %s219 = sand.u32 %s29, 1
          %s220 = smul.addr %s219, 8
          %s221 = scalar_lea.vmem [#allocation2], %s220
          %s223 = ssub.s32 128, 128
          %224 = vsyncadd %s218, %s223
          %s225 = smul.addr %s19, 128
          %s226 = scalar_lea.hbm %s0, %s225
          %s228 = sshll.u32 %s221, 4
          %s229 = int_to_ptr.vmem [resolvable:$true] %s228
          %231 = dma.hbm_to_vmem [thread:$0]  %s226, 128, %s229, %s218
        $region36: #{tpu_custom_call.1} parent=31 // pred_fallthru
          _
      $region32: #{tpu_custom_call.1} parent=5 // pred_fallthru
        _
      %p232 = scmp.le.s32.totalorder 1, %s19
      %p233 = scmp.lt.s32.totalorder %s19, 3
      %p234 = pnand %p232, %p233
      %p235 = pneg %p234
      // Predicated region
      $region37: #{tpu_custom_call.1} parent=5 // pred_check
        _
      $region38: #{tpu_custom_call.1} parent=5 // pred_check_branch
        %237 = sbr.rel (%p234) target = $region40
      $region39: #{tpu_custom_call.1} parent=5 // pred_region
        %s238 = ssub.s32 %s19, 1
        %s239 = sand.u32 %s32, 1
        %s240 = scalar_lea.sflag [#allocation3], %s239
        %s241 = sand.u32 %s32, 1
        %s242 = smul.addr %s241, 8
        %s243 = scalar_lea.vmem [#allocation2], %s242
        // Predicated region
        $region41: #{tpu_custom_call.1} parent=39 // pred_check
          %p244 = pneg %p45
        $region42: #{tpu_custom_call.1} parent=39 // pred_check_branch
          %246 = sbr.rel (%p244) target = $region44
        $region43: #{tpu_custom_call.1} parent=39 // pred_region
          %247 = dma.done %s240, 128
        $region44: #{tpu_custom_call.1} parent=39 // pred_fallthru
          _
        // Predicated region
        $region45: #{tpu_custom_call.1} parent=39 // pred_check
          %p248 = pneg %p66
        $region46: #{tpu_custom_call.1} parent=39 // pred_check_branch
          %250 = sbr.rel (%p248) target = $region48
        $region47: #{tpu_custom_call.1} parent=39 // pred_region
          %251 = dma.done [#allocation6], 8192
        $region48: #{tpu_custom_call.1} parent=39 // pred_fallthru
          _
        // Predicated region
        $region49: #{tpu_custom_call.1} parent=39 // pred_check
          %p252 = pneg %p87
        $region50: #{tpu_custom_call.1} parent=39 // pred_check_branch
          %254 = sbr.rel (%p252) target = $region52
        $region51: #{tpu_custom_call.1} parent=39 // pred_region
          %255 = dma.done [#allocation6], 128
        $region52: #{tpu_custom_call.1} parent=39 // pred_fallthru
          _
        // Predicated region
        $region53: #{tpu_custom_call.1} parent=39 // pred_check
          %p256 = pneg %p108
        $region54: #{tpu_custom_call.1} parent=39 // pred_check_branch
          %258 = sbr.rel (%p256) target = $region56
        $region55: #{tpu_custom_call.1} parent=39 // pred_region
          %259 = dma.done [#allocation9], 8192
        $region56: #{tpu_custom_call.1} parent=39 // pred_fallthru
          _
        %s260 = sand.u32 %s32, 1
        %s261 = scalar_lea.sflag [#allocation3], %s260
        %s262 = sand.u32 %s32, 1
        %s263 = smul.addr %s262, 8
        %s264 = scalar_lea.vmem [#allocation2], %s263
        %p265 = pneg %p45
        %p266 = pneg %p42
        %p267 = pneg %p66
        %p268 = pneg %p63
        %p269 = pneg %p87
        %p270 = pneg %p84
        %p271 = pneg %p108
        %p272 = pneg %p105
        %p273 = pneg %p129
        %p274 = pneg %p126
        %p275 = pneg %p155
        %p276 = pneg %p152
        %s277 = sand.u32 %s142, 1
        %s278 = scalar_lea.sflag [#allocation4], %s277
        %s279 = sand.u32 %s142, 1
        %s280 = smul.addr %s279, 8
        %s281 = scalar_lea.vmem [#allocation10], %s280
        %v283 = vld [vmem:[%s243] sm:$0xff]
        %v284 = vpack.c.bf16 %v283, %v283
        %v285 = vld [vmem:[#allocation5] sm:$0xff]
        %v286 = vld [vmem:[#allocation5 + $0x8] sm:$0xff]
        %v287 = vld [vmem:[#allocation5 + $0x10] sm:$0xff]
        %v288 = vld [vmem:[#allocation5 + $0x18] sm:$0xff]
        %v289 = vld [vmem:[#allocation5 + $0x20] sm:$0xff]
        %v290 = vld [vmem:[#allocation5 + $0x28] sm:$0xff]
        %v291 = vld [vmem:[#allocation5 + $0x30] sm:$0xff]
        %v292 = vld [vmem:[#allocation5 + $0x38] sm:$0xff]
        %v293 = vld [vmem:[#allocation5 + $0x40] sm:$0xff]
        %v294 = vld [vmem:[#allocation5 + $0x48] sm:$0xff]
        %v295 = vld [vmem:[#allocation5 + $0x50] sm:$0xff]
        %v296 = vld [vmem:[#allocation5 + $0x58] sm:$0xff]
        %v297 = vld [vmem:[#allocation5 + $0x60] sm:$0xff]
        %v298 = vld [vmem:[#allocation5 + $0x68] sm:$0xff]
        %v299 = vld [vmem:[#allocation5 + $0x70] sm:$0xff]
        %v300 = vld [vmem:[#allocation5 + $0x78] sm:$0xff]
        %v301 = vld [vmem:[#allocation5 + $0x80] sm:$0xff]
        %v302 = vld [vmem:[#allocation5 + $0x88] sm:$0xff]
        %v303 = vld [vmem:[#allocation5 + $0x90] sm:$0xff]
        %v304 = vld [vmem:[#allocation5 + $0x98] sm:$0xff]
        %v305 = vld [vmem:[#allocation5 + $0xa0] sm:$0xff]
        %v306 = vld [vmem:[#allocation5 + $0xa8] sm:$0xff]
        %v307 = vld [vmem:[#allocation5 + $0xb0] sm:$0xff]
        %v308 = vld [vmem:[#allocation5 + $0xb8] sm:$0xff]
        %v309 = vld [vmem:[#allocation5 + $0xc0] sm:$0xff]
        %v310 = vld [vmem:[#allocation5 + $0xc8] sm:$0xff]
        %v311 = vld [vmem:[#allocation5 + $0xd0] sm:$0xff]
        %v312 = vld [vmem:[#allocation5 + $0xd8] sm:$0xff]
        %v313 = vld [vmem:[#allocation5 + $0xe0] sm:$0xff]
        %v314 = vld [vmem:[#allocation5 + $0xe8] sm:$0xff]
        %v315 = vld [vmem:[#allocation5 + $0xf0] sm:$0xff]
        %v316 = vld [vmem:[#allocation5 + $0xf8] sm:$0xff]
        %v317 = vld [vmem:[#allocation5 + $0x100] sm:$0xff]
        %v318 = vld [vmem:[#allocation5 + $0x108] sm:$0xff]
        %v319 = vld [vmem:[#allocation5 + $0x110] sm:$0xff]
        %v320 = vld [vmem:[#allocation5 + $0x118] sm:$0xff]
        %v321 = vld [vmem:[#allocation5 + $0x120] sm:$0xff]
        %v322 = vld [vmem:[#allocation5 + $0x128] sm:$0xff]
        %v323 = vld [vmem:[#allocation5 + $0x130] sm:$0xff]
        %v324 = vld [vmem:[#allocation5 + $0x138] sm:$0xff]
        %v325 = vld [vmem:[#allocation5 + $0x140] sm:$0xff]
        %v326 = vld [vmem:[#allocation5 + $0x148] sm:$0xff]
        %v327 = vld [vmem:[#allocation5 + $0x150] sm:$0xff]
        %v328 = vld [vmem:[#allocation5 + $0x158] sm:$0xff]
        %v329 = vld [vmem:[#allocation5 + $0x160] sm:$0xff]
        %v330 = vld [vmem:[#allocation5 + $0x168] sm:$0xff]
        %v331 = vld [vmem:[#allocation5 + $0x170] sm:$0xff]
        %v332 = vld [vmem:[#allocation5 + $0x178] sm:$0xff]
        %v333 = vld [vmem:[#allocation5 + $0x180] sm:$0xff]
        %v334 = vld [vmem:[#allocation5 + $0x188] sm:$0xff]
        %v335 = vld [vmem:[#allocation5 + $0x190] sm:$0xff]
        %v336 = vld [vmem:[#allocation5 + $0x198] sm:$0xff]
        %v337 = vld [vmem:[#allocation5 + $0x1a0] sm:$0xff]
        %v338 = vld [vmem:[#allocation5 + $0x1a8] sm:$0xff]
        %v339 = vld [vmem:[#allocation5 + $0x1b0] sm:$0xff]
        %v340 = vld [vmem:[#allocation5 + $0x1b8] sm:$0xff]
        %v341 = vld [vmem:[#allocation5 + $0x1c0] sm:$0xff]
        %v342 = vld [vmem:[#allocation5 + $0x1c8] sm:$0xff]
        %v343 = vld [vmem:[#allocation5 + $0x1d0] sm:$0xff]
        %v344 = vld [vmem:[#allocation5 + $0x1d8] sm:$0xff]
        %v345 = vld [vmem:[#allocation5 + $0x1e0] sm:$0xff]
        %v346 = vld [vmem:[#allocation5 + $0x1e8] sm:$0xff]
        %v347 = vld [vmem:[#allocation5 + $0x1f0] sm:$0xff]
        %v348 = vld [vmem:[#allocation5 + $0x1f8] sm:$0xff]
        %v349 = vld [vmem:[#allocation7] sm:$0xff]
        %v351 = vlaneseq
        %v352 = vshrl.u32 %v351, 7
        %v353 = vsub.s32 0, %v352
        %v354 = vrot.slane %v349, %v353
        %v355 = vlaneseq
        %v356 = vshrl.u32 %v355, 7
        %v357 = vsub.s32 1, %v356
        %v358 = vrot.slane %v349, %v357
        %v359 = vlaneseq
        %v360 = vshrl.u32 %v359, 7
        %v361 = vsub.s32 2, %v360
        %v362 = vrot.slane %v349, %v361
        %v363 = vlaneseq
        %v364 = vshrl.u32 %v363, 7
        %v365 = vsub.s32 3, %v364
        %v366 = vrot.slane %v349, %v365
        %v367 = vlaneseq
        %v368 = vshrl.u32 %v367, 7
        %v369 = vsub.s32 4, %v368
        %v370 = vrot.slane %v349, %v369
        %v371 = vlaneseq
        %v372 = vshrl.u32 %v371, 7
        %v373 = vsub.s32 5, %v372
        %v374 = vrot.slane %v349, %v373
        %v375 = vlaneseq
        %v376 = vshrl.u32 %v375, 7
        %v377 = vsub.s32 6, %v376
        %v378 = vrot.slane %v349, %v377
        %v379 = vlaneseq
        %v380 = vshrl.u32 %v379, 7
        %v381 = vsub.s32 7, %v380
        %v382 = vrot.slane %v349, %v381
        %v455 = vunpack.c.l.b16 %v285
        %v456 = vunpack.c.h.b16 %v285
        %v457 = vunpack.c.l.b16 %v286
        %v458 = vunpack.c.h.b16 %v286
        %v459 = vunpack.c.l.b16 %v287
        %v460 = vunpack.c.h.b16 %v287
        %v461 = vunpack.c.l.b16 %v288
        %v462 = vunpack.c.h.b16 %v288
        %v463 = vunpack.c.l.b16 %v289
        %v464 = vunpack.c.h.b16 %v289
        %v465 = vunpack.c.l.b16 %v290
        %v466 = vunpack.c.h.b16 %v290
        %v467 = vunpack.c.l.b16 %v291
        %v468 = vunpack.c.h.b16 %v291
        %v469 = vunpack.c.l.b16 %v292
        %v470 = vunpack.c.h.b16 %v292
        %v471 = vunpack.c.l.b16 %v293
        %v472 = vunpack.c.h.b16 %v293
        %v473 = vunpack.c.l.b16 %v294
        %v474 = vunpack.c.h.b16 %v294
        %v475 = vunpack.c.l.b16 %v295
        %v476 = vunpack.c.h.b16 %v295
        %v477 = vunpack.c.l.b16 %v296
        %v478 = vunpack.c.h.b16 %v296
        %v479 = vunpack.c.l.b16 %v297
        %v480 = vunpack.c.h.b16 %v297
        %v481 = vunpack.c.l.b16 %v298
        %v482 = vunpack.c.h.b16 %v298
        %v483 = vunpack.c.l.b16 %v299
        %v484 = vunpack.c.h.b16 %v299
        %v485 = vunpack.c.l.b16 %v300
        %v486 = vunpack.c.h.b16 %v300
        %v487 = vunpack.c.l.b16 %v301
        %v488 = vunpack.c.h.b16 %v301
        %v489 = vunpack.c.l.b16 %v302
        %v490 = vunpack.c.h.b16 %v302
        %v491 = vunpack.c.l.b16 %v303
        %v492 = vunpack.c.h.b16 %v303
        %v493 = vunpack.c.l.b16 %v304
        %v494 = vunpack.c.h.b16 %v304
        %v495 = vunpack.c.l.b16 %v305
        %v496 = vunpack.c.h.b16 %v305
        %v497 = vunpack.c.l.b16 %v306
        %v498 = vunpack.c.h.b16 %v306
        %v499 = vunpack.c.l.b16 %v307
        %v500 = vunpack.c.h.b16 %v307
        %v501 = vunpack.c.l.b16 %v308
        %v502 = vunpack.c.h.b16 %v308
        %v503 = vunpack.c.l.b16 %v309
        %v504 = vunpack.c.h.b16 %v309
        %v505 = vunpack.c.l.b16 %v310
        %v506 = vunpack.c.h.b16 %v310
        %v507 = vunpack.c.l.b16 %v311
        %v508 = vunpack.c.h.b16 %v311
        %v509 = vunpack.c.l.b16 %v312
        %v510 = vunpack.c.h.b16 %v312
        %v511 = vunpack.c.l.b16 %v313
        %v512 = vunpack.c.h.b16 %v313
        %v513 = vunpack.c.l.b16 %v314
        %v514 = vunpack.c.h.b16 %v314
        %v515 = vunpack.c.l.b16 %v315
        %v516 = vunpack.c.h.b16 %v315
        %v517 = vunpack.c.l.b16 %v316
        %v518 = vunpack.c.h.b16 %v316
        %v519 = vunpack.c.l.b16 %v317
        %v520 = vunpack.c.h.b16 %v317
        %v521 = vunpack.c.l.b16 %v318
        %v522 = vunpack.c.h.b16 %v318
        %v523 = vunpack.c.l.b16 %v319
        %v524 = vunpack.c.h.b16 %v319
        %v525 = vunpack.c.l.b16 %v320
        %v526 = vunpack.c.h.b16 %v320
        %v527 = vunpack.c.l.b16 %v321
        %v528 = vunpack.c.h.b16 %v321
        %v529 = vunpack.c.l.b16 %v322
        %v530 = vunpack.c.h.b16 %v322
        %v531 = vunpack.c.l.b16 %v323
        %v532 = vunpack.c.h.b16 %v323
        %v533 = vunpack.c.l.b16 %v324
        %v534 = vunpack.c.h.b16 %v324
        %v535 = vunpack.c.l.b16 %v325
        %v536 = vunpack.c.h.b16 %v325
        %v537 = vunpack.c.l.b16 %v326
        %v538 = vunpack.c.h.b16 %v326
        %v539 = vunpack.c.l.b16 %v327
        %v540 = vunpack.c.h.b16 %v327
        %v541 = vunpack.c.l.b16 %v328
        %v542 = vunpack.c.h.b16 %v328
        %v543 = vunpack.c.l.b16 %v329
        %v544 = vunpack.c.h.b16 %v329
        %v545 = vunpack.c.l.b16 %v330
        %v546 = vunpack.c.h.b16 %v330
        %v547 = vunpack.c.l.b16 %v331
        %v548 = vunpack.c.h.b16 %v331
        %v549 = vunpack.c.l.b16 %v332
        %v550 = vunpack.c.h.b16 %v332
        %v551 = vunpack.c.l.b16 %v333
        %v552 = vunpack.c.h.b16 %v333
        %v553 = vunpack.c.l.b16 %v334
        %v554 = vunpack.c.h.b16 %v334
        %v555 = vunpack.c.l.b16 %v335
        %v556 = vunpack.c.h.b16 %v335
        %v557 = vunpack.c.l.b16 %v336
        %v558 = vunpack.c.h.b16 %v336
        %v559 = vunpack.c.l.b16 %v337
        %v560 = vunpack.c.h.b16 %v337
        %v561 = vunpack.c.l.b16 %v338
        %v562 = vunpack.c.h.b16 %v338
        %v563 = vunpack.c.l.b16 %v339
        %v564 = vunpack.c.h.b16 %v339
        %v565 = vunpack.c.l.b16 %v340
        %v566 = vunpack.c.h.b16 %v340
        %v567 = vunpack.c.l.b16 %v341
        %v568 = vunpack.c.h.b16 %v341
        %v569 = vunpack.c.l.b16 %v342
        %v570 = vunpack.c.h.b16 %v342
        %v571 = vunpack.c.l.b16 %v343
        %v572 = vunpack.c.h.b16 %v343
        %v573 = vunpack.c.l.b16 %v344
        %v574 = vunpack.c.h.b16 %v344
        %v575 = vunpack.c.l.b16 %v345
        %v576 = vunpack.c.h.b16 %v345
        %v577 = vunpack.c.l.b16 %v346
        %v578 = vunpack.c.h.b16 %v346
        %v579 = vunpack.c.l.b16 %v347
        %v580 = vunpack.c.h.b16 %v347
        %v581 = vunpack.c.l.b16 %v348
        %v582 = vunpack.c.h.b16 %v348
        %v583 = vpack.c.b16 %v463, %v455
        %v584 = vpack.c.b16 %v464, %v456
        %v585 = vpack.c.b16 %v465, %v457
        %v586 = vpack.c.b16 %v466, %v458
        %v587 = vpack.c.b16 %v467, %v459
        %v588 = vpack.c.b16 %v468, %v460
        %v589 = vpack.c.b16 %v469, %v461
        %v590 = vpack.c.b16 %v470, %v462
        %v591 = vpack.c.b16 %v479, %v471
        %v592 = vpack.c.b16 %v480, %v472
        %v593 = vpack.c.b16 %v481, %v473
        %v594 = vpack.c.b16 %v482, %v474
        %v595 = vpack.c.b16 %v483, %v475
        %v596 = vpack.c.b16 %v484, %v476
        %v597 = vpack.c.b16 %v485, %v477
        %v598 = vpack.c.b16 %v486, %v478
        %v599 = vpack.c.b16 %v495, %v487
        %v600 = vpack.c.b16 %v496, %v488
        %v601 = vpack.c.b16 %v497, %v489
        %v602 = vpack.c.b16 %v498, %v490
        %v603 = vpack.c.b16 %v499, %v491
        %v604 = vpack.c.b16 %v500, %v492
        %v605 = vpack.c.b16 %v501, %v493
        %v606 = vpack.c.b16 %v502, %v494
        %v607 = vpack.c.b16 %v511, %v503
        %v608 = vpack.c.b16 %v512, %v504
        %v609 = vpack.c.b16 %v513, %v505
        %v610 = vpack.c.b16 %v514, %v506
        %v611 = vpack.c.b16 %v515, %v507
        %v612 = vpack.c.b16 %v516, %v508
        %v613 = vpack.c.b16 %v517, %v509
        %v614 = vpack.c.b16 %v518, %v510
        %v615 = vpack.c.b16 %v527, %v519
        %v616 = vpack.c.b16 %v528, %v520
        %v617 = vpack.c.b16 %v529, %v521
        %v618 = vpack.c.b16 %v530, %v522
        %v619 = vpack.c.b16 %v531, %v523
        %v620 = vpack.c.b16 %v532, %v524
        %v621 = vpack.c.b16 %v533, %v525
        %v622 = vpack.c.b16 %v534, %v526
        %v623 = vpack.c.b16 %v543, %v535
        %v624 = vpack.c.b16 %v544, %v536
        %v625 = vpack.c.b16 %v545, %v537
        %v626 = vpack.c.b16 %v546, %v538
        %v627 = vpack.c.b16 %v547, %v539
        %v628 = vpack.c.b16 %v548, %v540
        %v629 = vpack.c.b16 %v549, %v541
        %v630 = vpack.c.b16 %v550, %v542
        %v631 = vpack.c.b16 %v559, %v551
        %v632 = vpack.c.b16 %v560, %v552
        %v633 = vpack.c.b16 %v561, %v553
        %v634 = vpack.c.b16 %v562, %v554
        %v635 = vpack.c.b16 %v563, %v555
        %v636 = vpack.c.b16 %v564, %v556
        %v637 = vpack.c.b16 %v565, %v557
        %v638 = vpack.c.b16 %v566, %v558
        %v639 = vpack.c.b16 %v575, %v567
        %v640 = vpack.c.b16 %v576, %v568
        %v641 = vpack.c.b16 %v577, %v569
        %v642 = vpack.c.b16 %v578, %v570
        %v643 = vpack.c.b16 %v579, %v571
        %v644 = vpack.c.b16 %v580, %v572
        %v645 = vpack.c.b16 %v581, %v573
        %v646 = vpack.c.b16 %v582, %v574
        %711 = vmatprep.subr.bf16.mxu0 %v584
        %712 = vmatpush1.bf16.msra.mxu0 %v583
        %713 = vmatprep.subr.bf16.mxu0 %v592
        %714 = vmatpush1.bf16.msra.mxu0 %v591
        %715 = vmatprep.subr.bf16.mxu0 %v600
        %716 = vmatpush1.bf16.msra.mxu0 %v599
        %717 = vmatprep.subr.bf16.mxu0 %v608
        %718 = vmatpush1.bf16.msra.mxu0 %v607
        %719 = vmatprep.subr.bf16.mxu0 %v616
        %720 = vmatpush1.bf16.msra.mxu0 %v615
        %721 = vmatprep.subr.bf16.mxu0 %v624
        %722 = vmatpush1.bf16.msra.mxu0 %v623
        %723 = vmatprep.subr.bf16.mxu0 %v632
        %724 = vmatpush1.bf16.msra.mxu0 %v631
        %725 = vmatprep.subr.bf16.mxu0 %v640
        %726 = vmatpush1.bf16.msra.mxu0 %v639
        %727 = vmatprep.subr.bf16.mxu0 0
        %728 = vmatpush1.bf16.msra.mxu0 0
        %729 = vmatprep.subr.bf16.mxu0 0
        %730 = vmatpush1.bf16.msra.mxu0 0
        %731 = vmatprep.subr.bf16.mxu0 0
        %732 = vmatpush1.bf16.msra.mxu0 0
        %733 = vmatprep.subr.bf16.mxu0 0
        %734 = vmatpush1.bf16.msra.mxu0 0
        %735 = vmatprep.subr.bf16.mxu0 0
        %736 = vmatpush1.bf16.msra.mxu0 0
        %737 = vmatprep.subr.bf16.mxu0 0
        %738 = vmatpush1.bf16.msra.mxu0 0
        %739 = vmatprep.subr.bf16.mxu0 0
        %740 = vmatpush1.bf16.msra.mxu0 0
        %741 = vmatprep.subr.bf16.mxu0 0
        %742 = vmatpush1.bf16.msra.mxu0 0
        %743 = vmatprep.mubr.bf16.mxu0 0
        %744 = vmatmul.mubr.bf16.gmra.mrb[0].mxu0 %v284
        %v745 = vpop.f32.mrb[0].mxu0
        %v746 = vadd.f32 %v354, %v745
        %v747 = vpop.f32.mrb[0].mxu0
        %v748 = vadd.f32 %v358, %v747
        %v749 = vpop.f32.mrb[0].mxu0
        %v750 = vpop.f32.mrb[0].mxu0
        %751 = vdwg.mxu0
        %752 = vmatprep.subr.bf16.mxu0 %v586
        %753 = vmatpush1.bf16.msra.mxu0 %v585
        %754 = vmatprep.subr.bf16.mxu0 %v594
        %755 = vmatpush1.bf16.msra.mxu0 %v593
        %756 = vmatprep.subr.bf16.mxu0 %v602
        %757 = vmatpush1.bf16.msra.mxu0 %v601
        %758 = vmatprep.subr.bf16.mxu0 %v610
        %759 = vmatpush1.bf16.msra.mxu0 %v609
        %760 = vmatprep.subr.bf16.mxu0 %v618
        %761 = vmatpush1.bf16.msra.mxu0 %v617
        %762 = vmatprep.subr.bf16.mxu0 %v626
        %763 = vmatpush1.bf16.msra.mxu0 %v625
        %764 = vmatprep.subr.bf16.mxu0 %v634
        %765 = vmatpush1.bf16.msra.mxu0 %v633
        %766 = vmatprep.subr.bf16.mxu0 %v642
        %767 = vmatpush1.bf16.msra.mxu0 %v641
        %768 = vmatprep.subr.bf16.mxu0 0
        %769 = vmatpush1.bf16.msra.mxu0 0
        %770 = vmatprep.subr.bf16.mxu0 0
        %771 = vmatpush1.bf16.msra.mxu0 0
        %772 = vmatprep.subr.bf16.mxu0 0
        %773 = vmatpush1.bf16.msra.mxu0 0
        %774 = vmatprep.subr.bf16.mxu0 0
        %775 = vmatpush1.bf16.msra.mxu0 0
        %776 = vmatprep.subr.bf16.mxu0 0
        %777 = vmatpush1.bf16.msra.mxu0 0
        %778 = vmatprep.subr.bf16.mxu0 0
        %779 = vmatpush1.bf16.msra.mxu0 0
        %780 = vmatprep.subr.bf16.mxu0 0
        %781 = vmatpush1.bf16.msra.mxu0 0
        %782 = vmatprep.subr.bf16.mxu0 0
        %783 = vmatpush1.bf16.msra.mxu0 0
        %784 = vmatprep.mubr.bf16.mxu0 0
        %785 = vmatmul.mubr.bf16.gmra.mrb[0].mxu0 %v284
        %v786 = vpop.f32.mrb[0].mxu0
        %v787 = vadd.f32 %v362, %v786
        %v788 = vpop.f32.mrb[0].mxu0
        %v789 = vadd.f32 %v366, %v788
        %v790 = vpop.f32.mrb[0].mxu0
        %v791 = vpop.f32.mrb[0].mxu0
        %792 = vdwg.mxu0
        %793 = vmatprep.subr.bf16.mxu0 %v588
        %794 = vmatpush1.bf16.msra.mxu0 %v587
        %795 = vmatprep.subr.bf16.mxu0 %v596
        %796 = vmatpush1.bf16.msra.mxu0 %v595
        %797 = vmatprep.subr.bf16.mxu0 %v604
        %798 = vmatpush1.bf16.msra.mxu0 %v603
        %799 = vmatprep.subr.bf16.mxu0 %v612
        %800 = vmatpush1.bf16.msra.mxu0 %v611
        %801 = vmatprep.subr.bf16.mxu0 %v620
        %802 = vmatpush1.bf16.msra.mxu0 %v619
        %803 = vmatprep.subr.bf16.mxu0 %v628
        %804 = vmatpush1.bf16.msra.mxu0 %v627
        %805 = vmatprep.subr.bf16.mxu0 %v636
        %806 = vmatpush1.bf16.msra.mxu0 %v635
        %807 = vmatprep.subr.bf16.mxu0 %v644
        %808 = vmatpush1.bf16.msra.mxu0 %v643
        %809 = vmatprep.subr.bf16.mxu0 0
        %810 = vmatpush1.bf16.msra.mxu0 0
        %811 = vmatprep.subr.bf16.mxu0 0
        %812 = vmatpush1.bf16.msra.mxu0 0
        %813 = vmatprep.subr.bf16.mxu0 0
        %814 = vmatpush1.bf16.msra.mxu0 0
        %815 = vmatprep.subr.bf16.mxu0 0
        %816 = vmatpush1.bf16.msra.mxu0 0
        %817 = vmatprep.subr.bf16.mxu0 0
        %818 = vmatpush1.bf16.msra.mxu0 0
        %819 = vmatprep.subr.bf16.mxu0 0
        %820 = vmatpush1.bf16.msra.mxu0 0
        %821 = vmatprep.subr.bf16.mxu0 0
        %822 = vmatpush1.bf16.msra.mxu0 0
        %823 = vmatprep.subr.bf16.mxu0 0
        %824 = vmatpush1.bf16.msra.mxu0 0
        %825 = vmatprep.mubr.bf16.mxu0 0
        %826 = vmatmul.mubr.bf16.gmra.mrb[0].mxu0 %v284
        %v827 = vpop.f32.mrb[0].mxu0
        %v828 = vadd.f32 %v370, %v827
        %v829 = vpop.f32.mrb[0].mxu0
        %v830 = vadd.f32 %v374, %v829
        %v831 = vpop.f32.mrb[0].mxu0
        %v832 = vpop.f32.mrb[0].mxu0
        %833 = vdwg.mxu0
        %834 = vmatprep.subr.bf16.mxu0 %v590
        %835 = vmatpush1.bf16.msra.mxu0 %v589
        %836 = vmatprep.subr.bf16.mxu0 %v598
        %837 = vmatpush1.bf16.msra.mxu0 %v597
        %838 = vmatprep.subr.bf16.mxu0 %v606
        %839 = vmatpush1.bf16.msra.mxu0 %v605
        %840 = vmatprep.subr.bf16.mxu0 %v614
        %841 = vmatpush1.bf16.msra.mxu0 %v613
        %842 = vmatprep.subr.bf16.mxu0 %v622
        %843 = vmatpush1.bf16.msra.mxu0 %v621
        %844 = vmatprep.subr.bf16.mxu0 %v630
        %845 = vmatpush1.bf16.msra.mxu0 %v629
        %846 = vmatprep.subr.bf16.mxu0 %v638
        %847 = vmatpush1.bf16.msra.mxu0 %v637
        %848 = vmatprep.subr.bf16.mxu0 %v646
        %849 = vmatpush1.bf16.msra.mxu0 %v645
        %850 = vmatprep.subr.bf16.mxu0 0
        %851 = vmatpush1.bf16.msra.mxu0 0
        %852 = vmatprep.subr.bf16.mxu0 0
        %853 = vmatpush1.bf16.msra.mxu0 0
        %854 = vmatprep.subr.bf16.mxu0 0
        %855 = vmatpush1.bf16.msra.mxu0 0
        %856 = vmatprep.subr.bf16.mxu0 0
        %857 = vmatpush1.bf16.msra.mxu0 0
        %858 = vmatprep.subr.bf16.mxu0 0
        %859 = vmatpush1.bf16.msra.mxu0 0
        %860 = vmatprep.subr.bf16.mxu0 0
        %861 = vmatpush1.bf16.msra.mxu0 0
        %862 = vmatprep.subr.bf16.mxu0 0
        %863 = vmatpush1.bf16.msra.mxu0 0
        %864 = vmatprep.subr.bf16.mxu0 0
        %865 = vmatpush1.bf16.msra.mxu0 0
        %866 = vmatprep.mubr.bf16.mxu0 0
        %867 = vmatmul.mubr.bf16.gmra.mrb[0].mxu0 %v284
        %v868 = vpop.f32.mrb[0].mxu0
        %v869 = vadd.f32 %v378, %v868
        %v870 = vpop.f32.mrb[0].mxu0
        %v871 = vadd.f32 %v382, %v870
        %v872 = vpop.f32.mrb[0].mxu0
        %v873 = vpop.f32.mrb[0].mxu0
        %874 = vdwg.mxu0
        %v875 = vmax.f32 %v746, 0.0
        %v876 = vmax.f32 %v748, 0.0
        %v877 = vmax.f32 %v787, 0.0
        %v878 = vmax.f32 %v789, 0.0
        %v879 = vmax.f32 %v828, 0.0
        %v880 = vmax.f32 %v830, 0.0
        %v881 = vmax.f32 %v869, 0.0
        %v882 = vmax.f32 %v871, 0.0
        %v883 = vpack.c.bf16 %v875, %v875
        %v884 = vpack.c.bf16 %v876, %v876
        %v885 = vpack.c.bf16 %v877, %v877
        %v886 = vpack.c.bf16 %v878, %v878
        %v887 = vpack.c.bf16 %v879, %v879
        %v888 = vpack.c.bf16 %v880, %v880
        %v889 = vpack.c.bf16 %v881, %v881
        %v890 = vpack.c.bf16 %v882, %v882
        %v891 = vld [vmem:[#allocation8] sm:$0xf]
        %v892 = vld [vmem:[#allocation8 + $0x4] sm:$0xf]
        %v893 = vld [vmem:[#allocation8 + $0x8] sm:$0xf]
        %v894 = vld [vmem:[#allocation8 + $0xc] sm:$0xf]
        %v895 = vld [vmem:[#allocation8 + $0x10] sm:$0xf]
        %v896 = vld [vmem:[#allocation8 + $0x14] sm:$0xf]
        %v897 = vld [vmem:[#allocation8 + $0x18] sm:$0xf]
        %v898 = vld [vmem:[#allocation8 + $0x1c] sm:$0xf]
        %v899 = vld [vmem:[#allocation8 + $0x20] sm:$0xf]
        %v900 = vld [vmem:[#allocation8 + $0x24] sm:$0xf]
        %v901 = vld [vmem:[#allocation8 + $0x28] sm:$0xf]
        %v902 = vld [vmem:[#allocation8 + $0x2c] sm:$0xf]
        %v903 = vld [vmem:[#allocation8 + $0x30] sm:$0xf]
        %v904 = vld [vmem:[#allocation8 + $0x34] sm:$0xf]
        %v905 = vld [vmem:[#allocation8 + $0x38] sm:$0xf]
        %v906 = vld [vmem:[#allocation8 + $0x3c] sm:$0xf]
        %v907 = vld [vmem:[#allocation8 + $0x40] sm:$0xf]
        %v908 = vld [vmem:[#allocation8 + $0x44] sm:$0xf]
        %v909 = vld [vmem:[#allocation8 + $0x48] sm:$0xf]
        %v910 = vld [vmem:[#allocation8 + $0x4c] sm:$0xf]
        %v911 = vld [vmem:[#allocation8 + $0x50] sm:$0xf]
        %v912 = vld [vmem:[#allocation8 + $0x54] sm:$0xf]
        %v913 = vld [vmem:[#allocation8 + $0x58] sm:$0xf]
        %v914 = vld [vmem:[#allocation8 + $0x5c] sm:$0xf]
        %v915 = vld [vmem:[#allocation8 + $0x60] sm:$0xf]
        %v916 = vld [vmem:[#allocation8 + $0x64] sm:$0xf]
        %v917 = vld [vmem:[#allocation8 + $0x68] sm:$0xf]
        %v918 = vld [vmem:[#allocation8 + $0x6c] sm:$0xf]
        %v919 = vld [vmem:[#allocation8 + $0x70] sm:$0xf]
        %v920 = vld [vmem:[#allocation8 + $0x74] sm:$0xf]
        %v921 = vld [vmem:[#allocation8 + $0x78] sm:$0xf]
        %v922 = vld [vmem:[#allocation8 + $0x7c] sm:$0xf]
        %v923 = vld [vmem:[#allocation8 + $0x80] sm:$0xf]
        %v924 = vld [vmem:[#allocation8 + $0x84] sm:$0xf]
        %v925 = vld [vmem:[#allocation8 + $0x88] sm:$0xf]
        %v926 = vld [vmem:[#allocation8 + $0x8c] sm:$0xf]
        %v927 = vld [vmem:[#allocation8 + $0x90] sm:$0xf]
        %v928 = vld [vmem:[#allocation8 + $0x94] sm:$0xf]
        %v929 = vld [vmem:[#allocation8 + $0x98] sm:$0xf]
        %v930 = vld [vmem:[#allocation8 + $0x9c] sm:$0xf]
        %v931 = vld [vmem:[#allocation8 + $0xa0] sm:$0xf]
        %v932 = vld [vmem:[#allocation8 + $0xa4] sm:$0xf]
        %v933 = vld [vmem:[#allocation8 + $0xa8] sm:$0xf]
        %v934 = vld [vmem:[#allocation8 + $0xac] sm:$0xf]
        %v935 = vld [vmem:[#allocation8 + $0xb0] sm:$0xf]
        %v936 = vld [vmem:[#allocation8 + $0xb4] sm:$0xf]
        %v937 = vld [vmem:[#allocation8 + $0xb8] sm:$0xf]
        %v938 = vld [vmem:[#allocation8 + $0xbc] sm:$0xf]
        %v939 = vld [vmem:[#allocation8 + $0xc0] sm:$0xf]
        %v940 = vld [vmem:[#allocation8 + $0xc4] sm:$0xf]
        %v941 = vld [vmem:[#allocation8 + $0xc8] sm:$0xf]
        %v942 = vld [vmem:[#allocation8 + $0xcc] sm:$0xf]
        %v943 = vld [vmem:[#allocation8 + $0xd0] sm:$0xf]
        %v944 = vld [vmem:[#allocation8 + $0xd4] sm:$0xf]
        %v945 = vld [vmem:[#allocation8 + $0xd8] sm:$0xf]
        %v946 = vld [vmem:[#allocation8 + $0xdc] sm:$0xf]
        %v947 = vld [vmem:[#allocation8 + $0xe0] sm:$0xf]
        %v948 = vld [vmem:[#allocation8 + $0xe4] sm:$0xf]
        %v949 = vld [vmem:[#allocation8 + $0xe8] sm:$0xf]
        %v950 = vld [vmem:[#allocation8 + $0xec] sm:$0xf]
        %v951 = vld [vmem:[#allocation8 + $0xf0] sm:$0xf]
        %v952 = vld [vmem:[#allocation8 + $0xf4] sm:$0xf]
        %v953 = vld [vmem:[#allocation8 + $0xf8] sm:$0xf]
        %v954 = vld [vmem:[#allocation8 + $0xfc] sm:$0xf]
        %v955 = vld [vmem:[#allocation8 + $0x100] sm:$0xf]
        %v956 = vld [vmem:[#allocation8 + $0x104] sm:$0xf]
        %v957 = vld [vmem:[#allocation8 + $0x108] sm:$0xf]
        %v958 = vld [vmem:[#allocation8 + $0x10c] sm:$0xf]
        %v959 = vld [vmem:[#allocation8 + $0x110] sm:$0xf]
        %v960 = vld [vmem:[#allocation8 + $0x114] sm:$0xf]
        %v961 = vld [vmem:[#allocation8 + $0x118] sm:$0xf]
        %v962 = vld [vmem:[#allocation8 + $0x11c] sm:$0xf]
        %v963 = vld [vmem:[#allocation8 + $0x120] sm:$0xf]
        %v964 = vld [vmem:[#allocation8 + $0x124] sm:$0xf]
        %v965 = vld [vmem:[#allocation8 + $0x128] sm:$0xf]
        %v966 = vld [vmem:[#allocation8 + $0x12c] sm:$0xf]
        %v967 = vld [vmem:[#allocation8 + $0x130] sm:$0xf]
        %v968 = vld [vmem:[#allocation8 + $0x134] sm:$0xf]
        %v969 = vld [vmem:[#allocation8 + $0x138] sm:$0xf]
        %v970 = vld [vmem:[#allocation8 + $0x13c] sm:$0xf]
        %v971 = vld [vmem:[#allocation8 + $0x140] sm:$0xf]
        %v972 = vld [vmem:[#allocation8 + $0x144] sm:$0xf]
        %v973 = vld [vmem:[#allocation8 + $0x148] sm:$0xf]
        %v974 = vld [vmem:[#allocation8 + $0x14c] sm:$0xf]
        %v975 = vld [vmem:[#allocation8 + $0x150] sm:$0xf]
        %v976 = vld [vmem:[#allocation8 + $0x154] sm:$0xf]
        %v977 = vld [vmem:[#allocation8 + $0x158] sm:$0xf]
        %v978 = vld [vmem:[#allocation8 + $0x15c] sm:$0xf]
        %v979 = vld [vmem:[#allocation8 + $0x160] sm:$0xf]
        %v980 = vld [vmem:[#allocation8 + $0x164] sm:$0xf]
        %v981 = vld [vmem:[#allocation8 + $0x168] sm:$0xf]
        %v982 = vld [vmem:[#allocation8 + $0x16c] sm:$0xf]
        %v983 = vld [vmem:[#allocation8 + $0x170] sm:$0xf]
        %v984 = vld [vmem:[#allocation8 + $0x174] sm:$0xf]
        %v985 = vld [vmem:[#allocation8 + $0x178] sm:$0xf]
        %v986 = vld [vmem:[#allocation8 + $0x17c] sm:$0xf]
        %v987 = vld [vmem:[#allocation8 + $0x180] sm:$0xf]
        %v988 = vld [vmem:[#allocation8 + $0x184] sm:$0xf]
        %v989 = vld [vmem:[#allocation8 + $0x188] sm:$0xf]
        %v990 = vld [vmem:[#allocation8 + $0x18c] sm:$0xf]
        %v991 = vld [vmem:[#allocation8 + $0x190] sm:$0xf]
        %v992 = vld [vmem:[#allocation8 + $0x194] sm:$0xf]
        %v993 = vld [vmem:[#allocation8 + $0x198] sm:$0xf]
        %v994 = vld [vmem:[#allocation8 + $0x19c] sm:$0xf]
        %v995 = vld [vmem:[#allocation8 + $0x1a0] sm:$0xf]
        %v996 = vld [vmem:[#allocation8 + $0x1a4] sm:$0xf]
        %v997 = vld [vmem:[#allocation8 + $0x1a8] sm:$0xf]
        %v998 = vld [vmem:[#allocation8 + $0x1ac] sm:$0xf]
        %v999 = vld [vmem:[#allocation8 + $0x1b0] sm:$0xf]
        %v1000 = vld [vmem:[#allocation8 + $0x1b4] sm:$0xf]
        %v1001 = vld [vmem:[#allocation8 + $0x1b8] sm:$0xf]
        %v1002 = vld [vmem:[#allocation8 + $0x1bc] sm:$0xf]
        %v1003 = vld [vmem:[#allocation8 + $0x1c0] sm:$0xf]
        %v1004 = vld [vmem:[#allocation8 + $0x1c4] sm:$0xf]
        %v1005 = vld [vmem:[#allocation8 + $0x1c8] sm:$0xf]
        %v1006 = vld [vmem:[#allocation8 + $0x1cc] sm:$0xf]
        %v1007 = vld [vmem:[#allocation8 + $0x1d0] sm:$0xf]
        %v1008 = vld [vmem:[#allocation8 + $0x1d4] sm:$0xf]
        %v1009 = vld [vmem:[#allocation8 + $0x1d8] sm:$0xf]
        %v1010 = vld [vmem:[#allocation8 + $0x1dc] sm:$0xf]
        %v1011 = vld [vmem:[#allocation8 + $0x1e0] sm:$0xf]
        %v1012 = vld [vmem:[#allocation8 + $0x1e4] sm:$0xf]
        %v1013 = vld [vmem:[#allocation8 + $0x1e8] sm:$0xf]
        %v1014 = vld [vmem:[#allocation8 + $0x1ec] sm:$0xf]
        %v1015 = vld [vmem:[#allocation8 + $0x1f0] sm:$0xf]
        %v1016 = vld [vmem:[#allocation8 + $0x1f4] sm:$0xf]
        %v1017 = vld [vmem:[#allocation8 + $0x1f8] sm:$0xf]
        %v1018 = vld [vmem:[#allocation8 + $0x1fc] sm:$0xf]
        %v1019 = vld [vmem:[%s4] sm:$0x1]
        %v1021 = vlaneseq
        %v1022 = vshrl.u32 %v1021, 7
        %v1023 = vsub.s32 0, %v1022
        %v1024 = vrot.slane %v1019, %v1023
        %v1154 = vunpack.c.l.b16 %v891
        %v1155 = vunpack.c.l.b16 %v892
        %v1156 = vunpack.c.l.b16 %v893
        %v1157 = vunpack.c.l.b16 %v894
        %v1158 = vunpack.c.l.b16 %v895
        %v1159 = vunpack.c.l.b16 %v896
        %v1160 = vunpack.c.l.b16 %v897
        %v1161 = vunpack.c.l.b16 %v898
        %v1162 = vunpack.c.l.b16 %v899
        %v1163 = vunpack.c.l.b16 %v900
        %v1164 = vunpack.c.l.b16 %v901
        %v1165 = vunpack.c.l.b16 %v902
        %v1166 = vunpack.c.l.b16 %v903
        %v1167 = vunpack.c.l.b16 %v904
        %v1168 = vunpack.c.l.b16 %v905
        %v1169 = vunpack.c.l.b16 %v906
        %v1170 = vunpack.c.l.b16 %v907
        %v1171 = vunpack.c.l.b16 %v908
        %v1172 = vunpack.c.l.b16 %v909
        %v1173 = vunpack.c.l.b16 %v910
        %v1174 = vunpack.c.l.b16 %v911
        %v1175 = vunpack.c.l.b16 %v912
        %v1176 = vunpack.c.l.b16 %v913
        %v1177 = vunpack.c.l.b16 %v914
        %v1178 = vunpack.c.l.b16 %v915
        %v1179 = vunpack.c.l.b16 %v916
        %v1180 = vunpack.c.l.b16 %v917
        %v1181 = vunpack.c.l.b16 %v918
        %v1182 = vunpack.c.l.b16 %v919
        %v1183 = vunpack.c.l.b16 %v920
        %v1184 = vunpack.c.l.b16 %v921
        %v1185 = vunpack.c.l.b16 %v922
        %v1186 = vunpack.c.l.b16 %v923
        %v1187 = vunpack.c.l.b16 %v924
        %v1188 = vunpack.c.l.b16 %v925
        %v1189 = vunpack.c.l.b16 %v926
        %v1190 = vunpack.c.l.b16 %v927
        %v1191 = vunpack.c.l.b16 %v928
        %v1192 = vunpack.c.l.b16 %v929
        %v1193 = vunpack.c.l.b16 %v930
        %v1194 = vunpack.c.l.b16 %v931
        %v1195 = vunpack.c.l.b16 %v932
        %v1196 = vunpack.c.l.b16 %v933
        %v1197 = vunpack.c.l.b16 %v934
        %v1198 = vunpack.c.l.b16 %v935
        %v1199 = vunpack.c.l.b16 %v936
        %v1200 = vunpack.c.l.b16 %v937
        %v1201 = vunpack.c.l.b16 %v938
        %v1202 = vunpack.c.l.b16 %v939
        %v1203 = vunpack.c.l.b16 %v940
        %v1204 = vunpack.c.l.b16 %v941
        %v1205 = vunpack.c.l.b16 %v942
        %v1206 = vunpack.c.l.b16 %v943
        %v1207 = vunpack.c.l.b16 %v944
        %v1208 = vunpack.c.l.b16 %v945
        %v1209 = vunpack.c.l.b16 %v946
        %v1210 = vunpack.c.l.b16 %v947
        %v1211 = vunpack.c.l.b16 %v948
        %v1212 = vunpack.c.l.b16 %v949
        %v1213 = vunpack.c.l.b16 %v950
        %v1214 = vunpack.c.l.b16 %v951
        %v1215 = vunpack.c.l.b16 %v952
        %v1216 = vunpack.c.l.b16 %v953
        %v1217 = vunpack.c.l.b16 %v954
        %v1218 = vunpack.c.l.b16 %v955
        %v1219 = vunpack.c.l.b16 %v956
        %v1220 = vunpack.c.l.b16 %v957
        %v1221 = vunpack.c.l.b16 %v958
        %v1222 = vunpack.c.l.b16 %v959
        %v1223 = vunpack.c.l.b16 %v960
        %v1224 = vunpack.c.l.b16 %v961
        %v1225 = vunpack.c.l.b16 %v962
        %v1226 = vunpack.c.l.b16 %v963
        %v1227 = vunpack.c.l.b16 %v964
        %v1228 = vunpack.c.l.b16 %v965
        %v1229 = vunpack.c.l.b16 %v966
        %v1230 = vunpack.c.l.b16 %v967
        %v1231 = vunpack.c.l.b16 %v968
        %v1232 = vunpack.c.l.b16 %v969
        %v1233 = vunpack.c.l.b16 %v970
        %v1234 = vunpack.c.l.b16 %v971
        %v1235 = vunpack.c.l.b16 %v972
        %v1236 = vunpack.c.l.b16 %v973
        %v1237 = vunpack.c.l.b16 %v974
        %v1238 = vunpack.c.l.b16 %v975
        %v1239 = vunpack.c.l.b16 %v976
        %v1240 = vunpack.c.l.b16 %v977
        %v1241 = vunpack.c.l.b16 %v978
        %v1242 = vunpack.c.l.b16 %v979
        %v1243 = vunpack.c.l.b16 %v980
        %v1244 = vunpack.c.l.b16 %v981
        %v1245 = vunpack.c.l.b16 %v982
        %v1246 = vunpack.c.l.b16 %v983
        %v1247 = vunpack.c.l.b16 %v984
        %v1248 = vunpack.c.l.b16 %v985
        %v1249 = vunpack.c.l.b16 %v986
        %v1250 = vunpack.c.l.b16 %v987
        %v1251 = vunpack.c.l.b16 %v988
        %v1252 = vunpack.c.l.b16 %v989
        %v1253 = vunpack.c.l.b16 %v990
        %v1254 = vunpack.c.l.b16 %v991
        %v1255 = vunpack.c.l.b16 %v992
        %v1256 = vunpack.c.l.b16 %v993
        %v1257 = vunpack.c.l.b16 %v994
        %v1258 = vunpack.c.l.b16 %v995
        %v1259 = vunpack.c.l.b16 %v996
        %v1260 = vunpack.c.l.b16 %v997
        %v1261 = vunpack.c.l.b16 %v998
        %v1262 = vunpack.c.l.b16 %v999
        %v1263 = vunpack.c.l.b16 %v1000
        %v1264 = vunpack.c.l.b16 %v1001
        %v1265 = vunpack.c.l.b16 %v1002
        %v1266 = vunpack.c.l.b16 %v1003
        %v1267 = vunpack.c.l.b16 %v1004
        %v1268 = vunpack.c.l.b16 %v1005
        %v1269 = vunpack.c.l.b16 %v1006
        %v1270 = vunpack.c.l.b16 %v1007
        %v1271 = vunpack.c.l.b16 %v1008
        %v1272 = vunpack.c.l.b16 %v1009
        %v1273 = vunpack.c.l.b16 %v1010
        %v1274 = vunpack.c.l.b16 %v1011
        %v1275 = vunpack.c.l.b16 %v1012
        %v1276 = vunpack.c.l.b16 %v1013
        %v1277 = vunpack.c.l.b16 %v1014
        %v1278 = vunpack.c.l.b16 %v1015
        %v1279 = vunpack.c.l.b16 %v1016
        %v1280 = vunpack.c.l.b16 %v1017
        %v1281 = vunpack.c.l.b16 %v1018
        %v1282 = vpack.c.b16 %v1155, %v1154
        %v1283 = vpack.c.b16 %v1157, %v1156
        %v1284 = vpack.c.b16 %v1159, %v1158
        %v1285 = vpack.c.b16 %v1161, %v1160
        %v1286 = vpack.c.b16 %v1163, %v1162
        %v1287 = vpack.c.b16 %v1165, %v1164
        %v1288 = vpack.c.b16 %v1167, %v1166
        %v1289 = vpack.c.b16 %v1169, %v1168
        %v1290 = vpack.c.b16 %v1171, %v1170
        %v1291 = vpack.c.b16 %v1173, %v1172
        %v1292 = vpack.c.b16 %v1175, %v1174
        %v1293 = vpack.c.b16 %v1177, %v1176
        %v1294 = vpack.c.b16 %v1179, %v1178
        %v1295 = vpack.c.b16 %v1181, %v1180
        %v1296 = vpack.c.b16 %v1183, %v1182
        %v1297 = vpack.c.b16 %v1185, %v1184
        %v1298 = vpack.c.b16 %v1187, %v1186
        %v1299 = vpack.c.b16 %v1189, %v1188
        %v1300 = vpack.c.b16 %v1191, %v1190
        %v1301 = vpack.c.b16 %v1193, %v1192
        %v1302 = vpack.c.b16 %v1195, %v1194
        %v1303 = vpack.c.b16 %v1197, %v1196
        %v1304 = vpack.c.b16 %v1199, %v1198
        %v1305 = vpack.c.b16 %v1201, %v1200
        %v1306 = vpack.c.b16 %v1203, %v1202
        %v1307 = vpack.c.b16 %v1205, %v1204
        %v1308 = vpack.c.b16 %v1207, %v1206
        %v1309 = vpack.c.b16 %v1209, %v1208
        %v1310 = vpack.c.b16 %v1211, %v1210
        %v1311 = vpack.c.b16 %v1213, %v1212
        %v1312 = vpack.c.b16 %v1215, %v1214
        %v1313 = vpack.c.b16 %v1217, %v1216
        %v1314 = vpack.c.b16 %v1219, %v1218
        %v1315 = vpack.c.b16 %v1221, %v1220
        %v1316 = vpack.c.b16 %v1223, %v1222
        %v1317 = vpack.c.b16 %v1225, %v1224
        %v1318 = vpack.c.b16 %v1227, %v1226
        %v1319 = vpack.c.b16 %v1229, %v1228
        %v1320 = vpack.c.b16 %v1231, %v1230
        %v1321 = vpack.c.b16 %v1233, %v1232
        %v1322 = vpack.c.b16 %v1235, %v1234
        %v1323 = vpack.c.b16 %v1237, %v1236
        %v1324 = vpack.c.b16 %v1239, %v1238
        %v1325 = vpack.c.b16 %v1241, %v1240
        %v1326 = vpack.c.b16 %v1243, %v1242
        %v1327 = vpack.c.b16 %v1245, %v1244
        %v1328 = vpack.c.b16 %v1247, %v1246
        %v1329 = vpack.c.b16 %v1249, %v1248
        %v1330 = vpack.c.b16 %v1251, %v1250
        %v1331 = vpack.c.b16 %v1253, %v1252
        %v1332 = vpack.c.b16 %v1255, %v1254
        %v1333 = vpack.c.b16 %v1257, %v1256
        %v1334 = vpack.c.b16 %v1259, %v1258
        %v1335 = vpack.c.b16 %v1261, %v1260
        %v1336 = vpack.c.b16 %v1263, %v1262
        %v1337 = vpack.c.b16 %v1265, %v1264
        %v1338 = vpack.c.b16 %v1267, %v1266
        %v1339 = vpack.c.b16 %v1269, %v1268
        %v1340 = vpack.c.b16 %v1271, %v1270
        %v1341 = vpack.c.b16 %v1273, %v1272
        %v1342 = vpack.c.b16 %v1275, %v1274
        %v1343 = vpack.c.b16 %v1277, %v1276
        %v1344 = vpack.c.b16 %v1279, %v1278
        %v1345 = vpack.c.b16 %v1281, %v1280
        %1410 = vmatprep.subr.bf16.mxu0 0
        %1411 = vmatpush1.bf16.msra.mxu0 %v1282
        %1412 = vmatprep.subr.bf16.mxu0 0
        %1413 = vmatpush1.bf16.msra.mxu0 %v1283
        %1414 = vmatprep.subr.bf16.mxu0 0
        %1415 = vmatpush1.bf16.msra.mxu0 %v1284
        %1416 = vmatprep.subr.bf16.mxu0 0
        %1417 = vmatpush1.bf16.msra.mxu0 %v1285
        %1418 = vmatprep.subr.bf16.mxu0 0
        %1419 = vmatpush1.bf16.msra.mxu0 %v1286
        %1420 = vmatprep.subr.bf16.mxu0 0
        %1421 = vmatpush1.bf16.msra.mxu0 %v1287
        %1422 = vmatprep.subr.bf16.mxu0 0
        %1423 = vmatpush1.bf16.msra.mxu0 %v1288
        %1424 = vmatprep.subr.bf16.mxu0 0
        %1425 = vmatpush1.bf16.msra.mxu0 %v1289
        %1426 = vmatprep.subr.bf16.mxu0 0
        %1427 = vmatpush1.bf16.msra.mxu0 %v1290
        %1428 = vmatprep.subr.bf16.mxu0 0
        %1429 = vmatpush1.bf16.msra.mxu0 %v1291
        %1430 = vmatprep.subr.bf16.mxu0 0
        %1431 = vmatpush1.bf16.msra.mxu0 %v1292
        %1432 = vmatprep.subr.bf16.mxu0 0
        %1433 = vmatpush1.bf16.msra.mxu0 %v1293
        %1434 = vmatprep.subr.bf16.mxu0 0
        %1435 = vmatpush1.bf16.msra.mxu0 %v1294
        %1436 = vmatprep.subr.bf16.mxu0 0
        %1437 = vmatpush1.bf16.msra.mxu0 %v1295
        %1438 = vmatprep.subr.bf16.mxu0 0
        %1439 = vmatpush1.bf16.msra.mxu0 %v1296
        %1440 = vmatprep.subr.bf16.mxu0 0
        %1441 = vmatpush1.bf16.msra.mxu0 %v1297
        %1442 = vmatprep.mubr.bf16.mxu0 %v884
        %1443 = vmatmul.mubr.bf16.gmra.mrb[0].mxu0 %v883
        %v1444 = vpop.f32.mrb[0].mxu0
        %v1445 = vadd.f32 %v1024, %v1444
        %v1446 = vpop.f32.mrb[0].mxu0
        %v1447 = vpop.f32.mrb[0].mxu0
        %v1448 = vpop.f32.mrb[0].mxu0
        %1449 = vdwg.mxu0
        %1450 = vmatprep.subr.bf16.mxu0 0
        %1451 = vmatpush1.bf16.msra.mxu0 %v1298
        %1452 = vmatprep.subr.bf16.mxu0 0
        %1453 = vmatpush1.bf16.msra.mxu0 %v1299
        %1454 = vmatprep.subr.bf16.mxu0 0
        %1455 = vmatpush1.bf16.msra.mxu0 %v1300
        %1456 = vmatprep.subr.bf16.mxu0 0
        %1457 = vmatpush1.bf16.msra.mxu0 %v1301
        %1458 = vmatprep.subr.bf16.mxu0 0
        %1459 = vmatpush1.bf16.msra.mxu0 %v1302
        %1460 = vmatprep.subr.bf16.mxu0 0
        %1461 = vmatpush1.bf16.msra.mxu0 %v1303
        %1462 = vmatprep.subr.bf16.mxu0 0
        %1463 = vmatpush1.bf16.msra.mxu0 %v1304
        %1464 = vmatprep.subr.bf16.mxu0 0
        %1465 = vmatpush1.bf16.msra.mxu0 %v1305
        %1466 = vmatprep.subr.bf16.mxu0 0
        %1467 = vmatpush1.bf16.msra.mxu0 %v1306
        %1468 = vmatprep.subr.bf16.mxu0 0
        %1469 = vmatpush1.bf16.msra.mxu0 %v1307
        %1470 = vmatprep.subr.bf16.mxu0 0
        %1471 = vmatpush1.bf16.msra.mxu0 %v1308
        %1472 = vmatprep.subr.bf16.mxu0 0
        %1473 = vmatpush1.bf16.msra.mxu0 %v1309
        %1474 = vmatprep.subr.bf16.mxu0 0
        %1475 = vmatpush1.bf16.msra.mxu0 %v1310
        %1476 = vmatprep.subr.bf16.mxu0 0
        %1477 = vmatpush1.bf16.msra.mxu0 %v1311
        %1478 = vmatprep.subr.bf16.mxu0 0
        %1479 = vmatpush1.bf16.msra.mxu0 %v1312
        %1480 = vmatprep.subr.bf16.mxu0 0
        %1481 = vmatpush1.bf16.msra.mxu0 %v1313
        %1482 = vmatprep.mubr.bf16.mxu0 %v886
        %1483 = vmatmul.mubr.bf16.gmra.mrb[0].mxu0 %v885
        %v1484 = vpop.f32.mrb[0].mxu0
        %v1485 = vadd.f32 %v1445, %v1484
        %v1486 = vpop.f32.mrb[0].mxu0
        %v1487 = vpop.f32.mrb[0].mxu0
        %v1488 = vpop.f32.mrb[0].mxu0
        %1489 = vdwg.mxu0
        %1490 = vmatprep.subr.bf16.mxu0 0
        %1491 = vmatpush1.bf16.msra.mxu0 %v1314
        %1492 = vmatprep.subr.bf16.mxu0 0
        %1493 = vmatpush1.bf16.msra.mxu0 %v1315
        %1494 = vmatprep.subr.bf16.mxu0 0
        %1495 = vmatpush1.bf16.msra.mxu0 %v1316
        %1496 = vmatprep.subr.bf16.mxu0 0
        %1497 = vmatpush1.bf16.msra.mxu0 %v1317
        %1498 = vmatprep.subr.bf16.mxu0 0
        %1499 = vmatpush1.bf16.msra.mxu0 %v1318
        %1500 = vmatprep.subr.bf16.mxu0 0
        %1501 = vmatpush1.bf16.msra.mxu0 %v1319
        %1502 = vmatprep.subr.bf16.mxu0 0
        %1503 = vmatpush1.bf16.msra.mxu0 %v1320
        %1504 = vmatprep.subr.bf16.mxu0 0
        %1505 = vmatpush1.bf16.msra.mxu0 %v1321
        %1506 = vmatprep.subr.bf16.mxu0 0
        %1507 = vmatpush1.bf16.msra.mxu0 %v1322
        %1508 = vmatprep.subr.bf16.mxu0 0
        %1509 = vmatpush1.bf16.msra.mxu0 %v1323
        %1510 = vmatprep.subr.bf16.mxu0 0
        %1511 = vmatpush1.bf16.msra.mxu0 %v1324
        %1512 = vmatprep.subr.bf16.mxu0 0
        %1513 = vmatpush1.bf16.msra.mxu0 %v1325
        %1514 = vmatprep.subr.bf16.mxu0 0
        %1515 = vmatpush1.bf16.msra.mxu0 %v1326
        %1516 = vmatprep.subr.bf16.mxu0 0
        %1517 = vmatpush1.bf16.msra.mxu0 %v1327
        %1518 = vmatprep.subr.bf16.mxu0 0
        %1519 = vmatpush1.bf16.msra.mxu0 %v1328
        %1520 = vmatprep.subr.bf16.mxu0 0
        %1521 = vmatpush1.bf16.msra.mxu0 %v1329
        %1522 = vmatprep.mubr.bf16.mxu0 %v888
        %1523 = vmatmul.mubr.bf16.gmra.mrb[0].mxu0 %v887
        %v1524 = vpop.f32.mrb[0].mxu0
        %v1525 = vadd.f32 %v1485, %v1524
        %v1526 = vpop.f32.mrb[0].mxu0
        %v1527 = vpop.f32.mrb[0].mxu0
        %v1528 = vpop.f32.mrb[0].mxu0
        %1529 = vdwg.mxu0
        %1530 = vmatprep.subr.bf16.mxu0 0
        %1531 = vmatpush1.bf16.msra.mxu0 %v1330
        %1532 = vmatprep.subr.bf16.mxu0 0
        %1533 = vmatpush1.bf16.msra.mxu0 %v1331
        %1534 = vmatprep.subr.bf16.mxu0 0
        %1535 = vmatpush1.bf16.msra.mxu0 %v1332
        %1536 = vmatprep.subr.bf16.mxu0 0
        %1537 = vmatpush1.bf16.msra.mxu0 %v1333
        %1538 = vmatprep.subr.bf16.mxu0 0
        %1539 = vmatpush1.bf16.msra.mxu0 %v1334
        %1540 = vmatprep.subr.bf16.mxu0 0
        %1541 = vmatpush1.bf16.msra.mxu0 %v1335
        %1542 = vmatprep.subr.bf16.mxu0 0
        %1543 = vmatpush1.bf16.msra.mxu0 %v1336
        %1544 = vmatprep.subr.bf16.mxu0 0
        %1545 = vmatpush1.bf16.msra.mxu0 %v1337
        %1546 = vmatprep.subr.bf16.mxu0 0
        %1547 = vmatpush1.bf16.msra.mxu0 %v1338
        %1548 = vmatprep.subr.bf16.mxu0 0
        %1549 = vmatpush1.bf16.msra.mxu0 %v1339
        %1550 = vmatprep.subr.bf16.mxu0 0
        %1551 = vmatpush1.bf16.msra.mxu0 %v1340
        %1552 = vmatprep.subr.bf16.mxu0 0
        %1553 = vmatpush1.bf16.msra.mxu0 %v1341
        %1554 = vmatprep.subr.bf16.mxu0 0
        %1555 = vmatpush1.bf16.msra.mxu0 %v1342
        %1556 = vmatprep.subr.bf16.mxu0 0
        %1557 = vmatpush1.bf16.msra.mxu0 %v1343
        %1558 = vmatprep.subr.bf16.mxu0 0
        %1559 = vmatpush1.bf16.msra.mxu0 %v1344
        %1560 = vmatprep.subr.bf16.mxu0 0
        %1561 = vmatpush1.bf16.msra.mxu0 %v1345
        %1562 = vmatprep.mubr.bf16.mxu0 %v890
        %1563 = vmatmul.mubr.bf16.gmra.mrb[0].mxu0 %v889
        %v1564 = vpop.f32.mrb[0].mxu0
        %v1565 = vadd.f32 %v1525, %v1564
        %v1566 = vpop.f32.mrb[0].mxu0
        %v1567 = vpop.f32.mrb[0].mxu0
        %v1568 = vpop.f32.mrb[0].mxu0
        %1569 = vdwg.mxu0
        %1570 = vst [vmem:[%s281] sm:$0xff] %v1565
        %s1571 = sand.u32 %s142, 1
        %s1572 = scalar_lea.sflag [#allocation4], %s1571
        %s1573 = sand.u32 %s142, 1
        %s1574 = smul.addr %s1573, 8
        %s1575 = scalar_lea.vmem [#allocation10], %s1574
        // Predicated region
        $region57: #{tpu_custom_call.1} parent=39 // pred_check
          %p1576 = pneg %p152
        $region58: #{tpu_custom_call.1} parent=39 // pred_check_branch
          %1578 = sbr.rel (%p1576) target = $region60
        $region59: #{tpu_custom_call.1} parent=39 // pred_region
          %s1580 = ssub.s32 128, 128
          %1581 = vsyncadd %s1572, %s1580
          %s1582 = smul.addr %s24, 128
          %s1583 = scalar_lea.hbm %s5, %s1582
          %s1585 = sshll.u32 %s1575, 4
          %s1586 = int_to_ptr.vmem [resolvable:$true] %s1585
          %1588 = dma.vmem_to_hbm [thread:$0]  %s1586, 128, %s1583, %s1572
        $region60: #{tpu_custom_call.1} parent=39 // pred_fallthru
          _
      $region40: #{tpu_custom_call.1} parent=5 // pred_fallthru
        _
      %p1589 = scmp.le.s32.totalorder 2, %s19
      // Predicated region
      $region61: #{tpu_custom_call.1} parent=5 // pred_check
        %p1590 = pneg %p1589
      $region62: #{tpu_custom_call.1} parent=5 // pred_check_branch
        %1592 = sbr.rel (%p1590) target = $region64
      $region63: #{tpu_custom_call.1} parent=5 // pred_region
        %s1593 = ssub.s32 %s19, 2
        // Predicated region
        $region65: #{tpu_custom_call.1} parent=63 // pred_check
          %p1594 = pneg %p158
        $region66: #{tpu_custom_call.1} parent=63 // pred_check_branch
          %1596 = sbr.rel (%p1594) target = $region68
        $region67: #{tpu_custom_call.1} parent=63 // pred_region
          %s1597 = sand.u32 %s143, 1
          %s1598 = scalar_lea.sflag [#allocation4], %s1597
          %s1599 = sand.u32 %s143, 1
          %s1600 = smul.addr %s1599, 8
          %s1601 = scalar_lea.vmem [#allocation10], %s1600
          %1602 = dma.done %s1598, 128
        $region68: #{tpu_custom_call.1} parent=63 // pred_fallthru
          _
      $region64: #{tpu_custom_call.1} parent=5 // pred_fallthru
        _
    $region6: #{tpu_custom_call.1} parent=1 // loop_footer
      %s23 = sadd.s32 1, %s19
    $region7: #{tpu_custom_call.1} parent=1 // loop_footer_branch
      %18 = sbr.rel target = $region3
    $region8: #{tpu_custom_call.1} parent=1 // loop_exit
      _
    %1603 = vsyncpa [#allocation3], 1
    %s1604 = scalar_lea.sflag [#allocation3], 1
    %1605 = vsyncpa %s1604, 1
    %1606 = vsyncpa [#allocation6], 1
    %1607 = vsyncpa [#allocation9], 1
    %1608 = vsyncpa [#allocation4], 1
    %s1609 = scalar_lea.sflag [#allocation4], 1
    %1610 = vsyncpa %s1609, 1

// kernel: tpu_custom_call.1
$region0: #{tpu_custom_call.1}
  #allocation0 [shape = 'u32[]', space=smem, size = 0x4, offset = 0x4, fixed_abs, tag = 'smem constant byte address 0x4 - core index']
  #allocation1 [shape = 'u32[144,128]{1,0:T(1,128)}', space=vmem, size = 0x12000, scoped, tag = 'internal scratch']
  %s0 = inlined_call_operand.hbm [shape: f32[16,128], index: 0, kind: input, shape index: {}]
  %s1 = inlined_call_operand.hbm [shape: bf16[128,1024], index: 1, kind: input, shape index: {}]
  %s2 = inlined_call_operand.hbm [shape: f32[1,1024], index: 2, kind: input, shape index: {}]
  %s3 = inlined_call_operand.hbm [shape: bf16[1024,128], index: 3, kind: input, shape index: {}]
  %s4 = inlined_call_operand.vmem [shape: f32[1,128], index: 4, kind: input, shape index: {}]
  %s5 = inlined_call_operand.hbm [shape: f32[16,128], index: 5, kind: output, shape index: {}]
  %s6 = sld [smem:[#allocation0]]
  $region69: #{tpu_custom_call.1} parent=0
    _
  %s8 = ssub.s32 1, %s6
  %s9 = scalar_select 0, %s8, %s6
  $region1: #{tpu_custom_call.1} parent=0
    #allocation2 [shape = 'u8[8192]{0}', space=vmem, size = 0x2000, scoped, tag = 'input window, operand 0']
    #allocation3 [shape = 's32[2]{0}', space=sflag, size = 0x8, scoped, tag = 'scoped memory for tpu_custom_call.1']
    #allocation4 [shape = 's32[2]{0}', space=sflag, size = 0x8, scoped, tag = 'scoped memory for tpu_custom_call.1']
    #allocation5 [shape = 'u8[262144]{0}', space=vmem, size = 0x40000, scoped, tag = 'input window, operand 1, single buffered']
    #allocation6 [shape = 's32[1]{0}', space=sflag, size = 0x4, scoped, tag = 'scoped memory for tpu_custom_call.1']
    #allocation7 [shape = 'u8[4096]{0}', space=vmem, size = 0x1000, scoped, tag = 'input window, operand 2, single buffered']
    #allocation8 [shape = 'u8[262144]{0}', space=vmem, size = 0x40000, scoped, tag = 'input window, operand 3, single buffered']
    #allocation9 [shape = 's32[1]{0}', space=sflag, size = 0x4, scoped, tag = 'scoped memory for tpu_custom_call.1']
    #allocation10 [shape = 'u8[8192]{0}', space=vmem, size = 0x2000, scoped, tag = 'output window, operand 0']
    %10 = vsyncpa [#allocation3], 0
    %s11 = scalar_lea.sflag [#allocation3], 1
    %12 = vsyncpa %s11, 0
    %13 = vsyncpa [#allocation6], 0
    %14 = vsyncpa [#allocation9], 0
    %15 = vsyncpa [#allocation4], 0
    %s16 = scalar_lea.sflag [#allocation4], 1
    %17 = vsyncpa %s16, 0
    loop: start=0, step=1, limit=4
    $region2: #{tpu_custom_call.1} parent=1 // loop_pre_header
      _
    $region3: #{tpu_custom_call.1} parent=1 // loop_header
      %s19 = sphi 0, %s23
      %p20 = scmp.ge.s32.totalorder %s19, 4
      %s29 = sphi 0, %s31
      %s32 = sphi 0, %s29
      %s33 = sphi 0, %s32
      %s49 = sphi 0, %s33
      %s53 = sphi 0, %s53
      %s55 = sphi 0, %s53
      %s56 = sphi 0, %s55
      %s70 = sphi 0, %s56
      %s74 = sphi 0, %s74
      %s76 = sphi 0, %s74
      %s77 = sphi 0, %s76
      %s91 = sphi 0, %s77
      %s95 = sphi 0, %s95
      %s97 = sphi 0, %s95
      %s98 = sphi 0, %s97
      %s112 = sphi 0, %s98
      %s116 = sphi 0, %s116
      %s118 = sphi 0, %s116
      %s119 = sphi 0, %s118
      %s133 = sphi 0, %s119
      %s139 = sphi 0, %s141
      %s142 = sphi 0, %s139
      %s143 = sphi 0, %s142
      %s159 = sphi 0, %s143
    $region4: #{tpu_custom_call.1} parent=1 // loop_header_branch
      %22 = sbr.rel (%p20) target = $region8
    $region5: #{tpu_custom_call.1} parent=1 // loop_body
      %s24 = ssub.s32 %s19, 1
      %s25 = ssub.s32 %s19, 2
      %s26 = sadd.s32 %s19, 1
      %s27 = ssub.s32 %s19, %s26
      %p28 = scmp.eq.s32.totalorder %s27, 0
      %s30 = sadd.s32 %s29, 1
      %s31 = scalar_select %p28, %s29, %s30
      %p34 = pneg %p28
      %p35 = scmp.eq.s32.totalorder %s19, 1
      %p36 = por %p34, %p35
      %p37 = scmp.ne.s32.totalorder %s29, %s32
      %p38 = scmp.eq.s32.totalorder %s19, 0
      %p39 = por %p37, %p38
      %p40 = scmp.ne.s32.totalorder %s29, %s32
      %p41 = scmp.eq.s32.totalorder %s24, 1
      %p42 = por %p40, %p41
      %p43 = scmp.ne.s32.totalorder %s32, %s33
      %p44 = scmp.eq.s32.totalorder %s24, 0
      %p45 = por %p43, %p44
      %p46 = scmp.ne.s32.totalorder %s32, %s33
      %p47 = scmp.eq.s32.totalorder %s25, 1
      %p48 = por %p46, %p47
      %p50 = scmp.ne.s32.totalorder %s33, %s49
      %p51 = scmp.eq.s32.totalorder %s25, 0
      %p52 = por %p50, %p51
      %s54 = sadd.s32 %s53, 1
      %p57 = scmp.eq.s32.totalorder %s19, 1
      %p58 = scmp.ne.s32.totalorder %s53, %s55
      %p59 = scmp.eq.s32.totalorder %s19, 0
      %p60 = por %p58, %p59
      %p61 = scmp.ne.s32.totalorder %s53, %s55
      %p62 = scmp.eq.s32.totalorder %s24, 1
      %p63 = por %p61, %p62
      %p64 = scmp.ne.s32.totalorder %s55, %s56
      %p65 = scmp.eq.s32.totalorder %s24, 0
      %p66 = por %p64, %p65
      %p67 = scmp.ne.s32.totalorder %s55, %s56
      %p68 = scmp.eq.s32.totalorder %s25, 1
      %p69 = por %p67, %p68
      %p71 = scmp.ne.s32.totalorder %s56, %s70
      %p72 = scmp.eq.s32.totalorder %s25, 0
      %p73 = por %p71, %p72
      %s75 = sadd.s32 %s74, 1
      %p78 = scmp.eq.s32.totalorder %s19, 1
      %p79 = scmp.ne.s32.totalorder %s74, %s76
      %p80 = scmp.eq.s32.totalorder %s19, 0
      %p81 = por %p79, %p80
      %p82 = scmp.ne.s32.totalorder %s74, %s76
      %p83 = scmp.eq.s32.totalorder %s24, 1
      %p84 = por %p82, %p83
      %p85 = scmp.ne.s32.totalorder %s76, %s77
      %p86 = scmp.eq.s32.totalorder %s24, 0
      %p87 = por %p85, %p86
      %p88 = scmp.ne.s32.totalorder %s76, %s77
      %p89 = scmp.eq.s32.totalorder %s25, 1
      %p90 = por %p88, %p89
      %p92 = scmp.ne.s32.totalorder %s77, %s91
      %p93 = scmp.eq.s32.totalorder %s25, 0
      %p94 = por %p92, %p93
      %s96 = sadd.s32 %s95, 1
      %p99 = scmp.eq.s32.totalorder %s19, 1
      %p100 = scmp.ne.s32.totalorder %s95, %s97
      %p101 = scmp.eq.s32.totalorder %s19, 0
      %p102 = por %p100, %p101
      %p103 = scmp.ne.s32.totalorder %s95, %s97
      %p104 = scmp.eq.s32.totalorder %s24, 1
      %p105 = por %p103, %p104
      %p106 = scmp.ne.s32.totalorder %s97, %s98
      %p107 = scmp.eq.s32.totalorder %s24, 0
      %p108 = por %p106, %p107
      %p109 = scmp.ne.s32.totalorder %s97, %s98
      %p110 = scmp.eq.s32.totalorder %s25, 1
      %p111 = por %p109, %p110
      %p113 = scmp.ne.s32.totalorder %s98, %s112
      %p114 = scmp.eq.s32.totalorder %s25, 0
      %p115 = por %p113, %p114
      %s117 = sadd.s32 %s116, 1
      %p120 = scmp.eq.s32.totalorder %s19, 1
      %p121 = scmp.ne.s32.totalorder %s116, %s118
      %p122 = scmp.eq.s32.totalorder %s19, 0
      %p123 = por %p121, %p122
      %p124 = scmp.ne.s32.totalorder %s116, %s118
      %p125 = scmp.eq.s32.totalorder %s24, 1
      %p126 = por %p124, %p125
      %p127 = scmp.ne.s32.totalorder %s118, %s119
      %p128 = scmp.eq.s32.totalorder %s24, 0
      %p129 = por %p127, %p128
      %p130 = scmp.ne.s32.totalorder %s118, %s119
      %p131 = scmp.eq.s32.totalorder %s25, 1
      %p132 = por %p130, %p131
      %p134 = scmp.ne.s32.totalorder %s119, %s133
      %p135 = scmp.eq.s32.totalorder %s25, 0
      %p136 = por %p134, %p135
      %s137 = ssub.s32 %s19, %s26
      %p138 = scmp.eq.s32.totalorder %s137, 0
      %s140 = sadd.s32 %s139, 1
      %s141 = scalar_select %p138, %s139, %s140
      %p144 = pneg %p138
      %p145 = scmp.eq.s32.totalorder %s19, 1
      %p146 = por %p144, %p145
      %p147 = scmp.ne.s32.totalorder %s139, %s142
      %p148 = scmp.eq.s32.totalorder %s19, 0
      %p149 = por %p147, %p148
      %p150 = scmp.ne.s32.totalorder %s139, %s142
      %p151 = scmp.eq.s32.totalorder %s24, 1
      %p152 = por %p150, %p151
      %p153 = scmp.ne.s32.totalorder %s142, %s143
      %p154 = scmp.eq.s32.totalorder %s24, 0
      %p155 = por %p153, %p154
      %p156 = scmp.ne.s32.totalorder %s142, %s143
      %p157 = scmp.eq.s32.totalorder %s25, 1
      %p158 = por %p156, %p157
      %p160 = scmp.ne.s32.totalorder %s143, %s159
      %p161 = scmp.eq.s32.totalorder %s25, 0
      %p162 = por %p160, %p161
      %p163 = scmp.le.s32.totalorder 1, %s19
      %p164 = scmp.lt.s32.totalorder %s19, 3
      %p165 = pnand %p163, %p164
      %p166 = pneg %p165
      // Predicated region
      $region9: #{tpu_custom_call.1} parent=5 // pred_check
        _
      $region10: #{tpu_custom_call.1} parent=5 // pred_check_branch
        %168 = sbr.rel (%p165) target = $region12
      $region11: #{tpu_custom_call.1} parent=5 // pred_region
        %s169 = ssub.s32 %s19, 1
        // Predicated region
        $region13: #{tpu_custom_call.1} parent=11 // pred_check
          %p170 = pneg %p66
        $region14: #{tpu_custom_call.1} parent=11 // pred_check_branch
          %172 = sbr.rel (%p170) target = $region16
        $region15: #{tpu_custom_call.1} parent=11 // pred_region
          %s174 = ssub.s32 8192, 8192
          %175 = vsyncadd [#allocation6], %s174
          %s176 = sshll.u32 [#allocation5], 4
          %s177 = int_to_ptr.vmem [resolvable:$true] %s176
          %182 = dma.hbm_to_vmem [thread:$0]  %s1, 8192, %s177, [#allocation6], 512, 512, 32
        $region16: #{tpu_custom_call.1} parent=11 // pred_fallthru
          _
        // Predicated region
        $region17: #{tpu_custom_call.1} parent=11 // pred_check
          %p183 = pneg %p87
        $region18: #{tpu_custom_call.1} parent=11 // pred_check_branch
          %185 = sbr.rel (%p183) target = $region20
        $region19: #{tpu_custom_call.1} parent=11 // pred_region
          %s187 = ssub.s32 128, 128
          %188 = vsyncadd [#allocation6], %s187
          %s190 = sshll.u32 [#allocation7], 4
          %s191 = int_to_ptr.vmem [resolvable:$true] %s190
          %193 = dma.hbm_to_vmem [thread:$0]  %s2, 128, %s191, [#allocation6]
        $region20: #{tpu_custom_call.1} parent=11 // pred_fallthru
          _
        // Predicated region
        $region21: #{tpu_custom_call.1} parent=11 // pred_check
          %p194 = pneg %p108
        $region22: #{tpu_custom_call.1} parent=11 // pred_check_branch
          %196 = sbr.rel (%p194) target = $region24
        $region23: #{tpu_custom_call.1} parent=11 // pred_region
          %s198 = ssub.s32 8192, 8192
          %199 = vsyncadd [#allocation9], %s198
          %s200 = sshll.u32 [#allocation8], 4
          %s201 = int_to_ptr.vmem [resolvable:$true] %s200
          %206 = dma.hbm_to_vmem [thread:$0]  %s3, 8192, %s201, [#allocation9], 64, 64, 4
        $region24: #{tpu_custom_call.1} parent=11 // pred_fallthru
          _
        // Predicated region
        $region25: #{tpu_custom_call.1} parent=11 // pred_check
          %p207 = pneg %p129
        $region26: #{tpu_custom_call.1} parent=11 // pred_check_branch
          %209 = sbr.rel (%p207) target = $region28
        $region27: #{tpu_custom_call.1} parent=11 // pred_region
          _
        $region28: #{tpu_custom_call.1} parent=11 // pred_fallthru
          _
      $region12: #{tpu_custom_call.1} parent=5 // pred_fallthru
        _
      %p210 = scmp.lt.s32.totalorder %s19, 2
      // Predicated region
      $region29: #{tpu_custom_call.1} parent=5 // pred_check
        %p211 = pneg %p210
      $region30: #{tpu_custom_call.1} parent=5 // pred_check_branch
        %213 = sbr.rel (%p211) target = $region32
      $region31: #{tpu_custom_call.1} parent=5 // pred_region
        // Predicated region
        $region33: #{tpu_custom_call.1} parent=31 // pred_check
          %p214 = pneg %p39
        $region34: #{tpu_custom_call.1} parent=31 // pred_check_branch
          %216 = sbr.rel (%p214) target = $region36
        $region35: #{tpu_custom_call.1} parent=31 // pred_region
          %s217 = sand.u32 %s29, 1
          %s218 = scalar_lea.sflag [#allocation3], %s217
          %s219 = sand.u32 %s29, 1
          %s220 = smul.addr %s219, 8
          %s221 = scalar_lea.vmem [#allocation2], %s220
          %s223 = ssub.s32 128, 128
          %224 = vsyncadd %s218, %s223
          %s225 = smul.addr %s19, 128
          %s226 = scalar_lea.hbm %s0, %s225
          %s228 = sshll.u32 %s221, 4
          %s229 = int_to_ptr.vmem [resolvable:$true] %s228
          %231 = dma.hbm_to_vmem [thread:$0]  %s226, 128, %s229, %s218
        $region36: #{tpu_custom_call.1} parent=31 // pred_fallthru
          _
      $region32: #{tpu_custom_call.1} parent=5 // pred_fallthru
        _
      %p232 = scmp.le.s32.totalorder 1, %s19
      %p233 = scmp.lt.s32.totalorder %s19, 3
      %p234 = pnand %p232, %p233
      %p235 = pneg %p234
      // Predicated region
      $region37: #{tpu_custom_call.1} parent=5 // pred_check
        _
      $region38: #{tpu_custom_call.1} parent=5 // pred_check_branch
        %237 = sbr.rel (%p234) target = $region40
      $region39: #{tpu_custom_call.1} parent=5 // pred_region
        %s238 = ssub.s32 %s19, 1
        %s239 = sand.u32 %s32, 1
        %s240 = scalar_lea.sflag [#allocation3], %s239
        %s241 = sand.u32 %s32, 1
        %s242 = smul.addr %s241, 8
        %s243 = scalar_lea.vmem [#allocation2], %s242
        // Predicated region
        $region41: #{tpu_custom_call.1} parent=39 // pred_check
          %p244 = pneg %p45
        $region42: #{tpu_custom_call.1} parent=39 // pred_check_branch
          %246 = sbr.rel (%p244) target = $region44
        $region43: #{tpu_custom_call.1} parent=39 // pred_region
          %247 = dma.done %s240, 128
        $region44: #{tpu_custom_call.1} parent=39 // pred_fallthru
          _
        // Predicated region
        $region45: #{tpu_custom_call.1} parent=39 // pred_check
          %p248 = pneg %p66
        $region46: #{tpu_custom_call.1} parent=39 // pred_check_branch
          %250 = sbr.rel (%p248) target = $region48
        $region47: #{tpu_custom_call.1} parent=39 // pred_region
          %251 = dma.done [#allocation6], 8192
        $region48: #{tpu_custom_call.1} parent=39 // pred_fallthru
          _
        // Predicated region
        $region49: #{tpu_custom_call.1} parent=39 // pred_check
          %p252 = pneg %p87
        $region50: #{tpu_custom_call.1} parent=39 // pred_check_branch
          %254 = sbr.rel (%p252) target = $region52
        $region51: #{tpu_custom_call.1} parent=39 // pred_region
          %255 = dma.done [#allocation6], 128
        $region52: #{tpu_custom_call.1} parent=39 // pred_fallthru
          _
        // Predicated region
        $region53: #{tpu_custom_call.1} parent=39 // pred_check
          %p256 = pneg %p108
        $region54: #{tpu_custom_call.1} parent=39 // pred_check_branch
          %258 = sbr.rel (%p256) target = $region56
        $region55: #{tpu_custom_call.1} parent=39 // pred_region
          %259 = dma.done [#allocation9], 8192
        $region56: #{tpu_custom_call.1} parent=39 // pred_fallthru
          _
        %s260 = sand.u32 %s32, 1
        %s261 = scalar_lea.sflag [#allocation3], %s260
        %s262 = sand.u32 %s32, 1
        %s263 = smul.addr %s262, 8
        %s264 = scalar_lea.vmem [#allocation2], %s263
        %p265 = pneg %p45
        %p266 = pneg %p42
        %p267 = pneg %p66
        %p268 = pneg %p63
        %p269 = pneg %p87
        %p270 = pneg %p84
        %p271 = pneg %p108
        %p272 = pneg %p105
        %p273 = pneg %p129
        %p274 = pneg %p126
        %p275 = pneg %p155
        %p276 = pneg %p152
        %s277 = sand.u32 %s142, 1
        %s278 = scalar_lea.sflag [#allocation4], %s277
        %s279 = sand.u32 %s142, 1
        %s280 = smul.addr %s279, 8
        %s281 = scalar_lea.vmem [#allocation10], %s280
        %v283 = vld [vmem:[%s243] sm:$0xff]
        %v284 = vpack.c.bf16 %v283, %v283
        %v285 = vld [vmem:[#allocation5] sm:$0xff]
        %v286 = vld [vmem:[#allocation5 + $0x8] sm:$0xff]
        %v287 = vld [vmem:[#allocation5 + $0x10] sm:$0xff]
        %v288 = vld [vmem:[#allocation5 + $0x18] sm:$0xff]
        %v289 = vld [vmem:[#allocation5 + $0x20] sm:$0xff]
        %v290 = vld [vmem:[#allocation5 + $0x28] sm:$0xff]
        %v291 = vld [vmem:[#allocation5 + $0x30] sm:$0xff]
        %v292 = vld [vmem:[#allocation5 + $0x38] sm:$0xff]
        %v293 = vld [vmem:[#allocation5 + $0x40] sm:$0xff]
        %v294 = vld [vmem:[#allocation5 + $0x48] sm:$0xff]
        %v295 = vld [vmem:[#allocation5 + $0x50] sm:$0xff]
        %v296 = vld [vmem:[#allocation5 + $0x58] sm:$0xff]
        %v297 = vld [vmem:[#allocation5 + $0x60] sm:$0xff]
        %v298 = vld [vmem:[#allocation5 + $0x68] sm:$0xff]
        %v299 = vld [vmem:[#allocation5 + $0x70] sm:$0xff]
        %v300 = vld [vmem:[#allocation5 + $0x78] sm:$0xff]
        %v301 = vld [vmem:[#allocation5 + $0x80] sm:$0xff]
        %v302 = vld [vmem:[#allocation5 + $0x88] sm:$0xff]
        %v303 = vld [vmem:[#allocation5 + $0x90] sm:$0xff]
        %v304 = vld [vmem:[#allocation5 + $0x98] sm:$0xff]
        %v305 = vld [vmem:[#allocation5 + $0xa0] sm:$0xff]
        %v306 = vld [vmem:[#allocation5 + $0xa8] sm:$0xff]
        %v307 = vld [vmem:[#allocation5 + $0xb0] sm:$0xff]
        %v308 = vld [vmem:[#allocation5 + $0xb8] sm:$0xff]
        %v309 = vld [vmem:[#allocation5 + $0xc0] sm:$0xff]
        %v310 = vld [vmem:[#allocation5 + $0xc8] sm:$0xff]
        %v311 = vld [vmem:[#allocation5 + $0xd0] sm:$0xff]
        %v312 = vld [vmem:[#allocation5 + $0xd8] sm:$0xff]
        %v313 = vld [vmem:[#allocation5 + $0xe0] sm:$0xff]
        %v314 = vld [vmem:[#allocation5 + $0xe8] sm:$0xff]
        %v315 = vld [vmem:[#allocation5 + $0xf0] sm:$0xff]
        %v316 = vld [vmem:[#allocation5 + $0xf8] sm:$0xff]
        %v317 = vld [vmem:[#allocation5 + $0x100] sm:$0xff]
        %v318 = vld [vmem:[#allocation5 + $0x108] sm:$0xff]
        %v319 = vld [vmem:[#allocation5 + $0x110] sm:$0xff]
        %v320 = vld [vmem:[#allocation5 + $0x118] sm:$0xff]
        %v321 = vld [vmem:[#allocation5 + $0x120] sm:$0xff]
        %v322 = vld [vmem:[#allocation5 + $0x128] sm:$0xff]
        %v323 = vld [vmem:[#allocation5 + $0x130] sm:$0xff]
        %v324 = vld [vmem:[#allocation5 + $0x138] sm:$0xff]
        %v325 = vld [vmem:[#allocation5 + $0x140] sm:$0xff]
        %v326 = vld [vmem:[#allocation5 + $0x148] sm:$0xff]
        %v327 = vld [vmem:[#allocation5 + $0x150] sm:$0xff]
        %v328 = vld [vmem:[#allocation5 + $0x158] sm:$0xff]
        %v329 = vld [vmem:[#allocation5 + $0x160] sm:$0xff]
        %v330 = vld [vmem:[#allocation5 + $0x168] sm:$0xff]
        %v331 = vld [vmem:[#allocation5 + $0x170] sm:$0xff]
        %v332 = vld [vmem:[#allocation5 + $0x178] sm:$0xff]
        %v333 = vld [vmem:[#allocation5 + $0x180] sm:$0xff]
        %v334 = vld [vmem:[#allocation5 + $0x188] sm:$0xff]
        %v335 = vld [vmem:[#allocation5 + $0x190] sm:$0xff]
        %v336 = vld [vmem:[#allocation5 + $0x198] sm:$0xff]
        %v337 = vld [vmem:[#allocation5 + $0x1a0] sm:$0xff]
        %v338 = vld [vmem:[#allocation5 + $0x1a8] sm:$0xff]
        %v339 = vld [vmem:[#allocation5 + $0x1b0] sm:$0xff]
        %v340 = vld [vmem:[#allocation5 + $0x1b8] sm:$0xff]
        %v341 = vld [vmem:[#allocation5 + $0x1c0] sm:$0xff]
        %v342 = vld [vmem:[#allocation5 + $0x1c8] sm:$0xff]
        %v343 = vld [vmem:[#allocation5 + $0x1d0] sm:$0xff]
        %v344 = vld [vmem:[#allocation5 + $0x1d8] sm:$0xff]
        %v345 = vld [vmem:[#allocation5 + $0x1e0] sm:$0xff]
        %v346 = vld [vmem:[#allocation5 + $0x1e8] sm:$0xff]
        %v347 = vld [vmem:[#allocation5 + $0x1f0] sm:$0xff]
        %v348 = vld [vmem:[#allocation5 + $0x1f8] sm:$0xff]
        %v349 = vld [vmem:[#allocation7] sm:$0xff]
        %v351 = vlaneseq
        %v352 = vshrl.u32 %v351, 7
        %v353 = vsub.s32 0, %v352
        %v354 = vrot.slane %v349, %v353
        %v355 = vlaneseq
        %v356 = vshrl.u32 %v355, 7
        %v357 = vsub.s32 1, %v356
        %v358 = vrot.slane %v349, %v357
        %v359 = vlaneseq
        %v360 = vshrl.u32 %v359, 7
        %v361 = vsub.s32 2, %v360
        %v362 = vrot.slane %v349, %v361
        %v363 = vlaneseq
        %v364 = vshrl.u32 %v363, 7
        %v365 = vsub.s32 3, %v364
        %v366 = vrot.slane %v349, %v365
        %v367 = vlaneseq
        %v368 = vshrl.u32 %v367, 7
        %v369 = vsub.s32 4, %v368
        %v370 = vrot.slane %v349, %v369
        %v371 = vlaneseq
        %v372 = vshrl.u32 %v371, 7
        %v373 = vsub.s32 5, %v372
        %v374 = vrot.slane %v349, %v373
        %v375 = vlaneseq
        %v376 = vshrl.u32 %v375, 7
        %v377 = vsub.s32 6, %v376
        %v378 = vrot.slane %v349, %v377
        %v379 = vlaneseq
        %v380 = vshrl.u32 %v379, 7
        %v381 = vsub.s32 7, %v380
        %v382 = vrot.slane %v349, %v381
        %v455 = vunpack.c.l.b16 %v285
        %v456 = vunpack.c.h.b16 %v285
        %v457 = vunpack.c.l.b16 %v286
        %v458 = vunpack.c.h.b16 %v286
        %v459 = vunpack.c.l.b16 %v287
        %v460 = vunpack.c.h.b16 %v287
        %v461 = vunpack.c.l.b16 %v288
        %v462 = vunpack.c.h.b16 %v288
        %v463 = vunpack.c.l.b16 %v289
        %v464 = vunpack.c.h.b16 %v289
        %v465 = vunpack.c.l.b16 %v290
        %v466 = vunpack.c.h.b16 %v290
        %v467 = vunpack.c.l.b16 %v291
        %v468 = vunpack.c.h.b16 %v291
        %v469 = vunpack.c.l.b16 %v292
        %v470 = vunpack.c.h.b16 %v292
        %v471 = vunpack.c.l.b16 %v293
        %v472 = vunpack.c.h.b16 %v293
        %v473 = vunpack.c.l.b16 %v294
        %v474 = vunpack.c.h.b16 %v294
        %v475 = vunpack.c.l.b16 %v295
        %v476 = vunpack.c.h.b16 %v295
        %v477 = vunpack.c.l.b16 %v296
        %v478 = vunpack.c.h.b16 %v296
        %v479 = vunpack.c.l.b16 %v297
        %v480 = vunpack.c.h.b16 %v297
        %v481 = vunpack.c.l.b16 %v298
        %v482 = vunpack.c.h.b16 %v298
        %v483 = vunpack.c.l.b16 %v299
        %v484 = vunpack.c.h.b16 %v299
        %v485 = vunpack.c.l.b16 %v300
        %v486 = vunpack.c.h.b16 %v300
        %v487 = vunpack.c.l.b16 %v301
        %v488 = vunpack.c.h.b16 %v301
        %v489 = vunpack.c.l.b16 %v302
        %v490 = vunpack.c.h.b16 %v302
        %v491 = vunpack.c.l.b16 %v303
        %v492 = vunpack.c.h.b16 %v303
        %v493 = vunpack.c.l.b16 %v304
        %v494 = vunpack.c.h.b16 %v304
        %v495 = vunpack.c.l.b16 %v305
        %v496 = vunpack.c.h.b16 %v305
        %v497 = vunpack.c.l.b16 %v306
        %v498 = vunpack.c.h.b16 %v306
        %v499 = vunpack.c.l.b16 %v307
        %v500 = vunpack.c.h.b16 %v307
        %v501 = vunpack.c.l.b16 %v308
        %v502 = vunpack.c.h.b16 %v308
        %v503 = vunpack.c.l.b16 %v309
        %v504 = vunpack.c.h.b16 %v309
        %v505 = vunpack.c.l.b16 %v310
        %v506 = vunpack.c.h.b16 %v310
        %v507 = vunpack.c.l.b16 %v311
        %v508 = vunpack.c.h.b16 %v311
        %v509 = vunpack.c.l.b16 %v312
        %v510 = vunpack.c.h.b16 %v312
        %v511 = vunpack.c.l.b16 %v313
        %v512 = vunpack.c.h.b16 %v313
        %v513 = vunpack.c.l.b16 %v314
        %v514 = vunpack.c.h.b16 %v314
        %v515 = vunpack.c.l.b16 %v315
        %v516 = vunpack.c.h.b16 %v315
        %v517 = vunpack.c.l.b16 %v316
        %v518 = vunpack.c.h.b16 %v316
        %v519 = vunpack.c.l.b16 %v317
        %v520 = vunpack.c.h.b16 %v317
        %v521 = vunpack.c.l.b16 %v318
        %v522 = vunpack.c.h.b16 %v318
        %v523 = vunpack.c.l.b16 %v319
        %v524 = vunpack.c.h.b16 %v319
        %v525 = vunpack.c.l.b16 %v320
        %v526 = vunpack.c.h.b16 %v320
        %v527 = vunpack.c.l.b16 %v321
        %v528 = vunpack.c.h.b16 %v321
        %v529 = vunpack.c.l.b16 %v322
        %v530 = vunpack.c.h.b16 %v322
        %v531 = vunpack.c.l.b16 %v323
        %v532 = vunpack.c.h.b16 %v323
        %v533 = vunpack.c.l.b16 %v324
        %v534 = vunpack.c.h.b16 %v324
        %v535 = vunpack.c.l.b16 %v325
        %v536 = vunpack.c.h.b16 %v325
        %v537 = vunpack.c.l.b16 %v326
        %v538 = vunpack.c.h.b16 %v326
        %v539 = vunpack.c.l.b16 %v327
        %v540 = vunpack.c.h.b16 %v327
        %v541 = vunpack.c.l.b16 %v328
        %v542 = vunpack.c.h.b16 %v328
        %v543 = vunpack.c.l.b16 %v329
        %v544 = vunpack.c.h.b16 %v329
        %v545 = vunpack.c.l.b16 %v330
        %v546 = vunpack.c.h.b16 %v330
        %v547 = vunpack.c.l.b16 %v331
        %v548 = vunpack.c.h.b16 %v331
        %v549 = vunpack.c.l.b16 %v332
        %v550 = vunpack.c.h.b16 %v332
        %v551 = vunpack.c.l.b16 %v333
        %v552 = vunpack.c.h.b16 %v333
        %v553 = vunpack.c.l.b16 %v334
        %v554 = vunpack.c.h.b16 %v334
        %v555 = vunpack.c.l.b16 %v335
        %v556 = vunpack.c.h.b16 %v335
        %v557 = vunpack.c.l.b16 %v336
        %v558 = vunpack.c.h.b16 %v336
        %v559 = vunpack.c.l.b16 %v337
        %v560 = vunpack.c.h.b16 %v337
        %v561 = vunpack.c.l.b16 %v338
        %v562 = vunpack.c.h.b16 %v338
        %v563 = vunpack.c.l.b16 %v339
        %v564 = vunpack.c.h.b16 %v339
        %v565 = vunpack.c.l.b16 %v340
        %v566 = vunpack.c.h.b16 %v340
        %v567 = vunpack.c.l.b16 %v341
        %v568 = vunpack.c.h.b16 %v341
        %v569 = vunpack.c.l.b16 %v342
        %v570 = vunpack.c.h.b16 %v342
        %v571 = vunpack.c.l.b16 %v343
        %v572 = vunpack.c.h.b16 %v343
        %v573 = vunpack.c.l.b16 %v344
        %v574 = vunpack.c.h.b16 %v344
        %v575 = vunpack.c.l.b16 %v345
        %v576 = vunpack.c.h.b16 %v345
        %v577 = vunpack.c.l.b16 %v346
        %v578 = vunpack.c.h.b16 %v346
        %v579 = vunpack.c.l.b16 %v347
        %v580 = vunpack.c.h.b16 %v347
        %v581 = vunpack.c.l.b16 %v348
        %v582 = vunpack.c.h.b16 %v348
        %v583 = vpack.c.b16 %v463, %v455
        %v584 = vpack.c.b16 %v464, %v456
        %v585 = vpack.c.b16 %v465, %v457
        %v586 = vpack.c.b16 %v466, %v458
        %v587 = vpack.c.b16 %v467, %v459
        %v588 = vpack.c.b16 %v468, %v460
        %v589 = vpack.c.b16 %v469, %v461
        %v590 = vpack.c.b16 %v470, %v462
        %v591 = vpack.c.b16 %v479, %v471
        %v592 = vpack.c.b16 %v480, %v472
        %v593 = vpack.c.b16 %v481, %v473
        %v594 = vpack.c.b16 %v482, %v474
        %v595 = vpack.c.b16 %v483, %v475
        %v596 = vpack.c.b16 %v484, %v476
        %v597 = vpack.c.b16 %v485, %v477
        %v598 = vpack.c.b16 %v486, %v478
        %v599 = vpack.c.b16 %v495, %v487
        %v600 = vpack.c.b16 %v496, %v488
        %v601 = vpack.c.b16 %v497, %v489
        %v602 = vpack.c.b16 %v498, %v490
        %v603 = vpack.c.b16 %v499, %v491
        %v604 = vpack.c.b16 %v500, %v492
        %v605 = vpack.c.b16 %v501, %v493
        %v606 = vpack.c.b16 %v502, %v494
        %v607 = vpack.c.b16 %v511, %v503
        %v608 = vpack.c.b16 %v512, %v504
        %v609 = vpack.c.b16 %v513, %v505
        %v610 = vpack.c.b16 %v514, %v506
        %v611 = vpack.c.b16 %v515, %v507
        %v612 = vpack.c.b16 %v516, %v508
        %v613 = vpack.c.b16 %v517, %v509
        %v614 = vpack.c.b16 %v518, %v510
        %v615 = vpack.c.b16 %v527, %v519
        %v616 = vpack.c.b16 %v528, %v520
        %v617 = vpack.c.b16 %v529, %v521
        %v618 = vpack.c.b16 %v530, %v522
        %v619 = vpack.c.b16 %v531, %v523
        %v620 = vpack.c.b16 %v532, %v524
        %v621 = vpack.c.b16 %v533, %v525
        %v622 = vpack.c.b16 %v534, %v526
        %v623 = vpack.c.b16 %v543, %v535
        %v624 = vpack.c.b16 %v544, %v536
        %v625 = vpack.c.b16 %v545, %v537
        %v626 = vpack.c.b16 %v546, %v538
        %v627 = vpack.c.b16 %v547, %v539
        %v628 = vpack.c.b16 %v548, %v540
        %v629 = vpack.c.b16 %v549, %v541
        %v630 = vpack.c.b16 %v550, %v542
        %v631 = vpack.c.b16 %v559, %v551
        %v632 = vpack.c.b16 %v560, %v552
        %v633 = vpack.c.b16 %v561, %v553
        %v634 = vpack.c.b16 %v562, %v554
        %v635 = vpack.c.b16 %v563, %v555
        %v636 = vpack.c.b16 %v564, %v556
        %v637 = vpack.c.b16 %v565, %v557
        %v638 = vpack.c.b16 %v566, %v558
        %v639 = vpack.c.b16 %v575, %v567
        %v640 = vpack.c.b16 %v576, %v568
        %v641 = vpack.c.b16 %v577, %v569
        %v642 = vpack.c.b16 %v578, %v570
        %v643 = vpack.c.b16 %v579, %v571
        %v644 = vpack.c.b16 %v580, %v572
        %v645 = vpack.c.b16 %v581, %v573
        %v646 = vpack.c.b16 %v582, %v574
        %711 = vmatprep.subr.bf16.mxu0 %v584
        %712 = vmatpush1.bf16.msra.mxu0 %v583
        %713 = vmatprep.subr.bf16.mxu0 %v592
        %714 = vmatpush1.bf16.msra.mxu0 %v591
        %715 = vmatprep.subr.bf16.mxu0 %v600
        %716 = vmatpush1.bf16.msra.mxu0 %v599
        %717 = vmatprep.subr.bf16.mxu0 %v608
        %718 = vmatpush1.bf16.msra.mxu0 %v607
        %719 = vmatprep.subr.bf16.mxu0 %v616
        %720 = vmatpush1.bf16.msra.mxu0 %v615
        %721 = vmatprep.subr.bf16.mxu0 %v624
        %722 = vmatpush1.bf16.msra.mxu0 %v623
        %723 = vmatprep.subr.bf16.mxu0 %v632
        %724 = vmatpush1.bf16.msra.mxu0 %v631
        %725 = vmatprep.subr.bf16.mxu0 %v640
        %726 = vmatpush1.bf16.msra.mxu0 %v639
        %727 = vmatprep.subr.bf16.mxu0 0
        %728 = vmatpush1.bf16.msra.mxu0 0
        %729 = vmatprep.subr.bf16.mxu0 0
        %730 = vmatpush1.bf16.msra.mxu0 0
        %731 = vmatprep.subr.bf16.mxu0 0
        %732 = vmatpush1.bf16.msra.mxu0 0
        %733 = vmatprep.subr.bf16.mxu0 0
        %734 = vmatpush1.bf16.msra.mxu0 0
        %735 = vmatprep.subr.bf16.mxu0 0
        %736 = vmatpush1.bf16.msra.mxu0 0
        %737 = vmatprep.subr.bf16.mxu0 0
        %738 = vmatpush1.bf16.msra.mxu0 0
        %739 = vmatprep.subr.bf16.mxu0 0
        %740 = vmatpush1.bf16.msra.mxu0 0
        %741 = vmatprep.subr.bf16.mxu0 0
        %742 = vmatpush1.bf16.msra.mxu0 0
        %743 = vmatprep.mubr.bf16.mxu0 0
        %744 = vmatmul.mubr.bf16.gmra.mrb[0].mxu0 %v284
        %v745 = vpop.f32.mrb[0].mxu0
        %v746 = vadd.f32 %v354, %v745
        %v747 = vpop.f32.mrb[0].mxu0
        %v748 = vadd.f32 %v358, %v747
        %v749 = vpop.f32.mrb[0].mxu0
        %v750 = vpop.f32.mrb[0].mxu0
        %751 = vdwg.mxu0
        %752 = vmatprep.subr.bf16.mxu0 %v586
        %753 = vmatpush1.bf16.msra.mxu0 %v585
        %754 = vmatprep.subr.bf16.mxu0 %v594
        %755 = vmatpush1.bf16.msra.mxu0 %v593
        %756 = vmatprep.subr.bf16.mxu0 %v602
        %757 = vmatpush1.bf16.msra.mxu0 %v601
        %758 = vmatprep.subr.bf16.mxu0 %v610
        %759 = vmatpush1.bf16.msra.mxu0 %v609
        %760 = vmatprep.subr.bf16.mxu0 %v618
        %761 = vmatpush1.bf16.msra.mxu0 %v617
        %762 = vmatprep.subr.bf16.mxu0 %v626
        %763 = vmatpush1.bf16.msra.mxu0 %v625
        %764 = vmatprep.subr.bf16.mxu0 %v634
        %765 = vmatpush1.bf16.msra.mxu0 %v633
        %766 = vmatprep.subr.bf16.mxu0 %v642
        %767 = vmatpush1.bf16.msra.mxu0 %v641
        %768 = vmatprep.subr.bf16.mxu0 0
        %769 = vmatpush1.bf16.msra.mxu0 0
        %770 = vmatprep.subr.bf16.mxu0 0
        %771 = vmatpush1.bf16.msra.mxu0 0
        %772 = vmatprep.subr.bf16.mxu0 0
        %773 = vmatpush1.bf16.msra.mxu0 0
        %774 = vmatprep.subr.bf16.mxu0 0
        %775 = vmatpush1.bf16.msra.mxu0 0
        %776 = vmatprep.subr.bf16.mxu0 0
        %777 = vmatpush1.bf16.msra.mxu0 0
        %778 = vmatprep.subr.bf16.mxu0 0
        %779 = vmatpush1.bf16.msra.mxu0 0
        %780 = vmatprep.subr.bf16.mxu0 0
        %781 = vmatpush1.bf16.msra.mxu0 0
        %782 = vmatprep.subr.bf16.mxu0 0
        %783 = vmatpush1.bf16.msra.mxu0 0
        %784 = vmatprep.mubr.bf16.mxu0 0
        %785 = vmatmul.mubr.bf16.gmra.mrb[0].mxu0 %v284
        %v786 = vpop.f32.mrb[0].mxu0
        %v787 = vadd.f32 %v362, %v786
        %v788 = vpop.f32.mrb[0].mxu0
        %v789 = vadd.f32 %v366, %v788
        %v790 = vpop.f32.mrb[0].mxu0
        %v791 = vpop.f32.mrb[0].mxu0
        %792 = vdwg.mxu0
        %793 = vmatprep.subr.bf16.mxu0 %v588
        %794 = vmatpush1.bf16.msra.mxu0 %v587
        %795 = vmatprep.subr.bf16.mxu0 %v596
        %796 = vmatpush1.bf16.msra.mxu0 %v595
        %797 = vmatprep.subr.bf16.mxu0 %v604
        %798 = vmatpush1.bf16.msra.mxu0 %v603
        %799 = vmatprep.subr.bf16.mxu0 %v612
        %800 = vmatpush1.bf16.msra.mxu0 %v611
        %801 = vmatprep.subr.bf16.mxu0 %v620
        %802 = vmatpush1.bf16.msra.mxu0 %v619
        %803 = vmatprep.subr.bf16.mxu0 %v628
        %804 = vmatpush1.bf16.msra.mxu0 %v627
        %805 = vmatprep.subr.bf16.mxu0 %v636
        %806 = vmatpush1.bf16.msra.mxu0 %v635
        %807 = vmatprep.subr.bf16.mxu0 %v644
        %808 = vmatpush1.bf16.msra.mxu0 %v643
        %809 = vmatprep.subr.bf16.mxu0 0
        %810 = vmatpush1.bf16.msra.mxu0 0
        %811 = vmatprep.subr.bf16.mxu0 0
        %812 = vmatpush1.bf16.msra.mxu0 0
        %813 = vmatprep.subr.bf16.mxu0 0
        %814 = vmatpush1.bf16.msra.mxu0 0
        %815 = vmatprep.subr.bf16.mxu0 0
        %816 = vmatpush1.bf16.msra.mxu0 0
        %817 = vmatprep.subr.bf16.mxu0 0
        %818 = vmatpush1.bf16.msra.mxu0 0
        %819 = vmatprep.subr.bf16.mxu0 0
        %820 = vmatpush1.bf16.msra.mxu0 0
        %821 = vmatprep.subr.bf16.mxu0 0
        %822 = vmatpush1.bf16.msra.mxu0 0
        %823 = vmatprep.subr.bf16.mxu0 0
        %824 = vmatpush1.bf16.msra.mxu0 0
        %825 = vmatprep.mubr.bf16.mxu0 0
        %826 = vmatmul.mubr.bf16.gmra.mrb[0].mxu0 %v284
        %v827 = vpop.f32.mrb[0].mxu0
        %v828 = vadd.f32 %v370, %v827
        %v829 = vpop.f32.mrb[0].mxu0
        %v830 = vadd.f32 %v374, %v829
        %v831 = vpop.f32.mrb[0].mxu0
        %v832 = vpop.f32.mrb[0].mxu0
        %833 = vdwg.mxu0
        %834 = vmatprep.subr.bf16.mxu0 %v590
        %835 = vmatpush1.bf16.msra.mxu0 %v589
        %836 = vmatprep.subr.bf16.mxu0 %v598
        %837 = vmatpush1.bf16.msra.mxu0 %v597
        %838 = vmatprep.subr.bf16.mxu0 %v606
        %839 = vmatpush1.bf16.msra.mxu0 %v605
        %840 = vmatprep.subr.bf16.mxu0 %v614
        %841 = vmatpush1.bf16.msra.mxu0 %v613
        %842 = vmatprep.subr.bf16.mxu0 %v622
        %843 = vmatpush1.bf16.msra.mxu0 %v621
        %844 = vmatprep.subr.bf16.mxu0 %v630
        %845 = vmatpush1.bf16.msra.mxu0 %v629
        %846 = vmatprep.subr.bf16.mxu0 %v638
        %847 = vmatpush1.bf16.msra.mxu0 %v637
        %848 = vmatprep.subr.bf16.mxu0 %v646
        %849 = vmatpush1.bf16.msra.mxu0 %v645
        %850 = vmatprep.subr.bf16.mxu0 0
        %851 = vmatpush1.bf16.msra.mxu0 0
        %852 = vmatprep.subr.bf16.mxu0 0
        %853 = vmatpush1.bf16.msra.mxu0 0
        %854 = vmatprep.subr.bf16.mxu0 0
        %855 = vmatpush1.bf16.msra.mxu0 0
        %856 = vmatprep.subr.bf16.mxu0 0
        %857 = vmatpush1.bf16.msra.mxu0 0
        %858 = vmatprep.subr.bf16.mxu0 0
        %859 = vmatpush1.bf16.msra.mxu0 0
        %860 = vmatprep.subr.bf16.mxu0 0
        %861 = vmatpush1.bf16.msra.mxu0 0
        %862 = vmatprep.subr.bf16.mxu0 0
        %863 = vmatpush1.bf16.msra.mxu0 0
        %864 = vmatprep.subr.bf16.mxu0 0
        %865 = vmatpush1.bf16.msra.mxu0 0
        %866 = vmatprep.mubr.bf16.mxu0 0
        %867 = vmatmul.mubr.bf16.gmra.mrb[0].mxu0 %v284
        %v868 = vpop.f32.mrb[0].mxu0
        %v869 = vadd.f32 %v378, %v868
        %v870 = vpop.f32.mrb[0].mxu0
        %v871 = vadd.f32 %v382, %v870
        %v872 = vpop.f32.mrb[0].mxu0
        %v873 = vpop.f32.mrb[0].mxu0
        %874 = vdwg.mxu0
        %v875 = vmax.f32 %v746, 0.0
        %v876 = vmax.f32 %v748, 0.0
        %v877 = vmax.f32 %v787, 0.0
        %v878 = vmax.f32 %v789, 0.0
        %v879 = vmax.f32 %v828, 0.0
        %v880 = vmax.f32 %v830, 0.0
        %v881 = vmax.f32 %v869, 0.0
        %v882 = vmax.f32 %v871, 0.0
        %v883 = vpack.c.bf16 %v875, %v875
        %v884 = vpack.c.bf16 %v876, %v876
        %v885 = vpack.c.bf16 %v877, %v877
        %v886 = vpack.c.bf16 %v878, %v878
        %v887 = vpack.c.bf16 %v879, %v879
        %v888 = vpack.c.bf16 %v880, %v880
        %v889 = vpack.c.bf16 %v881, %v881
        %v890 = vpack.c.bf16 %v882, %v882
        %v891 = vld [vmem:[#allocation8] sm:$0xf]
        %v892 = vld [vmem:[#allocation8 + $0x4] sm:$0xf]
        %v893 = vld [vmem:[#allocation8 + $0x8] sm:$0xf]
        %v894 = vld [vmem:[#allocation8 + $0xc] sm:$0xf]
        %v895 = vld [vmem:[#allocation8 + $0x10] sm:$0xf]
        %v896 = vld [vmem:[#allocation8 + $0x14] sm:$0xf]
        %v897 = vld [vmem:[#allocation8 + $0x18] sm:$0xf]
        %v898 = vld [vmem:[#allocation8 + $0x1c] sm:$0xf]
        %v899 = vld [vmem:[#allocation8 + $0x20] sm:$0xf]
        %v900 = vld [vmem:[#allocation8 + $0x24] sm:$0xf]
        %v901 = vld [vmem:[#allocation8 + $0x28] sm:$0xf]
        %v902 = vld [vmem:[#allocation8 + $0x2c] sm:$0xf]
        %v903 = vld [vmem:[#allocation8 + $0x30] sm:$0xf]
        %v904 = vld [vmem:[#allocation8 + $0x34] sm:$0xf]
        %v905 = vld [vmem:[#allocation8 + $0x38] sm:$0xf]
        %v906 = vld [vmem:[#allocation8 + $0x3c] sm:$0xf]
        %v907 = vld [vmem:[#allocation8 + $0x40] sm:$0xf]
        %v908 = vld [vmem:[#allocation8 + $0x44] sm:$0xf]
        %v909 = vld [vmem:[#allocation8 + $0x48] sm:$0xf]
        %v910 = vld [vmem:[#allocation8 + $0x4c] sm:$0xf]
        %v911 = vld [vmem:[#allocation8 + $0x50] sm:$0xf]
        %v912 = vld [vmem:[#allocation8 + $0x54] sm:$0xf]
        %v913 = vld [vmem:[#allocation8 + $0x58] sm:$0xf]
        %v914 = vld [vmem:[#allocation8 + $0x5c] sm:$0xf]
        %v915 = vld [vmem:[#allocation8 + $0x60] sm:$0xf]
        %v916 = vld [vmem:[#allocation8 + $0x64] sm:$0xf]
        %v917 = vld [vmem:[#allocation8 + $0x68] sm:$0xf]
        %v918 = vld [vmem:[#allocation8 + $0x6c] sm:$0xf]
        %v919 = vld [vmem:[#allocation8 + $0x70] sm:$0xf]
        %v920 = vld [vmem:[#allocation8 + $0x74] sm:$0xf]
        %v921 = vld [vmem:[#allocation8 + $0x78] sm:$0xf]
        %v922 = vld [vmem:[#allocation8 + $0x7c] sm:$0xf]
        %v923 = vld [vmem:[#allocation8 + $0x80] sm:$0xf]
        %v924 = vld [vmem:[#allocation8 + $0x84] sm:$0xf]
        %v925 = vld [vmem:[#allocation8 + $0x88] sm:$0xf]
        %v926 = vld [vmem:[#allocation8 + $0x8c] sm:$0xf]
        %v927 = vld [vmem:[#allocation8 + $0x90] sm:$0xf]
        %v928 = vld [vmem:[#allocation8 + $0x94] sm:$0xf]
        %v929 = vld [vmem:[#allocation8 + $0x98] sm:$0xf]
        %v930 = vld [vmem:[#allocation8 + $0x9c] sm:$0xf]
        %v931 = vld [vmem:[#allocation8 + $0xa0] sm:$0xf]
        %v932 = vld [vmem:[#allocation8 + $0xa4] sm:$0xf]
        %v933 = vld [vmem:[#allocation8 + $0xa8] sm:$0xf]
        %v934 = vld [vmem:[#allocation8 + $0xac] sm:$0xf]
        %v935 = vld [vmem:[#allocation8 + $0xb0] sm:$0xf]
        %v936 = vld [vmem:[#allocation8 + $0xb4] sm:$0xf]
        %v937 = vld [vmem:[#allocation8 + $0xb8] sm:$0xf]
        %v938 = vld [vmem:[#allocation8 + $0xbc] sm:$0xf]
        %v939 = vld [vmem:[#allocation8 + $0xc0] sm:$0xf]
        %v940 = vld [vmem:[#allocation8 + $0xc4] sm:$0xf]
        %v941 = vld [vmem:[#allocation8 + $0xc8] sm:$0xf]
        %v942 = vld [vmem:[#allocation8 + $0xcc] sm:$0xf]
        %v943 = vld [vmem:[#allocation8 + $0xd0] sm:$0xf]
        %v944 = vld [vmem:[#allocation8 + $0xd4] sm:$0xf]
        %v945 = vld [vmem:[#allocation8 + $0xd8] sm:$0xf]
        %v946 = vld [vmem:[#allocation8 + $0xdc] sm:$0xf]
        %v947 = vld [vmem:[#allocation8 + $0xe0] sm:$0xf]
        %v948 = vld [vmem:[#allocation8 + $0xe4] sm:$0xf]
        %v949 = vld [vmem:[#allocation8 + $0xe8] sm:$0xf]
        %v950 = vld [vmem:[#allocation8 + $0xec] sm:$0xf]
        %v951 = vld [vmem:[#allocation8 + $0xf0] sm:$0xf]
        %v952 = vld [vmem:[#allocation8 + $0xf4] sm:$0xf]
        %v953 = vld [vmem:[#allocation8 + $0xf8] sm:$0xf]
        %v954 = vld [vmem:[#allocation8 + $0xfc] sm:$0xf]
        %v955 = vld [vmem:[#allocation8 + $0x100] sm:$0xf]
        %v956 = vld [vmem:[#allocation8 + $0x104] sm:$0xf]
        %v957 = vld [vmem:[#allocation8 + $0x108] sm:$0xf]
        %v958 = vld [vmem:[#allocation8 + $0x10c] sm:$0xf]
        %v959 = vld [vmem:[#allocation8 + $0x110] sm:$0xf]
        %v960 = vld [vmem:[#allocation8 + $0x114] sm:$0xf]
        %v961 = vld [vmem:[#allocation8 + $0x118] sm:$0xf]
        %v962 = vld [vmem:[#allocation8 + $0x11c] sm:$0xf]
        %v963 = vld [vmem:[#allocation8 + $0x120] sm:$0xf]
        %v964 = vld [vmem:[#allocation8 + $0x124] sm:$0xf]
        %v965 = vld [vmem:[#allocation8 + $0x128] sm:$0xf]
        %v966 = vld [vmem:[#allocation8 + $0x12c] sm:$0xf]
        %v967 = vld [vmem:[#allocation8 + $0x130] sm:$0xf]
        %v968 = vld [vmem:[#allocation8 + $0x134] sm:$0xf]
        %v969 = vld [vmem:[#allocation8 + $0x138] sm:$0xf]
        %v970 = vld [vmem:[#allocation8 + $0x13c] sm:$0xf]
        %v971 = vld [vmem:[#allocation8 + $0x140] sm:$0xf]
        %v972 = vld [vmem:[#allocation8 + $0x144] sm:$0xf]
        %v973 = vld [vmem:[#allocation8 + $0x148] sm:$0xf]
        %v974 = vld [vmem:[#allocation8 + $0x14c] sm:$0xf]
        %v975 = vld [vmem:[#allocation8 + $0x150] sm:$0xf]
        %v976 = vld [vmem:[#allocation8 + $0x154] sm:$0xf]
        %v977 = vld [vmem:[#allocation8 + $0x158] sm:$0xf]
        %v978 = vld [vmem:[#allocation8 + $0x15c] sm:$0xf]
        %v979 = vld [vmem:[#allocation8 + $0x160] sm:$0xf]
        %v980 = vld [vmem:[#allocation8 + $0x164] sm:$0xf]
        %v981 = vld [vmem:[#allocation8 + $0x168] sm:$0xf]
        %v982 = vld [vmem:[#allocation8 + $0x16c] sm:$0xf]
        %v983 = vld [vmem:[#allocation8 + $0x170] sm:$0xf]
        %v984 = vld [vmem:[#allocation8 + $0x174] sm:$0xf]
        %v985 = vld [vmem:[#allocation8 + $0x178] sm:$0xf]
        %v986 = vld [vmem:[#allocation8 + $0x17c] sm:$0xf]
        %v987 = vld [vmem:[#allocation8 + $0x180] sm:$0xf]
        %v988 = vld [vmem:[#allocation8 + $0x184] sm:$0xf]
        %v989 = vld [vmem:[#allocation8 + $0x188] sm:$0xf]
        %v990 = vld [vmem:[#allocation8 + $0x18c] sm:$0xf]
        %v991 = vld [vmem:[#allocation8 + $0x190] sm:$0xf]
        %v992 = vld [vmem:[#allocation8 + $0x194] sm:$0xf]
        %v993 = vld [vmem:[#allocation8 + $0x198] sm:$0xf]
        %v994 = vld [vmem:[#allocation8 + $0x19c] sm:$0xf]
        %v995 = vld [vmem:[#allocation8 + $0x1a0] sm:$0xf]
        %v996 = vld [vmem:[#allocation8 + $0x1a4] sm:$0xf]
        %v997 = vld [vmem:[#allocation8 + $0x1a8] sm:$0xf]
        %v998 = vld [vmem:[#allocation8 + $0x1ac] sm:$0xf]
        %v999 = vld [vmem:[#allocation8 + $0x1b0] sm:$0xf]
        %v1000 = vld [vmem:[#allocation8 + $0x1b4] sm:$0xf]
        %v1001 = vld [vmem:[#allocation8 + $0x1b8] sm:$0xf]
        %v1002 = vld [vmem:[#allocation8 + $0x1bc] sm:$0xf]
        %v1003 = vld [vmem:[#allocation8 + $0x1c0] sm:$0xf]
        %v1004 = vld [vmem:[#allocation8 + $0x1c4] sm:$0xf]
        %v1005 = vld [vmem:[#allocation8 + $0x1c8] sm:$0xf]
        %v1006 = vld [vmem:[#allocation8 + $0x1cc] sm:$0xf]
        %v1007 = vld [vmem:[#allocation8 + $0x1d0] sm:$0xf]
        %v1008 = vld [vmem:[#allocation8 + $0x1d4] sm:$0xf]
        %v1009 = vld [vmem:[#allocation8 + $0x1d8] sm:$0xf]
        %v1010 = vld [vmem:[#allocation8 + $0x1dc] sm:$0xf]
        %v1011 = vld [vmem:[#allocation8 + $0x1e0] sm:$0xf]
        %v1012 = vld [vmem:[#allocation8 + $0x1e4] sm:$0xf]
        %v1013 = vld [vmem:[#allocation8 + $0x1e8] sm:$0xf]
        %v1014 = vld [vmem:[#allocation8 + $0x1ec] sm:$0xf]
        %v1015 = vld [vmem:[#allocation8 + $0x1f0] sm:$0xf]
        %v1016 = vld [vmem:[#allocation8 + $0x1f4] sm:$0xf]
        %v1017 = vld [vmem:[#allocation8 + $0x1f8] sm:$0xf]
        %v1018 = vld [vmem:[#allocation8 + $0x1fc] sm:$0xf]
        %v1019 = vld [vmem:[%s4] sm:$0x1]
        %v1021 = vlaneseq
        %v1022 = vshrl.u32 %v1021, 7
        %v1023 = vsub.s32 0, %v1022
        %v1024 = vrot.slane %v1019, %v1023
        %v1154 = vunpack.c.l.b16 %v891
        %v1155 = vunpack.c.l.b16 %v892
        %v1156 = vunpack.c.l.b16 %v893
        %v1157 = vunpack.c.l.b16 %v894
        %v1158 = vunpack.c.l.b16 %v895
        %v1159 = vunpack.c.l.b16 %v896
        %v1160 = vunpack.c.l.b16 %v897
        %v1161 = vunpack.c.l.b16 %v898
        %v1162 = vunpack.c.l.b16 %v899
        %v1163 = vunpack.c.l.b16 %v900
        %v1164 = vunpack.c.l.b16 %v901
        %v1165 = vunpack.c.l.b16 %v902
        %v1166 = vunpack.c.l.b16 %v903
        %v1167 = vunpack.c.l.b16 %v904
        %v1168 = vunpack.c.l.b16 %v905
        %v1169 = vunpack.c.l.b16 %v906
        %v1170 = vunpack.c.l.b16 %v907
        %v1171 = vunpack.c.l.b16 %v908
        %v1172 = vunpack.c.l.b16 %v909
        %v1173 = vunpack.c.l.b16 %v910
        %v1174 = vunpack.c.l.b16 %v911
        %v1175 = vunpack.c.l.b16 %v912
        %v1176 = vunpack.c.l.b16 %v913
        %v1177 = vunpack.c.l.b16 %v914
        %v1178 = vunpack.c.l.b16 %v915
        %v1179 = vunpack.c.l.b16 %v916
        %v1180 = vunpack.c.l.b16 %v917
        %v1181 = vunpack.c.l.b16 %v918
        %v1182 = vunpack.c.l.b16 %v919
        %v1183 = vunpack.c.l.b16 %v920
        %v1184 = vunpack.c.l.b16 %v921
        %v1185 = vunpack.c.l.b16 %v922
        %v1186 = vunpack.c.l.b16 %v923
        %v1187 = vunpack.c.l.b16 %v924
        %v1188 = vunpack.c.l.b16 %v925
        %v1189 = vunpack.c.l.b16 %v926
        %v1190 = vunpack.c.l.b16 %v927
        %v1191 = vunpack.c.l.b16 %v928
        %v1192 = vunpack.c.l.b16 %v929
        %v1193 = vunpack.c.l.b16 %v930
        %v1194 = vunpack.c.l.b16 %v931
        %v1195 = vunpack.c.l.b16 %v932
        %v1196 = vunpack.c.l.b16 %v933
        %v1197 = vunpack.c.l.b16 %v934
        %v1198 = vunpack.c.l.b16 %v935
        %v1199 = vunpack.c.l.b16 %v936
        %v1200 = vunpack.c.l.b16 %v937
        %v1201 = vunpack.c.l.b16 %v938
        %v1202 = vunpack.c.l.b16 %v939
        %v1203 = vunpack.c.l.b16 %v940
        %v1204 = vunpack.c.l.b16 %v941
        %v1205 = vunpack.c.l.b16 %v942
        %v1206 = vunpack.c.l.b16 %v943
        %v1207 = vunpack.c.l.b16 %v944
        %v1208 = vunpack.c.l.b16 %v945
        %v1209 = vunpack.c.l.b16 %v946
        %v1210 = vunpack.c.l.b16 %v947
        %v1211 = vunpack.c.l.b16 %v948
        %v1212 = vunpack.c.l.b16 %v949
        %v1213 = vunpack.c.l.b16 %v950
        %v1214 = vunpack.c.l.b16 %v951
        %v1215 = vunpack.c.l.b16 %v952
        %v1216 = vunpack.c.l.b16 %v953
        %v1217 = vunpack.c.l.b16 %v954
        %v1218 = vunpack.c.l.b16 %v955
        %v1219 = vunpack.c.l.b16 %v956
        %v1220 = vunpack.c.l.b16 %v957
        %v1221 = vunpack.c.l.b16 %v958
        %v1222 = vunpack.c.l.b16 %v959
        %v1223 = vunpack.c.l.b16 %v960
        %v1224 = vunpack.c.l.b16 %v961
        %v1225 = vunpack.c.l.b16 %v962
        %v1226 = vunpack.c.l.b16 %v963
        %v1227 = vunpack.c.l.b16 %v964
        %v1228 = vunpack.c.l.b16 %v965
        %v1229 = vunpack.c.l.b16 %v966
        %v1230 = vunpack.c.l.b16 %v967
        %v1231 = vunpack.c.l.b16 %v968
        %v1232 = vunpack.c.l.b16 %v969
        %v1233 = vunpack.c.l.b16 %v970
        %v1234 = vunpack.c.l.b16 %v971
        %v1235 = vunpack.c.l.b16 %v972
        %v1236 = vunpack.c.l.b16 %v973
        %v1237 = vunpack.c.l.b16 %v974
        %v1238 = vunpack.c.l.b16 %v975
        %v1239 = vunpack.c.l.b16 %v976
        %v1240 = vunpack.c.l.b16 %v977
        %v1241 = vunpack.c.l.b16 %v978
        %v1242 = vunpack.c.l.b16 %v979
        %v1243 = vunpack.c.l.b16 %v980
        %v1244 = vunpack.c.l.b16 %v981
        %v1245 = vunpack.c.l.b16 %v982
        %v1246 = vunpack.c.l.b16 %v983
        %v1247 = vunpack.c.l.b16 %v984
        %v1248 = vunpack.c.l.b16 %v985
        %v1249 = vunpack.c.l.b16 %v986
        %v1250 = vunpack.c.l.b16 %v987
        %v1251 = vunpack.c.l.b16 %v988
        %v1252 = vunpack.c.l.b16 %v989
        %v1253 = vunpack.c.l.b16 %v990
        %v1254 = vunpack.c.l.b16 %v991
        %v1255 = vunpack.c.l.b16 %v992
        %v1256 = vunpack.c.l.b16 %v993
        %v1257 = vunpack.c.l.b16 %v994
        %v1258 = vunpack.c.l.b16 %v995
        %v1259 = vunpack.c.l.b16 %v996
        %v1260 = vunpack.c.l.b16 %v997
        %v1261 = vunpack.c.l.b16 %v998
        %v1262 = vunpack.c.l.b16 %v999
        %v1263 = vunpack.c.l.b16 %v1000
        %v1264 = vunpack.c.l.b16 %v1001
        %v1265 = vunpack.c.l.b16 %v1002
        %v1266 = vunpack.c.l.b16 %v1003
        %v1267 = vunpack.c.l.b16 %v1004
        %v1268 = vunpack.c.l.b16 %v1005
        %v1269 = vunpack.c.l.b16 %v1006
        %v1270 = vunpack.c.l.b16 %v1007
        %v1271 = vunpack.c.l.b16 %v1008
        %v1272 = vunpack.c.l.b16 %v1009
        %v1273 = vunpack.c.l.b16 %v1010
        %v1274 = vunpack.c.l.b16 %v1011
        %v1275 = vunpack.c.l.b16 %v1012
        %v1276 = vunpack.c.l.b16 %v1013
        %v1277 = vunpack.c.l.b16 %v1014
        %v1278 = vunpack.c.l.b16 %v1015
        %v1279 = vunpack.c.l.b16 %v1016
        %v1280 = vunpack.c.l.b16 %v1017
        %v1281 = vunpack.c.l.b16 %v1018
        %v1282 = vpack.c.b16 %v1155, %v1154
        %v1283 = vpack.c.b16 %v1157, %v1156
        %v1284 = vpack.c.b16 %v1159, %v1158
        %v1285 = vpack.c.b16 %v1161, %v1160
        %v1286 = vpack.c.b16 %v1163, %v1162
        %v1287 = vpack.c.b16 %v1165, %v1164
        %v1288 = vpack.c.b16 %v1167, %v1166
        %v1289 = vpack.c.b16 %v1169, %v1168
        %v1290 = vpack.c.b16 %v1171, %v1170
        %v1291 = vpack.c.b16 %v1173, %v1172
        %v1292 = vpack.c.b16 %v1175, %v1174
        %v1293 = vpack.c.b16 %v1177, %v1176
        %v1294 = vpack.c.b16 %v1179, %v1178
        %v1295 = vpack.c.b16 %v1181, %v1180
        %v1296 = vpack.c.b16 %v1183, %v1182
        %v1297 = vpack.c.b16 %v1185, %v1184
        %v1298 = vpack.c.b16 %v1187, %v1186
        %v1299 = vpack.c.b16 %v1189, %v1188
        %v1300 = vpack.c.b16 %v1191, %v1190
        %v1301 = vpack.c.b16 %v1193, %v1192
        %v1302 = vpack.c.b16 %v1195, %v1194
        %v1303 = vpack.c.b16 %v1197, %v1196
        %v1304 = vpack.c.b16 %v1199, %v1198
        %v1305 = vpack.c.b16 %v1201, %v1200
        %v1306 = vpack.c.b16 %v1203, %v1202
        %v1307 = vpack.c.b16 %v1205, %v1204
        %v1308 = vpack.c.b16 %v1207, %v1206
        %v1309 = vpack.c.b16 %v1209, %v1208
        %v1310 = vpack.c.b16 %v1211, %v1210
        %v1311 = vpack.c.b16 %v1213, %v1212
        %v1312 = vpack.c.b16 %v1215, %v1214
        %v1313 = vpack.c.b16 %v1217, %v1216
        %v1314 = vpack.c.b16 %v1219, %v1218
        %v1315 = vpack.c.b16 %v1221, %v1220
        %v1316 = vpack.c.b16 %v1223, %v1222
        %v1317 = vpack.c.b16 %v1225, %v1224
        %v1318 = vpack.c.b16 %v1227, %v1226
        %v1319 = vpack.c.b16 %v1229, %v1228
        %v1320 = vpack.c.b16 %v1231, %v1230
        %v1321 = vpack.c.b16 %v1233, %v1232
        %v1322 = vpack.c.b16 %v1235, %v1234
        %v1323 = vpack.c.b16 %v1237, %v1236
        %v1324 = vpack.c.b16 %v1239, %v1238
        %v1325 = vpack.c.b16 %v1241, %v1240
        %v1326 = vpack.c.b16 %v1243, %v1242
        %v1327 = vpack.c.b16 %v1245, %v1244
        %v1328 = vpack.c.b16 %v1247, %v1246
        %v1329 = vpack.c.b16 %v1249, %v1248
        %v1330 = vpack.c.b16 %v1251, %v1250
        %v1331 = vpack.c.b16 %v1253, %v1252
        %v1332 = vpack.c.b16 %v1255, %v1254
        %v1333 = vpack.c.b16 %v1257, %v1256
        %v1334 = vpack.c.b16 %v1259, %v1258
        %v1335 = vpack.c.b16 %v1261, %v1260
        %v1336 = vpack.c.b16 %v1263, %v1262
        %v1337 = vpack.c.b16 %v1265, %v1264
        %v1338 = vpack.c.b16 %v1267, %v1266
        %v1339 = vpack.c.b16 %v1269, %v1268
        %v1340 = vpack.c.b16 %v1271, %v1270
        %v1341 = vpack.c.b16 %v1273, %v1272
        %v1342 = vpack.c.b16 %v1275, %v1274
        %v1343 = vpack.c.b16 %v1277, %v1276
        %v1344 = vpack.c.b16 %v1279, %v1278
        %v1345 = vpack.c.b16 %v1281, %v1280
        %1410 = vmatprep.subr.bf16.mxu0 0
        %1411 = vmatpush1.bf16.msra.mxu0 %v1282
        %1412 = vmatprep.subr.bf16.mxu0 0
        %1413 = vmatpush1.bf16.msra.mxu0 %v1283
        %1414 = vmatprep.subr.bf16.mxu0 0
        %1415 = vmatpush1.bf16.msra.mxu0 %v1284
        %1416 = vmatprep.subr.bf16.mxu0 0
        %1417 = vmatpush1.bf16.msra.mxu0 %v1285
        %1418 = vmatprep.subr.bf16.mxu0 0
        %1419 = vmatpush1.bf16.msra.mxu0 %v1286
        %1420 = vmatprep.subr.bf16.mxu0 0
        %1421 = vmatpush1.bf16.msra.mxu0 %v1287
        %1422 = vmatprep.subr.bf16.mxu0 0
        %1423 = vmatpush1.bf16.msra.mxu0 %v1288
        %1424 = vmatprep.subr.bf16.mxu0 0
        %1425 = vmatpush1.bf16.msra.mxu0 %v1289
        %1426 = vmatprep.subr.bf16.mxu0 0
        %1427 = vmatpush1.bf16.msra.mxu0 %v1290
        %1428 = vmatprep.subr.bf16.mxu0 0
        %1429 = vmatpush1.bf16.msra.mxu0 %v1291
        %1430 = vmatprep.subr.bf16.mxu0 0
        %1431 = vmatpush1.bf16.msra.mxu0 %v1292
        %1432 = vmatprep.subr.bf16.mxu0 0
        %1433 = vmatpush1.bf16.msra.mxu0 %v1293
        %1434 = vmatprep.subr.bf16.mxu0 0
        %1435 = vmatpush1.bf16.msra.mxu0 %v1294
        %1436 = vmatprep.subr.bf16.mxu0 0
        %1437 = vmatpush1.bf16.msra.mxu0 %v1295
        %1438 = vmatprep.subr.bf16.mxu0 0
        %1439 = vmatpush1.bf16.msra.mxu0 %v1296
        %1440 = vmatprep.subr.bf16.mxu0 0
        %1441 = vmatpush1.bf16.msra.mxu0 %v1297
        %1442 = vmatprep.mubr.bf16.mxu0 %v884
        %1443 = vmatmul.mubr.bf16.gmra.mrb[0].mxu0 %v883
        %v1444 = vpop.f32.mrb[0].mxu0
        %v1445 = vadd.f32 %v1024, %v1444
        %v1446 = vpop.f32.mrb[0].mxu0
        %v1447 = vpop.f32.mrb[0].mxu0
        %v1448 = vpop.f32.mrb[0].mxu0
        %1449 = vdwg.mxu0
        %1450 = vmatprep.subr.bf16.mxu0 0
        %1451 = vmatpush1.bf16.msra.mxu0 %v1298
        %1452 = vmatprep.subr.bf16.mxu0 0
        %1453 = vmatpush1.bf16.msra.mxu0 %v1299
        %1454 = vmatprep.subr.bf16.mxu0 0
        %1455 = vmatpush1.bf16.msra.mxu0 %v1300
        %1456 = vmatprep.subr.bf16.mxu0 0
        %1457 = vmatpush1.bf16.msra.mxu0 %v1301
        %1458 = vmatprep.subr.bf16.mxu0 0
        %1459 = vmatpush1.bf16.msra.mxu0 %v1302
        %1460 = vmatprep.subr.bf16.mxu0 0
        %1461 = vmatpush1.bf16.msra.mxu0 %v1303
        %1462 = vmatprep.subr.bf16.mxu0 0
        %1463 = vmatpush1.bf16.msra.mxu0 %v1304
        %1464 = vmatprep.subr.bf16.mxu0 0
        %1465 = vmatpush1.bf16.msra.mxu0 %v1305
        %1466 = vmatprep.subr.bf16.mxu0 0
        %1467 = vmatpush1.bf16.msra.mxu0 %v1306
        %1468 = vmatprep.subr.bf16.mxu0 0
        %1469 = vmatpush1.bf16.msra.mxu0 %v1307
        %1470 = vmatprep.subr.bf16.mxu0 0
        %1471 = vmatpush1.bf16.msra.mxu0 %v1308
        %1472 = vmatprep.subr.bf16.mxu0 0
        %1473 = vmatpush1.bf16.msra.mxu0 %v1309
        %1474 = vmatprep.subr.bf16.mxu0 0
        %1475 = vmatpush1.bf16.msra.mxu0 %v1310
        %1476 = vmatprep.subr.bf16.mxu0 0
        %1477 = vmatpush1.bf16.msra.mxu0 %v1311
        %1478 = vmatprep.subr.bf16.mxu0 0
        %1479 = vmatpush1.bf16.msra.mxu0 %v1312
        %1480 = vmatprep.subr.bf16.mxu0 0
        %1481 = vmatpush1.bf16.msra.mxu0 %v1313
        %1482 = vmatprep.mubr.bf16.mxu0 %v886
        %1483 = vmatmul.mubr.bf16.gmra.mrb[0].mxu0 %v885
        %v1484 = vpop.f32.mrb[0].mxu0
        %v1485 = vadd.f32 %v1445, %v1484
        %v1486 = vpop.f32.mrb[0].mxu0
        %v1487 = vpop.f32.mrb[0].mxu0
        %v1488 = vpop.f32.mrb[0].mxu0
        %1489 = vdwg.mxu0
        %1490 = vmatprep.subr.bf16.mxu0 0
        %1491 = vmatpush1.bf16.msra.mxu0 %v1314
        %1492 = vmatprep.subr.bf16.mxu0 0
        %1493 = vmatpush1.bf16.msra.mxu0 %v1315
        %1494 = vmatprep.subr.bf16.mxu0 0
        %1495 = vmatpush1.bf16.msra.mxu0 %v1316
        %1496 = vmatprep.subr.bf16.mxu0 0
        %1497 = vmatpush1.bf16.msra.mxu0 %v1317
        %1498 = vmatprep.subr.bf16.mxu0 0
        %1499 = vmatpush1.bf16.msra.mxu0 %v1318
        %1500 = vmatprep.subr.bf16.mxu0 0
        %1501 = vmatpush1.bf16.msra.mxu0 %v1319
        %1502 = vmatprep.subr.bf16.mxu0 0
        %1503 = vmatpush1.bf16.msra.mxu0 %v1320
        %1504 = vmatprep.subr.bf16.mxu0 0
        %1505 = vmatpush1.bf16.msra.mxu0 %v1321
        %1506 = vmatprep.subr.bf16.mxu0 0
        %1507 = vmatpush1.bf16.msra.mxu0 %v1322
        %1508 = vmatprep.subr.bf16.mxu0 0
        %1509 = vmatpush1.bf16.msra.mxu0 %v1323
        %1510 = vmatprep.subr.bf16.mxu0 0
        %1511 = vmatpush1.bf16.msra.mxu0 %v1324
        %1512 = vmatprep.subr.bf16.mxu0 0
        %1513 = vmatpush1.bf16.msra.mxu0 %v1325
        %1514 = vmatprep.subr.bf16.mxu0 0
        %1515 = vmatpush1.bf16.msra.mxu0 %v1326
        %1516 = vmatprep.subr.bf16.mxu0 0
        %1517 = vmatpush1.bf16.msra.mxu0 %v1327
        %1518 = vmatprep.subr.bf16.mxu0 0
        %1519 = vmatpush1.bf16.msra.mxu0 %v1328
        %1520 = vmatprep.subr.bf16.mxu0 0
        %1521 = vmatpush1.bf16.msra.mxu0 %v1329
        %1522 = vmatprep.mubr.bf16.mxu0 %v888
        %1523 = vmatmul.mubr.bf16.gmra.mrb[0].mxu0 %v887
        %v1524 = vpop.f32.mrb[0].mxu0
        %v1525 = vadd.f32 %v1485, %v1524
        %v1526 = vpop.f32.mrb[0].mxu0
        %v1527 = vpop.f32.mrb[0].mxu0
        %v1528 = vpop.f32.mrb[0].mxu0
        %1529 = vdwg.mxu0
        %1530 = vmatprep.subr.bf16.mxu0 0
        %1531 = vmatpush1.bf16.msra.mxu0 %v1330
        %1532 = vmatprep.subr.bf16.mxu0 0
        %1533 = vmatpush1.bf16.msra.mxu0 %v1331
        %1534 = vmatprep.subr.bf16.mxu0 0
        %1535 = vmatpush1.bf16.msra.mxu0 %v1332
        %1536 = vmatprep.subr.bf16.mxu0 0
        %1537 = vmatpush1.bf16.msra.mxu0 %v1333
        %1538 = vmatprep.subr.bf16.mxu0 0
        %1539 = vmatpush1.bf16.msra.mxu0 %v1334
        %1540 = vmatprep.subr.bf16.mxu0 0
        %1541 = vmatpush1.bf16.msra.mxu0 %v1335
        %1542 = vmatprep.subr.bf16.mxu0 0
        %1543 = vmatpush1.bf16.msra.mxu0 %v1336
        %1544 = vmatprep.subr.bf16.mxu0 0
        %1545 = vmatpush1.bf16.msra.mxu0 %v1337
        %1546 = vmatprep.subr.bf16.mxu0 0
        %1547 = vmatpush1.bf16.msra.mxu0 %v1338
        %1548 = vmatprep.subr.bf16.mxu0 0
        %1549 = vmatpush1.bf16.msra.mxu0 %v1339
        %1550 = vmatprep.subr.bf16.mxu0 0
        %1551 = vmatpush1.bf16.msra.mxu0 %v1340
        %1552 = vmatprep.subr.bf16.mxu0 0
        %1553 = vmatpush1.bf16.msra.mxu0 %v1341
        %1554 = vmatprep.subr.bf16.mxu0 0
        %1555 = vmatpush1.bf16.msra.mxu0 %v1342
        %1556 = vmatprep.subr.bf16.mxu0 0
        %1557 = vmatpush1.bf16.msra.mxu0 %v1343
        %1558 = vmatprep.subr.bf16.mxu0 0
        %1559 = vmatpush1.bf16.msra.mxu0 %v1344
        %1560 = vmatprep.subr.bf16.mxu0 0
        %1561 = vmatpush1.bf16.msra.mxu0 %v1345
        %1562 = vmatprep.mubr.bf16.mxu0 %v890
        %1563 = vmatmul.mubr.bf16.gmra.mrb[0].mxu0 %v889
        %v1564 = vpop.f32.mrb[0].mxu0
        %v1565 = vadd.f32 %v1525, %v1564
        %v1566 = vpop.f32.mrb[0].mxu0
        %v1567 = vpop.f32.mrb[0].mxu0
        %v1568 = vpop.f32.mrb[0].mxu0
        %1569 = vdwg.mxu0
        %1570 = vst [vmem:[%s281] sm:$0xff] %v1565
        %s1571 = sand.u32 %s142, 1
        %s1572 = scalar_lea.sflag [#allocation4], %s1571
        %s1573 = sand.u32 %s142, 1
        %s1574 = smul.addr %s1573, 8
        %s1575 = scalar_lea.vmem [#allocation10], %s1574
        // Predicated region
        $region57: #{tpu_custom_call.1} parent=39 // pred_check
          %p1576 = pneg %p152
        $region58: #{tpu_custom_call.1} parent=39 // pred_check_branch
          %1578 = sbr.rel (%p1576) target = $region60
        $region59: #{tpu_custom_call.1} parent=39 // pred_region
          %s1580 = ssub.s32 128, 128
          %1581 = vsyncadd %s1572, %s1580
          %s1582 = smul.addr %s24, 128
          %s1583 = scalar_lea.hbm %s5, %s1582
          %s1585 = sshll.u32 %s1575, 4
          %s1586 = int_to_ptr.vmem [resolvable:$true] %s1585
          %1588 = dma.vmem_to_hbm [thread:$0]  %s1586, 128, %s1583, %s1572
        $region60: #{tpu_custom_call.1} parent=39 // pred_fallthru
          _
      $region40: #{tpu_custom_call.1} parent=5 // pred_fallthru
        _
      %p1589 = scmp.le.s32.totalorder 2, %s19
      // Predicated region
      $region61: #{tpu_custom_call.1} parent=5 // pred_check
        %p1590 = pneg %p1589
      $region62: #{tpu_custom_call.1} parent=5 // pred_check_branch
        %1592 = sbr.rel (%p1590) target = $region64
      $region63: #{tpu_custom_call.1} parent=5 // pred_region
        %s1593 = ssub.s32 %s19, 2
        // Predicated region
        $region65: #{tpu_custom_call.1} parent=63 // pred_check
          %p1594 = pneg %p158
        $region66: #{tpu_custom_call.1} parent=63 // pred_check_branch
          %1596 = sbr.rel (%p1594) target = $region68
        $region67: #{tpu_custom_call.1} parent=63 // pred_region
          %s1597 = sand.u32 %s143, 1
          %s1598 = scalar_lea.sflag [#allocation4], %s1597
          %s1599 = sand.u32 %s143, 1
          %s1600 = smul.addr %s1599, 8
          %s1601 = scalar_lea.vmem [#allocation10], %s1600
          %1602 = dma.done %s1598, 128
        $region68: #{tpu_custom_call.1} parent=63 // pred_fallthru
          _
      $region64: #{tpu_custom_call.1} parent=5 // pred_fallthru
        _
    $region6: #{tpu_custom_call.1} parent=1 // loop_footer
      %s23 = sadd.s32 1, %s19
    $region7: #{tpu_custom_call.1} parent=1 // loop_footer_branch
      %18 = sbr.rel target = $region3
    $region8: #{tpu_custom_call.1} parent=1 // loop_exit
      _
    %1603 = vsyncpa [#allocation3], 1
    %s1604 = scalar_lea.sflag [#allocation3], 1
    %1605 = vsyncpa %s1604, 1
    %1606 = vsyncpa [#allocation6], 1
    %1607 = vsyncpa [#allocation9], 1
    %1608 = vsyncpa [#allocation4], 1
    %s1609 = scalar_lea.sflag [#allocation4], 1
    %1610 = vsyncpa %s1609, 1

// kernel: tpu_custom_call.1
$region0: #{tpu_custom_call.1}
  #allocation0 [shape = 'u32[]', space=smem, size = 0x4, offset = 0x4, fixed_abs, tag = 'smem constant byte address 0x4 - core index']
  #allocation1 [shape = 'u32[144,128]{1,0:T(1,128)}', space=vmem, size = 0x12000, scoped, tag = 'internal scratch']
  #allocation2 [shape = 'f32[8,128]{1,0:T(8,128)}', space=vmem, size = 0x1000, scoped, tag = 'scratch operand']
  %s0 = inlined_call_operand.hbm [shape: f32[16,128], index: 0, kind: input, shape index: {}]
  %s1 = inlined_call_operand.hbm [shape: bf16[128,1024], index: 1, kind: input, shape index: {}]
  %s2 = inlined_call_operand.hbm [shape: f32[1,1024], index: 2, kind: input, shape index: {}]
  %s3 = inlined_call_operand.hbm [shape: bf16[1024,128], index: 3, kind: input, shape index: {}]
  %s4 = inlined_call_operand.vmem [shape: f32[1,128], index: 4, kind: input, shape index: {}]
  %s5 = inlined_call_operand.hbm [shape: f32[16,128], index: 5, kind: output, shape index: {}]
  %s6 = sld [smem:[#allocation0]]
  $region77: #{tpu_custom_call.1} parent=0
    _
  %s8 = ssub.s32 1, %s6
  %s9 = scalar_select 0, %s8, %s6
  $region1: #{tpu_custom_call.1} parent=0
    #allocation3 [shape = 'u8[8192]{0}', space=vmem, size = 0x2000, scoped, tag = 'input window, operand 0']
    #allocation4 [shape = 's32[2]{0}', space=sflag, size = 0x8, scoped, tag = 'scoped memory for tpu_custom_call.1']
    #allocation5 [shape = 's32[2]{0}', space=sflag, size = 0x8, scoped, tag = 'scoped memory for tpu_custom_call.1']
    #allocation6 [shape = 'u8[262144]{0}', space=vmem, size = 0x40000, scoped, tag = 'input window, operand 1, single buffered']
    #allocation7 [shape = 's32[1]{0}', space=sflag, size = 0x4, scoped, tag = 'scoped memory for tpu_custom_call.1']
    #allocation8 [shape = 'u8[4096]{0}', space=vmem, size = 0x1000, scoped, tag = 'input window, operand 2, single buffered']
    #allocation9 [shape = 'u8[262144]{0}', space=vmem, size = 0x40000, scoped, tag = 'input window, operand 3, single buffered']
    #allocation10 [shape = 's32[1]{0}', space=sflag, size = 0x4, scoped, tag = 'scoped memory for tpu_custom_call.1']
    #allocation11 [shape = 'u8[8192]{0}', space=vmem, size = 0x2000, scoped, tag = 'output window, operand 0']
    %10 = vsyncpa [#allocation4], 0
    %s11 = scalar_lea.sflag [#allocation4], 1
    %12 = vsyncpa %s11, 0
    %13 = vsyncpa [#allocation7], 0
    %14 = vsyncpa [#allocation10], 0
    %15 = vsyncpa [#allocation5], 0
    %s16 = scalar_lea.sflag [#allocation5], 1
    %17 = vsyncpa %s16, 0
    loop: start=0, step=1, limit=4
    $region2: #{tpu_custom_call.1} parent=1 // loop_pre_header
      _
    $region3: #{tpu_custom_call.1} parent=1 // loop_header
      %s19 = sphi 0, %s23
      %p20 = scmp.ge.s32.totalorder %s19, 4
      %s26 = sphi 0, %s38
      %s27 = sphi 0, %s34
      %s28 = sphi 0, %s26
      %s29 = sphi 0, %s27
      %s30 = sphi 0, %s28
      %s31 = sphi 0, %s29
      %s41 = sphi 0, %s43
      %s44 = sphi 0, %s41
      %s45 = sphi 0, %s44
      %s61 = sphi 0, %s45
      %s67 = sphi 0, %s69
      %s70 = sphi 0, %s67
      %s71 = sphi 0, %s70
      %s87 = sphi 0, %s71
      %s93 = sphi 0, %s95
      %s96 = sphi 0, %s93
      %s97 = sphi 0, %s96
      %s113 = sphi 0, %s97
      %s119 = sphi 0, %s121
      %s122 = sphi 0, %s119
      %s123 = sphi 0, %s122
      %s139 = sphi 0, %s123
      %s143 = sphi 0, %s143
      %s145 = sphi 0, %s143
      %s146 = sphi 0, %s145
      %s160 = sphi 0, %s146
      %s166 = sphi 0, %s168
      %s169 = sphi 0, %s166
      %s170 = sphi 0, %s169
      %s186 = sphi 0, %s170
    $region4: #{tpu_custom_call.1} parent=1 // loop_header_branch
      %22 = sbr.rel (%p20) target = $region8
    $region5: #{tpu_custom_call.1} parent=1 // loop_body
      %s24 = ssub.s32 %s19, 1
      %s25 = ssub.s32 %s19, 2
      %s32 = sadd.s32 1, %s27
      %p33 = scmp.ge.s32.totalorder %s32, 1
      %s34 = scalar_select %p33, 0, %s32
      %s35 = sadd.s32 1, %s26
      %s36 = scalar_select %p33, %s35, %s26
      %p37 = scmp.ge.s32.totalorder %s36, 2
      %s38 = scalar_select %p37, 0, %s36
      %s39 = ssub.s32 %s26, %s38
      %p40 = scmp.eq.s32.totalorder %s39, 0
      %s42 = sadd.s32 %s41, 1
      %s43 = scalar_select %p40, %s41, %s42
      %p46 = pneg %p40
      %p47 = scmp.eq.s32.totalorder %s19, 1
      %p48 = por %p46, %p47
      %p49 = scmp.ne.s32.totalorder %s41, %s44
      %p50 = scmp.eq.s32.totalorder %s19, 0
      %p51 = por %p49, %p50
      %p52 = scmp.ne.s32.totalorder %s41, %s44
      %p53 = scmp.eq.s32.totalorder %s24, 1
      %p54 = por %p52, %p53
      %p55 = scmp.ne.s32.totalorder %s44, %s45
      %p56 = scmp.eq.s32.totalorder %s24, 0
      %p57 = por %p55, %p56
      %p58 = scmp.ne.s32.totalorder %s44, %s45
      %p59 = scmp.eq.s32.totalorder %s25, 1
      %p60 = por %p58, %p59
      %p62 = scmp.ne.s32.totalorder %s45, %s61
      %p63 = scmp.eq.s32.totalorder %s25, 0
      %p64 = por %p62, %p63
      %s65 = ssub.s32 %s27, %s34
      %p66 = scmp.eq.s32.totalorder %s65, 0
      %s68 = sadd.s32 %s67, 1
      %s69 = scalar_select %p66, %s67, %s68
      %p72 = pneg %p66
      %p73 = scmp.eq.s32.totalorder %s19, 1
      %p74 = por %p72, %p73
      %p75 = scmp.ne.s32.totalorder %s67, %s70
      %p76 = scmp.eq.s32.totalorder %s19, 0
      %p77 = por %p75, %p76
      %p78 = scmp.ne.s32.totalorder %s67, %s70
      %p79 = scmp.eq.s32.totalorder %s24, 1
      %p80 = por %p78, %p79
      %p81 = scmp.ne.s32.totalorder %s70, %s71
      %p82 = scmp.eq.s32.totalorder %s24, 0
      %p83 = por %p81, %p82
      %p84 = scmp.ne.s32.totalorder %s70, %s71
      %p85 = scmp.eq.s32.totalorder %s25, 1
      %p86 = por %p84, %p85
      %p88 = scmp.ne.s32.totalorder %s71, %s87
      %p89 = scmp.eq.s32.totalorder %s25, 0
      %p90 = por %p88, %p89
      %s91 = ssub.s32 %s27, %s34
      %p92 = scmp.eq.s32.totalorder %s91, 0
      %s94 = sadd.s32 %s93, 1
      %s95 = scalar_select %p92, %s93, %s94
      %p98 = pneg %p92
      %p99 = scmp.eq.s32.totalorder %s19, 1
      %p100 = por %p98, %p99
      %p101 = scmp.ne.s32.totalorder %s93, %s96
      %p102 = scmp.eq.s32.totalorder %s19, 0
      %p103 = por %p101, %p102
      %p104 = scmp.ne.s32.totalorder %s93, %s96
      %p105 = scmp.eq.s32.totalorder %s24, 1
      %p106 = por %p104, %p105
      %p107 = scmp.ne.s32.totalorder %s96, %s97
      %p108 = scmp.eq.s32.totalorder %s24, 0
      %p109 = por %p107, %p108
      %p110 = scmp.ne.s32.totalorder %s96, %s97
      %p111 = scmp.eq.s32.totalorder %s25, 1
      %p112 = por %p110, %p111
      %p114 = scmp.ne.s32.totalorder %s97, %s113
      %p115 = scmp.eq.s32.totalorder %s25, 0
      %p116 = por %p114, %p115
      %s117 = ssub.s32 %s27, %s34
      %p118 = scmp.eq.s32.totalorder %s117, 0
      %s120 = sadd.s32 %s119, 1
      %s121 = scalar_select %p118, %s119, %s120
      %p124 = pneg %p118
      %p125 = scmp.eq.s32.totalorder %s19, 1
      %p126 = por %p124, %p125
      %p127 = scmp.ne.s32.totalorder %s119, %s122
      %p128 = scmp.eq.s32.totalorder %s19, 0
      %p129 = por %p127, %p128
      %p130 = scmp.ne.s32.totalorder %s119, %s122
      %p131 = scmp.eq.s32.totalorder %s24, 1
      %p132 = por %p130, %p131
      %p133 = scmp.ne.s32.totalorder %s122, %s123
      %p134 = scmp.eq.s32.totalorder %s24, 0
      %p135 = por %p133, %p134
      %p136 = scmp.ne.s32.totalorder %s122, %s123
      %p137 = scmp.eq.s32.totalorder %s25, 1
      %p138 = por %p136, %p137
      %p140 = scmp.ne.s32.totalorder %s123, %s139
      %p141 = scmp.eq.s32.totalorder %s25, 0
      %p142 = por %p140, %p141
      %s144 = sadd.s32 %s143, 1
      %p147 = scmp.eq.s32.totalorder %s19, 1
      %p148 = scmp.ne.s32.totalorder %s143, %s145
      %p149 = scmp.eq.s32.totalorder %s19, 0
      %p150 = por %p148, %p149
      %p151 = scmp.ne.s32.totalorder %s143, %s145
      %p152 = scmp.eq.s32.totalorder %s24, 1
      %p153 = por %p151, %p152
      %p154 = scmp.ne.s32.totalorder %s145, %s146
      %p155 = scmp.eq.s32.totalorder %s24, 0
      %p156 = por %p154, %p155
      %p157 = scmp.ne.s32.totalorder %s145, %s146
      %p158 = scmp.eq.s32.totalorder %s25, 1
      %p159 = por %p157, %p158
      %p161 = scmp.ne.s32.totalorder %s146, %s160
      %p162 = scmp.eq.s32.totalorder %s25, 0
      %p163 = por %p161, %p162
      %s164 = ssub.s32 %s26, %s38
      %p165 = scmp.eq.s32.totalorder %s164, 0
      %s167 = sadd.s32 %s166, 1
      %s168 = scalar_select %p165, %s166, %s167
      %p171 = pneg %p165
      %p172 = scmp.eq.s32.totalorder %s19, 1
      %p173 = por %p171, %p172
      %p174 = scmp.ne.s32.totalorder %s166, %s169
      %p175 = scmp.eq.s32.totalorder %s19, 0
      %p176 = por %p174, %p175
      %p177 = scmp.ne.s32.totalorder %s166, %s169
      %p178 = scmp.eq.s32.totalorder %s24, 1
      %p179 = por %p177, %p178
      %p180 = scmp.ne.s32.totalorder %s169, %s170
      %p181 = scmp.eq.s32.totalorder %s24, 0
      %p182 = por %p180, %p181
      %p183 = scmp.ne.s32.totalorder %s169, %s170
      %p184 = scmp.eq.s32.totalorder %s25, 1
      %p185 = por %p183, %p184
      %p187 = scmp.ne.s32.totalorder %s170, %s186
      %p188 = scmp.eq.s32.totalorder %s25, 0
      %p189 = por %p187, %p188
      %p190 = scmp.le.s32.totalorder 1, %s19
      %p191 = scmp.lt.s32.totalorder %s19, 3
      %p192 = pnand %p190, %p191
      %p193 = pneg %p192
      // Predicated region
      $region9: #{tpu_custom_call.1} parent=5 // pred_check
        _
      $region10: #{tpu_custom_call.1} parent=5 // pred_check_branch
        %195 = sbr.rel (%p192) target = $region12
      $region11: #{tpu_custom_call.1} parent=5 // pred_region
        %s196 = ssub.s32 %s19, 1
        // Predicated region
        $region13: #{tpu_custom_call.1} parent=11 // pred_check
          %p197 = pneg %p83
        $region14: #{tpu_custom_call.1} parent=11 // pred_check_branch
          %199 = sbr.rel (%p197) target = $region16
        $region15: #{tpu_custom_call.1} parent=11 // pred_region
          %s200 = smul.u32 8, %s29
          %s202 = ssub.s32 8192, 8192
          %203 = vsyncadd [#allocation7], %s202
          %s204 = smul.addr %s200, 64
          %s205 = scalar_lea.hbm %s1, %s204
          %s206 = sshll.u32 [#allocation6], 4
          %s207 = int_to_ptr.vmem [resolvable:$true] %s206
          %212 = dma.hbm_to_vmem [thread:$0]  %s205, 8192, %s207, [#allocation7], 512, 512, 32
        $region16: #{tpu_custom_call.1} parent=11 // pred_fallthru
          _
        // Predicated region
        $region17: #{tpu_custom_call.1} parent=11 // pred_check
          %p213 = pneg %p109
        $region18: #{tpu_custom_call.1} parent=11 // pred_check_branch
          %215 = sbr.rel (%p213) target = $region20
        $region19: #{tpu_custom_call.1} parent=11 // pred_region
          %s216 = smul.u32 8, %s29
          %s218 = ssub.s32 128, 128
          %219 = vsyncadd [#allocation7], %s218
          %s220 = smul.addr %s216, 16
          %s221 = scalar_lea.hbm %s2, %s220
          %s223 = sshll.u32 [#allocation8], 4
          %s224 = int_to_ptr.vmem [resolvable:$true] %s223
          %226 = dma.hbm_to_vmem [thread:$0]  %s221, 128, %s224, [#allocation7]
        $region20: #{tpu_custom_call.1} parent=11 // pred_fallthru
          _
        // Predicated region
        $region21: #{tpu_custom_call.1} parent=11 // pred_check
          %p227 = pneg %p135
        $region22: #{tpu_custom_call.1} parent=11 // pred_check_branch
          %229 = sbr.rel (%p227) target = $region24
        $region23: #{tpu_custom_call.1} parent=11 // pred_region
          %s230 = smul.u32 128, %s29
          %s232 = ssub.s32 8192, 8192
          %233 = vsyncadd [#allocation10], %s232
          %s234 = smul.addr %s230, 64
          %s235 = scalar_lea.hbm %s3, %s234
          %s236 = sshll.u32 [#allocation9], 4
          %s237 = int_to_ptr.vmem [resolvable:$true] %s236
          %242 = dma.hbm_to_vmem [thread:$0]  %s235, 8192, %s237, [#allocation10], 64, 64, 4
        $region24: #{tpu_custom_call.1} parent=11 // pred_fallthru
          _
        // Predicated region
        $region25: #{tpu_custom_call.1} parent=11 // pred_check
          %p243 = pneg %p156
        $region26: #{tpu_custom_call.1} parent=11 // pred_check_branch
          %245 = sbr.rel (%p243) target = $region28
        $region27: #{tpu_custom_call.1} parent=11 // pred_region
          _
        $region28: #{tpu_custom_call.1} parent=11 // pred_fallthru
          _
      $region12: #{tpu_custom_call.1} parent=5 // pred_fallthru
        _
      %p246 = scmp.lt.s32.totalorder %s19, 2
      // Predicated region
      $region29: #{tpu_custom_call.1} parent=5 // pred_check
        %p247 = pneg %p246
      $region30: #{tpu_custom_call.1} parent=5 // pred_check_branch
        %249 = sbr.rel (%p247) target = $region32
      $region31: #{tpu_custom_call.1} parent=5 // pred_region
        // Predicated region
        $region33: #{tpu_custom_call.1} parent=31 // pred_check
          %p250 = pneg %p51
        $region34: #{tpu_custom_call.1} parent=31 // pred_check_branch
          %252 = sbr.rel (%p250) target = $region36
        $region35: #{tpu_custom_call.1} parent=31 // pred_region
          %s253 = sand.u32 %s41, 1
          %s254 = scalar_lea.sflag [#allocation4], %s253
          %s255 = sand.u32 %s41, 1
          %s256 = smul.addr %s255, 8
          %s257 = scalar_lea.vmem [#allocation3], %s256
          %s259 = ssub.s32 128, 128
          %260 = vsyncadd %s254, %s259
          %s261 = smul.addr %s26, 128
          %s262 = scalar_lea.hbm %s0, %s261
          %s264 = sshll.u32 %s257, 4
          %s265 = int_to_ptr.vmem [resolvable:$true] %s264
          %267 = dma.hbm_to_vmem [thread:$0]  %s262, 128, %s265, %s254
        $region36: #{tpu_custom_call.1} parent=31 // pred_fallthru
          _
      $region32: #{tpu_custom_call.1} parent=5 // pred_fallthru
        _
      %p268 = scmp.le.s32.totalorder 1, %s19
      %p269 = scmp.lt.s32.totalorder %s19, 3
      %p270 = pnand %p268, %p269
      %p271 = pneg %p270
      // Predicated region
      $region37: #{tpu_custom_call.1} parent=5 // pred_check
        _
      $region38: #{tpu_custom_call.1} parent=5 // pred_check_branch
        %273 = sbr.rel (%p270) target = $region40
      $region39: #{tpu_custom_call.1} parent=5 // pred_region
        %s274 = ssub.s32 %s19, 1
        %s275 = sand.u32 %s44, 1
        %s276 = scalar_lea.sflag [#allocation4], %s275
        %s277 = sand.u32 %s44, 1
        %s278 = smul.addr %s277, 8
        %s279 = scalar_lea.vmem [#allocation3], %s278
        // Predicated region
        $region41: #{tpu_custom_call.1} parent=39 // pred_check
          %p280 = pneg %p57
        $region42: #{tpu_custom_call.1} parent=39 // pred_check_branch
          %282 = sbr.rel (%p280) target = $region44
        $region43: #{tpu_custom_call.1} parent=39 // pred_region
          %283 = dma.done %s276, 128
        $region44: #{tpu_custom_call.1} parent=39 // pred_fallthru
          _
        // Predicated region
        $region45: #{tpu_custom_call.1} parent=39 // pred_check
          %p284 = pneg %p83
        $region46: #{tpu_custom_call.1} parent=39 // pred_check_branch
          %286 = sbr.rel (%p284) target = $region48
        $region47: #{tpu_custom_call.1} parent=39 // pred_region
          %287 = dma.done [#allocation7], 8192
        $region48: #{tpu_custom_call.1} parent=39 // pred_fallthru
          _
        // Predicated region
        $region49: #{tpu_custom_call.1} parent=39 // pred_check
          %p288 = pneg %p109
        $region50: #{tpu_custom_call.1} parent=39 // pred_check_branch
          %290 = sbr.rel (%p288) target = $region52
        $region51: #{tpu_custom_call.1} parent=39 // pred_region
          %291 = dma.done [#allocation7], 128
        $region52: #{tpu_custom_call.1} parent=39 // pred_fallthru
          _
        // Predicated region
        $region53: #{tpu_custom_call.1} parent=39 // pred_check
          %p292 = pneg %p135
        $region54: #{tpu_custom_call.1} parent=39 // pred_check_branch
          %294 = sbr.rel (%p292) target = $region56
        $region55: #{tpu_custom_call.1} parent=39 // pred_region
          %295 = dma.done [#allocation10], 8192
        $region56: #{tpu_custom_call.1} parent=39 // pred_fallthru
          _
        %s296 = sand.u32 %s44, 1
        %s297 = scalar_lea.sflag [#allocation4], %s296
        %s298 = sand.u32 %s44, 1
        %s299 = smul.addr %s298, 8
        %s300 = scalar_lea.vmem [#allocation3], %s299
        %p301 = pneg %p57
        %p302 = pneg %p54
        %p303 = pneg %p83
        %p304 = pneg %p80
        %p305 = pneg %p109
        %p306 = pneg %p106
        %p307 = pneg %p135
        %p308 = pneg %p132
        %p309 = pneg %p156
        %p310 = pneg %p153
        %p311 = pneg %p182
        %p312 = pneg %p179
        %s313 = sand.u32 %s169, 1
        %s314 = scalar_lea.sflag [#allocation5], %s313
        %s315 = sand.u32 %s169, 1
        %s316 = smul.addr %s315, 8
        %s317 = scalar_lea.vmem [#allocation11], %s316
        %s318 = smul.u32 8, %s29
        %s319 = smul.u32 8, %s29
        %s320 = smul.u32 128, %s29
        %p322 = scmp.eq.s32.totalorder %s29, 0
        // Predicated region
        $region57: #{tpu_custom_call.1} parent=39 // pred_check
          %p323 = pneg %p322
        $region58: #{tpu_custom_call.1} parent=39 // pred_check_branch
          %325 = sbr.rel (%p323) target = $region60
        $region59: #{tpu_custom_call.1} parent=39 // pred_region
          %326 = vst [vmem:[#allocation2] sm:$0xff] 0.0
        $region60: #{tpu_custom_call.1} parent=39 // pred_fallthru
          _
        %v327 = vld [vmem:[%s279] sm:$0xff]
        %v328 = vpack.c.bf16 %v327, %v327
        %v329 = vld [vmem:[#allocation6] sm:$0xff]
        %v330 = vld [vmem:[#allocation6 + $0x8] sm:$0xff]
        %v331 = vld [vmem:[#allocation6 + $0x10] sm:$0xff]
        %v332 = vld [vmem:[#allocation6 + $0x18] sm:$0xff]
        %v333 = vld [vmem:[#allocation6 + $0x20] sm:$0xff]
        %v334 = vld [vmem:[#allocation6 + $0x28] sm:$0xff]
        %v335 = vld [vmem:[#allocation6 + $0x30] sm:$0xff]
        %v336 = vld [vmem:[#allocation6 + $0x38] sm:$0xff]
        %v337 = vld [vmem:[#allocation6 + $0x40] sm:$0xff]
        %v338 = vld [vmem:[#allocation6 + $0x48] sm:$0xff]
        %v339 = vld [vmem:[#allocation6 + $0x50] sm:$0xff]
        %v340 = vld [vmem:[#allocation6 + $0x58] sm:$0xff]
        %v341 = vld [vmem:[#allocation6 + $0x60] sm:$0xff]
        %v342 = vld [vmem:[#allocation6 + $0x68] sm:$0xff]
        %v343 = vld [vmem:[#allocation6 + $0x70] sm:$0xff]
        %v344 = vld [vmem:[#allocation6 + $0x78] sm:$0xff]
        %v345 = vld [vmem:[#allocation6 + $0x80] sm:$0xff]
        %v346 = vld [vmem:[#allocation6 + $0x88] sm:$0xff]
        %v347 = vld [vmem:[#allocation6 + $0x90] sm:$0xff]
        %v348 = vld [vmem:[#allocation6 + $0x98] sm:$0xff]
        %v349 = vld [vmem:[#allocation6 + $0xa0] sm:$0xff]
        %v350 = vld [vmem:[#allocation6 + $0xa8] sm:$0xff]
        %v351 = vld [vmem:[#allocation6 + $0xb0] sm:$0xff]
        %v352 = vld [vmem:[#allocation6 + $0xb8] sm:$0xff]
        %v353 = vld [vmem:[#allocation6 + $0xc0] sm:$0xff]
        %v354 = vld [vmem:[#allocation6 + $0xc8] sm:$0xff]
        %v355 = vld [vmem:[#allocation6 + $0xd0] sm:$0xff]
        %v356 = vld [vmem:[#allocation6 + $0xd8] sm:$0xff]
        %v357 = vld [vmem:[#allocation6 + $0xe0] sm:$0xff]
        %v358 = vld [vmem:[#allocation6 + $0xe8] sm:$0xff]
        %v359 = vld [vmem:[#allocation6 + $0xf0] sm:$0xff]
        %v360 = vld [vmem:[#allocation6 + $0xf8] sm:$0xff]
        %v361 = vld [vmem:[#allocation6 + $0x100] sm:$0xff]
        %v362 = vld [vmem:[#allocation6 + $0x108] sm:$0xff]
        %v363 = vld [vmem:[#allocation6 + $0x110] sm:$0xff]
        %v364 = vld [vmem:[#allocation6 + $0x118] sm:$0xff]
        %v365 = vld [vmem:[#allocation6 + $0x120] sm:$0xff]
        %v366 = vld [vmem:[#allocation6 + $0x128] sm:$0xff]
        %v367 = vld [vmem:[#allocation6 + $0x130] sm:$0xff]
        %v368 = vld [vmem:[#allocation6 + $0x138] sm:$0xff]
        %v369 = vld [vmem:[#allocation6 + $0x140] sm:$0xff]
        %v370 = vld [vmem:[#allocation6 + $0x148] sm:$0xff]
        %v371 = vld [vmem:[#allocation6 + $0x150] sm:$0xff]
        %v372 = vld [vmem:[#allocation6 + $0x158] sm:$0xff]
        %v373 = vld [vmem:[#allocation6 + $0x160] sm:$0xff]
        %v374 = vld [vmem:[#allocation6 + $0x168] sm:$0xff]
        %v375 = vld [vmem:[#allocation6 + $0x170] sm:$0xff]
        %v376 = vld [vmem:[#allocation6 + $0x178] sm:$0xff]
        %v377 = vld [vmem:[#allocation6 + $0x180] sm:$0xff]
        %v378 = vld [vmem:[#allocation6 + $0x188] sm:$0xff]
        %v379 = vld [vmem:[#allocation6 + $0x190] sm:$0xff]
        %v380 = vld [vmem:[#allocation6 + $0x198] sm:$0xff]
        %v381 = vld [vmem:[#allocation6 + $0x1a0] sm:$0xff]
        %v382 = vld [vmem:[#allocation6 + $0x1a8] sm:$0xff]
        %v383 = vld [vmem:[#allocation6 + $0x1b0] sm:$0xff]
        %v384 = vld [vmem:[#allocation6 + $0x1b8] sm:$0xff]
        %v385 = vld [vmem:[#allocation6 + $0x1c0] sm:$0xff]
        %v386 = vld [vmem:[#allocation6 + $0x1c8] sm:$0xff]
        %v387 = vld [vmem:[#allocation6 + $0x1d0] sm:$0xff]
        %v388 = vld [vmem:[#allocation6 + $0x1d8] sm:$0xff]
        %v389 = vld [vmem:[#allocation6 + $0x1e0] sm:$0xff]
        %v390 = vld [vmem:[#allocation6 + $0x1e8] sm:$0xff]
        %v391 = vld [vmem:[#allocation6 + $0x1f0] sm:$0xff]
        %v392 = vld [vmem:[#allocation6 + $0x1f8] sm:$0xff]
        %v393 = vld [vmem:[#allocation8] sm:$0xff]
        %v395 = vlaneseq
        %v396 = vshrl.u32 %v395, 7
        %v397 = vsub.s32 0, %v396
        %v398 = vrot.slane %v393, %v397
        %v399 = vlaneseq
        %v400 = vshrl.u32 %v399, 7
        %v401 = vsub.s32 1, %v400
        %v402 = vrot.slane %v393, %v401
        %v403 = vlaneseq
        %v404 = vshrl.u32 %v403, 7
        %v405 = vsub.s32 2, %v404
        %v406 = vrot.slane %v393, %v405
        %v407 = vlaneseq
        %v408 = vshrl.u32 %v407, 7
        %v409 = vsub.s32 3, %v408
        %v410 = vrot.slane %v393, %v409
        %v411 = vlaneseq
        %v412 = vshrl.u32 %v411, 7
        %v413 = vsub.s32 4, %v412
        %v414 = vrot.slane %v393, %v413
        %v415 = vlaneseq
        %v416 = vshrl.u32 %v415, 7
        %v417 = vsub.s32 5, %v416
        %v418 = vrot.slane %v393, %v417
        %v419 = vlaneseq
        %v420 = vshrl.u32 %v419, 7
        %v421 = vsub.s32 6, %v420
        %v422 = vrot.slane %v393, %v421
        %v423 = vlaneseq
        %v424 = vshrl.u32 %v423, 7
        %v425 = vsub.s32 7, %v424
        %v426 = vrot.slane %v393, %v425
        %v499 = vunpack.c.l.b16 %v329
        %v500 = vunpack.c.h.b16 %v329
        %v501 = vunpack.c.l.b16 %v330
        %v502 = vunpack.c.h.b16 %v330
        %v503 = vunpack.c.l.b16 %v331
        %v504 = vunpack.c.h.b16 %v331
        %v505 = vunpack.c.l.b16 %v332
        %v506 = vunpack.c.h.b16 %v332
        %v507 = vunpack.c.l.b16 %v333
        %v508 = vunpack.c.h.b16 %v333
        %v509 = vunpack.c.l.b16 %v334
        %v510 = vunpack.c.h.b16 %v334
        %v511 = vunpack.c.l.b16 %v335
        %v512 = vunpack.c.h.b16 %v335
        %v513 = vunpack.c.l.b16 %v336
        %v514 = vunpack.c.h.b16 %v336
        %v515 = vunpack.c.l.b16 %v337
        %v516 = vunpack.c.h.b16 %v337
        %v517 = vunpack.c.l.b16 %v338
        %v518 = vunpack.c.h.b16 %v338
        %v519 = vunpack.c.l.b16 %v339
        %v520 = vunpack.c.h.b16 %v339
        %v521 = vunpack.c.l.b16 %v340
        %v522 = vunpack.c.h.b16 %v340
        %v523 = vunpack.c.l.b16 %v341
        %v524 = vunpack.c.h.b16 %v341
        %v525 = vunpack.c.l.b16 %v342
        %v526 = vunpack.c.h.b16 %v342
        %v527 = vunpack.c.l.b16 %v343
        %v528 = vunpack.c.h.b16 %v343
        %v529 = vunpack.c.l.b16 %v344
        %v530 = vunpack.c.h.b16 %v344
        %v531 = vunpack.c.l.b16 %v345
        %v532 = vunpack.c.h.b16 %v345
        %v533 = vunpack.c.l.b16 %v346
        %v534 = vunpack.c.h.b16 %v346
        %v535 = vunpack.c.l.b16 %v347
        %v536 = vunpack.c.h.b16 %v347
        %v537 = vunpack.c.l.b16 %v348
        %v538 = vunpack.c.h.b16 %v348
        %v539 = vunpack.c.l.b16 %v349
        %v540 = vunpack.c.h.b16 %v349
        %v541 = vunpack.c.l.b16 %v350
        %v542 = vunpack.c.h.b16 %v350
        %v543 = vunpack.c.l.b16 %v351
        %v544 = vunpack.c.h.b16 %v351
        %v545 = vunpack.c.l.b16 %v352
        %v546 = vunpack.c.h.b16 %v352
        %v547 = vunpack.c.l.b16 %v353
        %v548 = vunpack.c.h.b16 %v353
        %v549 = vunpack.c.l.b16 %v354
        %v550 = vunpack.c.h.b16 %v354
        %v551 = vunpack.c.l.b16 %v355
        %v552 = vunpack.c.h.b16 %v355
        %v553 = vunpack.c.l.b16 %v356
        %v554 = vunpack.c.h.b16 %v356
        %v555 = vunpack.c.l.b16 %v357
        %v556 = vunpack.c.h.b16 %v357
        %v557 = vunpack.c.l.b16 %v358
        %v558 = vunpack.c.h.b16 %v358
        %v559 = vunpack.c.l.b16 %v359
        %v560 = vunpack.c.h.b16 %v359
        %v561 = vunpack.c.l.b16 %v360
        %v562 = vunpack.c.h.b16 %v360
        %v563 = vunpack.c.l.b16 %v361
        %v564 = vunpack.c.h.b16 %v361
        %v565 = vunpack.c.l.b16 %v362
        %v566 = vunpack.c.h.b16 %v362
        %v567 = vunpack.c.l.b16 %v363
        %v568 = vunpack.c.h.b16 %v363
        %v569 = vunpack.c.l.b16 %v364
        %v570 = vunpack.c.h.b16 %v364
        %v571 = vunpack.c.l.b16 %v365
        %v572 = vunpack.c.h.b16 %v365
        %v573 = vunpack.c.l.b16 %v366
        %v574 = vunpack.c.h.b16 %v366
        %v575 = vunpack.c.l.b16 %v367
        %v576 = vunpack.c.h.b16 %v367
        %v577 = vunpack.c.l.b16 %v368
        %v578 = vunpack.c.h.b16 %v368
        %v579 = vunpack.c.l.b16 %v369
        %v580 = vunpack.c.h.b16 %v369
        %v581 = vunpack.c.l.b16 %v370
        %v582 = vunpack.c.h.b16 %v370
        %v583 = vunpack.c.l.b16 %v371
        %v584 = vunpack.c.h.b16 %v371
        %v585 = vunpack.c.l.b16 %v372
        %v586 = vunpack.c.h.b16 %v372
        %v587 = vunpack.c.l.b16 %v373
        %v588 = vunpack.c.h.b16 %v373
        %v589 = vunpack.c.l.b16 %v374
        %v590 = vunpack.c.h.b16 %v374
        %v591 = vunpack.c.l.b16 %v375
        %v592 = vunpack.c.h.b16 %v375
        %v593 = vunpack.c.l.b16 %v376
        %v594 = vunpack.c.h.b16 %v376
        %v595 = vunpack.c.l.b16 %v377
        %v596 = vunpack.c.h.b16 %v377
        %v597 = vunpack.c.l.b16 %v378
        %v598 = vunpack.c.h.b16 %v378
        %v599 = vunpack.c.l.b16 %v379
        %v600 = vunpack.c.h.b16 %v379
        %v601 = vunpack.c.l.b16 %v380
        %v602 = vunpack.c.h.b16 %v380
        %v603 = vunpack.c.l.b16 %v381
        %v604 = vunpack.c.h.b16 %v381
        %v605 = vunpack.c.l.b16 %v382
        %v606 = vunpack.c.h.b16 %v382
        %v607 = vunpack.c.l.b16 %v383
        %v608 = vunpack.c.h.b16 %v383
        %v609 = vunpack.c.l.b16 %v384
        %v610 = vunpack.c.h.b16 %v384
        %v611 = vunpack.c.l.b16 %v385
        %v612 = vunpack.c.h.b16 %v385
        %v613 = vunpack.c.l.b16 %v386
        %v614 = vunpack.c.h.b16 %v386
        %v615 = vunpack.c.l.b16 %v387
        %v616 = vunpack.c.h.b16 %v387
        %v617 = vunpack.c.l.b16 %v388
        %v618 = vunpack.c.h.b16 %v388
        %v619 = vunpack.c.l.b16 %v389
        %v620 = vunpack.c.h.b16 %v389
        %v621 = vunpack.c.l.b16 %v390
        %v622 = vunpack.c.h.b16 %v390
        %v623 = vunpack.c.l.b16 %v391
        %v624 = vunpack.c.h.b16 %v391
        %v625 = vunpack.c.l.b16 %v392
        %v626 = vunpack.c.h.b16 %v392
        %v627 = vpack.c.b16 %v507, %v499
        %v628 = vpack.c.b16 %v508, %v500
        %v629 = vpack.c.b16 %v509, %v501
        %v630 = vpack.c.b16 %v510, %v502
        %v631 = vpack.c.b16 %v511, %v503
        %v632 = vpack.c.b16 %v512, %v504
        %v633 = vpack.c.b16 %v513, %v505
        %v634 = vpack.c.b16 %v514, %v506
        %v635 = vpack.c.b16 %v523, %v515
        %v636 = vpack.c.b16 %v524, %v516
        %v637 = vpack.c.b16 %v525, %v517
        %v638 = vpack.c.b16 %v526, %v518
        %v639 = vpack.c.b16 %v527, %v519
        %v640 = vpack.c.b16 %v528, %v520
        %v641 = vpack.c.b16 %v529, %v521
        %v642 = vpack.c.b16 %v530, %v522
        %v643 = vpack.c.b16 %v539, %v531
        %v644 = vpack.c.b16 %v540, %v532
        %v645 = vpack.c.b16 %v541, %v533
        %v646 = vpack.c.b16 %v542, %v534
        %v647 = vpack.c.b16 %v543, %v535
        %v648 = vpack.c.b16 %v544, %v536
        %v649 = vpack.c.b16 %v545, %v537
        %v650 = vpack.c.b16 %v546, %v538
        %v651 = vpack.c.b16 %v555, %v547
        %v652 = vpack.c.b16 %v556, %v548
        %v653 = vpack.c.b16 %v557, %v549
        %v654 = vpack.c.b16 %v558, %v550
        %v655 = vpack.c.b16 %v559, %v551
        %v656 = vpack.c.b16 %v560, %v552
        %v657 = vpack.c.b16 %v561, %v553
        %v658 = vpack.c.b16 %v562, %v554
        %v659 = vpack.c.b16 %v571, %v563
        %v660 = vpack.c.b16 %v572, %v564
        %v661 = vpack.c.b16 %v573, %v565
        %v662 = vpack.c.b16 %v574, %v566
        %v663 = vpack.c.b16 %v575, %v567
        %v664 = vpack.c.b16 %v576, %v568
        %v665 = vpack.c.b16 %v577, %v569
        %v666 = vpack.c.b16 %v578, %v570
        %v667 = vpack.c.b16 %v587, %v579
        %v668 = vpack.c.b16 %v588, %v580
        %v669 = vpack.c.b16 %v589, %v581
        %v670 = vpack.c.b16 %v590, %v582
        %v671 = vpack.c.b16 %v591, %v583
        %v672 = vpack.c.b16 %v592, %v584
        %v673 = vpack.c.b16 %v593, %v585
        %v674 = vpack.c.b16 %v594, %v586
        %v675 = vpack.c.b16 %v603, %v595
        %v676 = vpack.c.b16 %v604, %v596
        %v677 = vpack.c.b16 %v605, %v597
        %v678 = vpack.c.b16 %v606, %v598
        %v679 = vpack.c.b16 %v607, %v599
        %v680 = vpack.c.b16 %v608, %v600
        %v681 = vpack.c.b16 %v609, %v601
        %v682 = vpack.c.b16 %v610, %v602
        %v683 = vpack.c.b16 %v619, %v611
        %v684 = vpack.c.b16 %v620, %v612
        %v685 = vpack.c.b16 %v621, %v613
        %v686 = vpack.c.b16 %v622, %v614
        %v687 = vpack.c.b16 %v623, %v615
        %v688 = vpack.c.b16 %v624, %v616
        %v689 = vpack.c.b16 %v625, %v617
        %v690 = vpack.c.b16 %v626, %v618
        %755 = vmatprep.subr.bf16.mxu0 %v628
        %756 = vmatpush1.bf16.msra.mxu0 %v627
        %757 = vmatprep.subr.bf16.mxu0 %v636
        %758 = vmatpush1.bf16.msra.mxu0 %v635
        %759 = vmatprep.subr.bf16.mxu0 %v644
        %760 = vmatpush1.bf16.msra.mxu0 %v643
        %761 = vmatprep.subr.bf16.mxu0 %v652
        %762 = vmatpush1.bf16.msra.mxu0 %v651
        %763 = vmatprep.subr.bf16.mxu0 %v660
        %764 = vmatpush1.bf16.msra.mxu0 %v659
        %765 = vmatprep.subr.bf16.mxu0 %v668
        %766 = vmatpush1.bf16.msra.mxu0 %v667
        %767 = vmatprep.subr.bf16.mxu0 %v676
        %768 = vmatpush1.bf16.msra.mxu0 %v675
        %769 = vmatprep.subr.bf16.mxu0 %v684
        %770 = vmatpush1.bf16.msra.mxu0 %v683
        %771 = vmatprep.subr.bf16.mxu0 0
        %772 = vmatpush1.bf16.msra.mxu0 0
        %773 = vmatprep.subr.bf16.mxu0 0
        %774 = vmatpush1.bf16.msra.mxu0 0
        %775 = vmatprep.subr.bf16.mxu0 0
        %776 = vmatpush1.bf16.msra.mxu0 0
        %777 = vmatprep.subr.bf16.mxu0 0
        %778 = vmatpush1.bf16.msra.mxu0 0
        %779 = vmatprep.subr.bf16.mxu0 0
        %780 = vmatpush1.bf16.msra.mxu0 0
        %781 = vmatprep.subr.bf16.mxu0 0
        %782 = vmatpush1.bf16.msra.mxu0 0
        %783 = vmatprep.subr.bf16.mxu0 0
        %784 = vmatpush1.bf16.msra.mxu0 0
        %785 = vmatprep.subr.bf16.mxu0 0
        %786 = vmatpush1.bf16.msra.mxu0 0
        %787 = vmatprep.mubr.bf16.mxu0 0
        %788 = vmatmul.mubr.bf16.gmra.mrb[0].mxu0 %v328
        %v789 = vpop.f32.mrb[0].mxu0
        %v790 = vadd.f32 %v398, %v789
        %v791 = vpop.f32.mrb[0].mxu0
        %v792 = vadd.f32 %v402, %v791
        %v793 = vpop.f32.mrb[0].mxu0
        %v794 = vpop.f32.mrb[0].mxu0
        %795 = vdwg.mxu0
        %796 = vmatprep.subr.bf16.mxu0 %v630
        %797 = vmatpush1.bf16.msra.mxu0 %v629
        %798 = vmatprep.subr.bf16.mxu0 %v638
        %799 = vmatpush1.bf16.msra.mxu0 %v637
        %800 = vmatprep.subr.bf16.mxu0 %v646
        %801 = vmatpush1.bf16.msra.mxu0 %v645
        %802 = vmatprep.subr.bf16.mxu0 %v654
        %803 = vmatpush1.bf16.msra.mxu0 %v653
        %804 = vmatprep.subr.bf16.mxu0 %v662
        %805 = vmatpush1.bf16.msra.mxu0 %v661
        %806 = vmatprep.subr.bf16.mxu0 %v670
        %807 = vmatpush1.bf16.msra.mxu0 %v669
        %808 = vmatprep.subr.bf16.mxu0 %v678
        %809 = vmatpush1.bf16.msra.mxu0 %v677
        %810 = vmatprep.subr.bf16.mxu0 %v686
        %811 = vmatpush1.bf16.msra.mxu0 %v685
        %812 = vmatprep.subr.bf16.mxu0 0
        %813 = vmatpush1.bf16.msra.mxu0 0
        %814 = vmatprep.subr.bf16.mxu0 0
        %815 = vmatpush1.bf16.msra.mxu0 0
        %816 = vmatprep.subr.bf16.mxu0 0
        %817 = vmatpush1.bf16.msra.mxu0 0
        %818 = vmatprep.subr.bf16.mxu0 0
        %819 = vmatpush1.bf16.msra.mxu0 0
        %820 = vmatprep.subr.bf16.mxu0 0
        %821 = vmatpush1.bf16.msra.mxu0 0
        %822 = vmatprep.subr.bf16.mxu0 0
        %823 = vmatpush1.bf16.msra.mxu0 0
        %824 = vmatprep.subr.bf16.mxu0 0
        %825 = vmatpush1.bf16.msra.mxu0 0
        %826 = vmatprep.subr.bf16.mxu0 0
        %827 = vmatpush1.bf16.msra.mxu0 0
        %828 = vmatprep.mubr.bf16.mxu0 0
        %829 = vmatmul.mubr.bf16.gmra.mrb[0].mxu0 %v328
        %v830 = vpop.f32.mrb[0].mxu0
        %v831 = vadd.f32 %v406, %v830
        %v832 = vpop.f32.mrb[0].mxu0
        %v833 = vadd.f32 %v410, %v832
        %v834 = vpop.f32.mrb[0].mxu0
        %v835 = vpop.f32.mrb[0].mxu0
        %836 = vdwg.mxu0
        %837 = vmatprep.subr.bf16.mxu0 %v632
        %838 = vmatpush1.bf16.msra.mxu0 %v631
        %839 = vmatprep.subr.bf16.mxu0 %v640
        %840 = vmatpush1.bf16.msra.mxu0 %v639
        %841 = vmatprep.subr.bf16.mxu0 %v648
        %842 = vmatpush1.bf16.msra.mxu0 %v647
        %843 = vmatprep.subr.bf16.mxu0 %v656
        %844 = vmatpush1.bf16.msra.mxu0 %v655
        %845 = vmatprep.subr.bf16.mxu0 %v664
        %846 = vmatpush1.bf16.msra.mxu0 %v663
        %847 = vmatprep.subr.bf16.mxu0 %v672
        %848 = vmatpush1.bf16.msra.mxu0 %v671
        %849 = vmatprep.subr.bf16.mxu0 %v680
        %850 = vmatpush1.bf16.msra.mxu0 %v679
        %851 = vmatprep.subr.bf16.mxu0 %v688
        %852 = vmatpush1.bf16.msra.mxu0 %v687
        %853 = vmatprep.subr.bf16.mxu0 0
        %854 = vmatpush1.bf16.msra.mxu0 0
        %855 = vmatprep.subr.bf16.mxu0 0
        %856 = vmatpush1.bf16.msra.mxu0 0
        %857 = vmatprep.subr.bf16.mxu0 0
        %858 = vmatpush1.bf16.msra.mxu0 0
        %859 = vmatprep.subr.bf16.mxu0 0
        %860 = vmatpush1.bf16.msra.mxu0 0
        %861 = vmatprep.subr.bf16.mxu0 0
        %862 = vmatpush1.bf16.msra.mxu0 0
        %863 = vmatprep.subr.bf16.mxu0 0
        %864 = vmatpush1.bf16.msra.mxu0 0
        %865 = vmatprep.subr.bf16.mxu0 0
        %866 = vmatpush1.bf16.msra.mxu0 0
        %867 = vmatprep.subr.bf16.mxu0 0
        %868 = vmatpush1.bf16.msra.mxu0 0
        %869 = vmatprep.mubr.bf16.mxu0 0
        %870 = vmatmul.mubr.bf16.gmra.mrb[0].mxu0 %v328
        %v871 = vpop.f32.mrb[0].mxu0
        %v872 = vadd.f32 %v414, %v871
        %v873 = vpop.f32.mrb[0].mxu0
        %v874 = vadd.f32 %v418, %v873
        %v875 = vpop.f32.mrb[0].mxu0
        %v876 = vpop.f32.mrb[0].mxu0
        %877 = vdwg.mxu0
        %878 = vmatprep.subr.bf16.mxu0 %v634
        %879 = vmatpush1.bf16.msra.mxu0 %v633
        %880 = vmatprep.subr.bf16.mxu0 %v642
        %881 = vmatpush1.bf16.msra.mxu0 %v641
        %882 = vmatprep.subr.bf16.mxu0 %v650
        %883 = vmatpush1.bf16.msra.mxu0 %v649
        %884 = vmatprep.subr.bf16.mxu0 %v658
        %885 = vmatpush1.bf16.msra.mxu0 %v657
        %886 = vmatprep.subr.bf16.mxu0 %v666
        %887 = vmatpush1.bf16.msra.mxu0 %v665
        %888 = vmatprep.subr.bf16.mxu0 %v674
        %889 = vmatpush1.bf16.msra.mxu0 %v673
        %890 = vmatprep.subr.bf16.mxu0 %v682
        %891 = vmatpush1.bf16.msra.mxu0 %v681
        %892 = vmatprep.subr.bf16.mxu0 %v690
        %893 = vmatpush1.bf16.msra.mxu0 %v689
        %894 = vmatprep.subr.bf16.mxu0 0
        %895 = vmatpush1.bf16.msra.mxu0 0
        %896 = vmatprep.subr.bf16.mxu0 0
        %897 = vmatpush1.bf16.msra.mxu0 0
        %898 = vmatprep.subr.bf16.mxu0 0
        %899 = vmatpush1.bf16.msra.mxu0 0
        %900 = vmatprep.subr.bf16.mxu0 0
        %901 = vmatpush1.bf16.msra.mxu0 0
        %902 = vmatprep.subr.bf16.mxu0 0
        %903 = vmatpush1.bf16.msra.mxu0 0
        %904 = vmatprep.subr.bf16.mxu0 0
        %905 = vmatpush1.bf16.msra.mxu0 0
        %906 = vmatprep.subr.bf16.mxu0 0
        %907 = vmatpush1.bf16.msra.mxu0 0
        %908 = vmatprep.subr.bf16.mxu0 0
        %909 = vmatpush1.bf16.msra.mxu0 0
        %910 = vmatprep.mubr.bf16.mxu0 0
        %911 = vmatmul.mubr.bf16.gmra.mrb[0].mxu0 %v328
        %v912 = vpop.f32.mrb[0].mxu0
        %v913 = vadd.f32 %v422, %v912
        %v914 = vpop.f32.mrb[0].mxu0
        %v915 = vadd.f32 %v426, %v914
        %v916 = vpop.f32.mrb[0].mxu0
        %v917 = vpop.f32.mrb[0].mxu0
        %918 = vdwg.mxu0
        %v919 = vmax.f32 %v790, 0.0
        %v920 = vmax.f32 %v792, 0.0
        %v921 = vmax.f32 %v831, 0.0
        %v922 = vmax.f32 %v833, 0.0
        %v923 = vmax.f32 %v872, 0.0
        %v924 = vmax.f32 %v874, 0.0
        %v925 = vmax.f32 %v913, 0.0
        %v926 = vmax.f32 %v915, 0.0
        %v927 = vld [vmem:[#allocation2] sm:$0xff]
        %v928 = vpack.c.bf16 %v919, %v919
        %v929 = vpack.c.bf16 %v920, %v920
        %v930 = vpack.c.bf16 %v921, %v921
        %v931 = vpack.c.bf16 %v922, %v922
        %v932 = vpack.c.bf16 %v923, %v923
        %v933 = vpack.c.bf16 %v924, %v924
        %v934 = vpack.c.bf16 %v925, %v925
        %v935 = vpack.c.bf16 %v926, %v926
        %v936 = vld [vmem:[#allocation9] sm:$0xf]
        %v937 = vld [vmem:[#allocation9 + $0x4] sm:$0xf]
        %v938 = vld [vmem:[#allocation9 + $0x8] sm:$0xf]
        %v939 = vld [vmem:[#allocation9 + $0xc] sm:$0xf]
        %v940 = vld [vmem:[#allocation9 + $0x10] sm:$0xf]
        %v941 = vld [vmem:[#allocation9 + $0x14] sm:$0xf]
        %v942 = vld [vmem:[#allocation9 + $0x18] sm:$0xf]
        %v943 = vld [vmem:[#allocation9 + $0x1c] sm:$0xf]
        %v944 = vld [vmem:[#allocation9 + $0x20] sm:$0xf]
        %v945 = vld [vmem:[#allocation9 + $0x24] sm:$0xf]
        %v946 = vld [vmem:[#allocation9 + $0x28] sm:$0xf]
        %v947 = vld [vmem:[#allocation9 + $0x2c] sm:$0xf]
        %v948 = vld [vmem:[#allocation9 + $0x30] sm:$0xf]
        %v949 = vld [vmem:[#allocation9 + $0x34] sm:$0xf]
        %v950 = vld [vmem:[#allocation9 + $0x38] sm:$0xf]
        %v951 = vld [vmem:[#allocation9 + $0x3c] sm:$0xf]
        %v952 = vld [vmem:[#allocation9 + $0x40] sm:$0xf]
        %v953 = vld [vmem:[#allocation9 + $0x44] sm:$0xf]
        %v954 = vld [vmem:[#allocation9 + $0x48] sm:$0xf]
        %v955 = vld [vmem:[#allocation9 + $0x4c] sm:$0xf]
        %v956 = vld [vmem:[#allocation9 + $0x50] sm:$0xf]
        %v957 = vld [vmem:[#allocation9 + $0x54] sm:$0xf]
        %v958 = vld [vmem:[#allocation9 + $0x58] sm:$0xf]
        %v959 = vld [vmem:[#allocation9 + $0x5c] sm:$0xf]
        %v960 = vld [vmem:[#allocation9 + $0x60] sm:$0xf]
        %v961 = vld [vmem:[#allocation9 + $0x64] sm:$0xf]
        %v962 = vld [vmem:[#allocation9 + $0x68] sm:$0xf]
        %v963 = vld [vmem:[#allocation9 + $0x6c] sm:$0xf]
        %v964 = vld [vmem:[#allocation9 + $0x70] sm:$0xf]
        %v965 = vld [vmem:[#allocation9 + $0x74] sm:$0xf]
        %v966 = vld [vmem:[#allocation9 + $0x78] sm:$0xf]
        %v967 = vld [vmem:[#allocation9 + $0x7c] sm:$0xf]
        %v968 = vld [vmem:[#allocation9 + $0x80] sm:$0xf]
        %v969 = vld [vmem:[#allocation9 + $0x84] sm:$0xf]
        %v970 = vld [vmem:[#allocation9 + $0x88] sm:$0xf]
        %v971 = vld [vmem:[#allocation9 + $0x8c] sm:$0xf]
        %v972 = vld [vmem:[#allocation9 + $0x90] sm:$0xf]
        %v973 = vld [vmem:[#allocation9 + $0x94] sm:$0xf]
        %v974 = vld [vmem:[#allocation9 + $0x98] sm:$0xf]
        %v975 = vld [vmem:[#allocation9 + $0x9c] sm:$0xf]
        %v976 = vld [vmem:[#allocation9 + $0xa0] sm:$0xf]
        %v977 = vld [vmem:[#allocation9 + $0xa4] sm:$0xf]
        %v978 = vld [vmem:[#allocation9 + $0xa8] sm:$0xf]
        %v979 = vld [vmem:[#allocation9 + $0xac] sm:$0xf]
        %v980 = vld [vmem:[#allocation9 + $0xb0] sm:$0xf]
        %v981 = vld [vmem:[#allocation9 + $0xb4] sm:$0xf]
        %v982 = vld [vmem:[#allocation9 + $0xb8] sm:$0xf]
        %v983 = vld [vmem:[#allocation9 + $0xbc] sm:$0xf]
        %v984 = vld [vmem:[#allocation9 + $0xc0] sm:$0xf]
        %v985 = vld [vmem:[#allocation9 + $0xc4] sm:$0xf]
        %v986 = vld [vmem:[#allocation9 + $0xc8] sm:$0xf]
        %v987 = vld [vmem:[#allocation9 + $0xcc] sm:$0xf]
        %v988 = vld [vmem:[#allocation9 + $0xd0] sm:$0xf]
        %v989 = vld [vmem:[#allocation9 + $0xd4] sm:$0xf]
        %v990 = vld [vmem:[#allocation9 + $0xd8] sm:$0xf]
        %v991 = vld [vmem:[#allocation9 + $0xdc] sm:$0xf]
        %v992 = vld [vmem:[#allocation9 + $0xe0] sm:$0xf]
        %v993 = vld [vmem:[#allocation9 + $0xe4] sm:$0xf]
        %v994 = vld [vmem:[#allocation9 + $0xe8] sm:$0xf]
        %v995 = vld [vmem:[#allocation9 + $0xec] sm:$0xf]
        %v996 = vld [vmem:[#allocation9 + $0xf0] sm:$0xf]
        %v997 = vld [vmem:[#allocation9 + $0xf4] sm:$0xf]
        %v998 = vld [vmem:[#allocation9 + $0xf8] sm:$0xf]
        %v999 = vld [vmem:[#allocation9 + $0xfc] sm:$0xf]
        %v1000 = vld [vmem:[#allocation9 + $0x100] sm:$0xf]
        %v1001 = vld [vmem:[#allocation9 + $0x104] sm:$0xf]
        %v1002 = vld [vmem:[#allocation9 + $0x108] sm:$0xf]
        %v1003 = vld [vmem:[#allocation9 + $0x10c] sm:$0xf]
        %v1004 = vld [vmem:[#allocation9 + $0x110] sm:$0xf]
        %v1005 = vld [vmem:[#allocation9 + $0x114] sm:$0xf]
        %v1006 = vld [vmem:[#allocation9 + $0x118] sm:$0xf]
        %v1007 = vld [vmem:[#allocation9 + $0x11c] sm:$0xf]
        %v1008 = vld [vmem:[#allocation9 + $0x120] sm:$0xf]
        %v1009 = vld [vmem:[#allocation9 + $0x124] sm:$0xf]
        %v1010 = vld [vmem:[#allocation9 + $0x128] sm:$0xf]
        %v1011 = vld [vmem:[#allocation9 + $0x12c] sm:$0xf]
        %v1012 = vld [vmem:[#allocation9 + $0x130] sm:$0xf]
        %v1013 = vld [vmem:[#allocation9 + $0x134] sm:$0xf]
        %v1014 = vld [vmem:[#allocation9 + $0x138] sm:$0xf]
        %v1015 = vld [vmem:[#allocation9 + $0x13c] sm:$0xf]
        %v1016 = vld [vmem:[#allocation9 + $0x140] sm:$0xf]
        %v1017 = vld [vmem:[#allocation9 + $0x144] sm:$0xf]
        %v1018 = vld [vmem:[#allocation9 + $0x148] sm:$0xf]
        %v1019 = vld [vmem:[#allocation9 + $0x14c] sm:$0xf]
        %v1020 = vld [vmem:[#allocation9 + $0x150] sm:$0xf]
        %v1021 = vld [vmem:[#allocation9 + $0x154] sm:$0xf]
        %v1022 = vld [vmem:[#allocation9 + $0x158] sm:$0xf]
        %v1023 = vld [vmem:[#allocation9 + $0x15c] sm:$0xf]
        %v1024 = vld [vmem:[#allocation9 + $0x160] sm:$0xf]
        %v1025 = vld [vmem:[#allocation9 + $0x164] sm:$0xf]
        %v1026 = vld [vmem:[#allocation9 + $0x168] sm:$0xf]
        %v1027 = vld [vmem:[#allocation9 + $0x16c] sm:$0xf]
        %v1028 = vld [vmem:[#allocation9 + $0x170] sm:$0xf]
        %v1029 = vld [vmem:[#allocation9 + $0x174] sm:$0xf]
        %v1030 = vld [vmem:[#allocation9 + $0x178] sm:$0xf]
        %v1031 = vld [vmem:[#allocation9 + $0x17c] sm:$0xf]
        %v1032 = vld [vmem:[#allocation9 + $0x180] sm:$0xf]
        %v1033 = vld [vmem:[#allocation9 + $0x184] sm:$0xf]
        %v1034 = vld [vmem:[#allocation9 + $0x188] sm:$0xf]
        %v1035 = vld [vmem:[#allocation9 + $0x18c] sm:$0xf]
        %v1036 = vld [vmem:[#allocation9 + $0x190] sm:$0xf]
        %v1037 = vld [vmem:[#allocation9 + $0x194] sm:$0xf]
        %v1038 = vld [vmem:[#allocation9 + $0x198] sm:$0xf]
        %v1039 = vld [vmem:[#allocation9 + $0x19c] sm:$0xf]
        %v1040 = vld [vmem:[#allocation9 + $0x1a0] sm:$0xf]
        %v1041 = vld [vmem:[#allocation9 + $0x1a4] sm:$0xf]
        %v1042 = vld [vmem:[#allocation9 + $0x1a8] sm:$0xf]
        %v1043 = vld [vmem:[#allocation9 + $0x1ac] sm:$0xf]
        %v1044 = vld [vmem:[#allocation9 + $0x1b0] sm:$0xf]
        %v1045 = vld [vmem:[#allocation9 + $0x1b4] sm:$0xf]
        %v1046 = vld [vmem:[#allocation9 + $0x1b8] sm:$0xf]
        %v1047 = vld [vmem:[#allocation9 + $0x1bc] sm:$0xf]
        %v1048 = vld [vmem:[#allocation9 + $0x1c0] sm:$0xf]
        %v1049 = vld [vmem:[#allocation9 + $0x1c4] sm:$0xf]
        %v1050 = vld [vmem:[#allocation9 + $0x1c8] sm:$0xf]
        %v1051 = vld [vmem:[#allocation9 + $0x1cc] sm:$0xf]
        %v1052 = vld [vmem:[#allocation9 + $0x1d0] sm:$0xf]
        %v1053 = vld [vmem:[#allocation9 + $0x1d4] sm:$0xf]
        %v1054 = vld [vmem:[#allocation9 + $0x1d8] sm:$0xf]
        %v1055 = vld [vmem:[#allocation9 + $0x1dc] sm:$0xf]
        %v1056 = vld [vmem:[#allocation9 + $0x1e0] sm:$0xf]
        %v1057 = vld [vmem:[#allocation9 + $0x1e4] sm:$0xf]
        %v1058 = vld [vmem:[#allocation9 + $0x1e8] sm:$0xf]
        %v1059 = vld [vmem:[#allocation9 + $0x1ec] sm:$0xf]
        %v1060 = vld [vmem:[#allocation9 + $0x1f0] sm:$0xf]
        %v1061 = vld [vmem:[#allocation9 + $0x1f4] sm:$0xf]
        %v1062 = vld [vmem:[#allocation9 + $0x1f8] sm:$0xf]
        %v1063 = vld [vmem:[#allocation9 + $0x1fc] sm:$0xf]
        %v1192 = vunpack.c.l.b16 %v936
        %v1193 = vunpack.c.l.b16 %v937
        %v1194 = vunpack.c.l.b16 %v938
        %v1195 = vunpack.c.l.b16 %v939
        %v1196 = vunpack.c.l.b16 %v940
        %v1197 = vunpack.c.l.b16 %v941
        %v1198 = vunpack.c.l.b16 %v942
        %v1199 = vunpack.c.l.b16 %v943
        %v1200 = vunpack.c.l.b16 %v944
        %v1201 = vunpack.c.l.b16 %v945
        %v1202 = vunpack.c.l.b16 %v946
        %v1203 = vunpack.c.l.b16 %v947
        %v1204 = vunpack.c.l.b16 %v948
        %v1205 = vunpack.c.l.b16 %v949
        %v1206 = vunpack.c.l.b16 %v950
        %v1207 = vunpack.c.l.b16 %v951
        %v1208 = vunpack.c.l.b16 %v952
        %v1209 = vunpack.c.l.b16 %v953
        %v1210 = vunpack.c.l.b16 %v954
        %v1211 = vunpack.c.l.b16 %v955
        %v1212 = vunpack.c.l.b16 %v956
        %v1213 = vunpack.c.l.b16 %v957
        %v1214 = vunpack.c.l.b16 %v958
        %v1215 = vunpack.c.l.b16 %v959
        %v1216 = vunpack.c.l.b16 %v960
        %v1217 = vunpack.c.l.b16 %v961
        %v1218 = vunpack.c.l.b16 %v962
        %v1219 = vunpack.c.l.b16 %v963
        %v1220 = vunpack.c.l.b16 %v964
        %v1221 = vunpack.c.l.b16 %v965
        %v1222 = vunpack.c.l.b16 %v966
        %v1223 = vunpack.c.l.b16 %v967
        %v1224 = vunpack.c.l.b16 %v968
        %v1225 = vunpack.c.l.b16 %v969
        %v1226 = vunpack.c.l.b16 %v970
        %v1227 = vunpack.c.l.b16 %v971
        %v1228 = vunpack.c.l.b16 %v972
        %v1229 = vunpack.c.l.b16 %v973
        %v1230 = vunpack.c.l.b16 %v974
        %v1231 = vunpack.c.l.b16 %v975
        %v1232 = vunpack.c.l.b16 %v976
        %v1233 = vunpack.c.l.b16 %v977
        %v1234 = vunpack.c.l.b16 %v978
        %v1235 = vunpack.c.l.b16 %v979
        %v1236 = vunpack.c.l.b16 %v980
        %v1237 = vunpack.c.l.b16 %v981
        %v1238 = vunpack.c.l.b16 %v982
        %v1239 = vunpack.c.l.b16 %v983
        %v1240 = vunpack.c.l.b16 %v984
        %v1241 = vunpack.c.l.b16 %v985
        %v1242 = vunpack.c.l.b16 %v986
        %v1243 = vunpack.c.l.b16 %v987
        %v1244 = vunpack.c.l.b16 %v988
        %v1245 = vunpack.c.l.b16 %v989
        %v1246 = vunpack.c.l.b16 %v990
        %v1247 = vunpack.c.l.b16 %v991
        %v1248 = vunpack.c.l.b16 %v992
        %v1249 = vunpack.c.l.b16 %v993
        %v1250 = vunpack.c.l.b16 %v994
        %v1251 = vunpack.c.l.b16 %v995
        %v1252 = vunpack.c.l.b16 %v996
        %v1253 = vunpack.c.l.b16 %v997
        %v1254 = vunpack.c.l.b16 %v998
        %v1255 = vunpack.c.l.b16 %v999
        %v1256 = vunpack.c.l.b16 %v1000
        %v1257 = vunpack.c.l.b16 %v1001
        %v1258 = vunpack.c.l.b16 %v1002
        %v1259 = vunpack.c.l.b16 %v1003
        %v1260 = vunpack.c.l.b16 %v1004
        %v1261 = vunpack.c.l.b16 %v1005
        %v1262 = vunpack.c.l.b16 %v1006
        %v1263 = vunpack.c.l.b16 %v1007
        %v1264 = vunpack.c.l.b16 %v1008
        %v1265 = vunpack.c.l.b16 %v1009
        %v1266 = vunpack.c.l.b16 %v1010
        %v1267 = vunpack.c.l.b16 %v1011
        %v1268 = vunpack.c.l.b16 %v1012
        %v1269 = vunpack.c.l.b16 %v1013
        %v1270 = vunpack.c.l.b16 %v1014
        %v1271 = vunpack.c.l.b16 %v1015
        %v1272 = vunpack.c.l.b16 %v1016
        %v1273 = vunpack.c.l.b16 %v1017
        %v1274 = vunpack.c.l.b16 %v1018
        %v1275 = vunpack.c.l.b16 %v1019
        %v1276 = vunpack.c.l.b16 %v1020
        %v1277 = vunpack.c.l.b16 %v1021
        %v1278 = vunpack.c.l.b16 %v1022
        %v1279 = vunpack.c.l.b16 %v1023
        %v1280 = vunpack.c.l.b16 %v1024
        %v1281 = vunpack.c.l.b16 %v1025
        %v1282 = vunpack.c.l.b16 %v1026
        %v1283 = vunpack.c.l.b16 %v1027
        %v1284 = vunpack.c.l.b16 %v1028
        %v1285 = vunpack.c.l.b16 %v1029
        %v1286 = vunpack.c.l.b16 %v1030
        %v1287 = vunpack.c.l.b16 %v1031
        %v1288 = vunpack.c.l.b16 %v1032
        %v1289 = vunpack.c.l.b16 %v1033
        %v1290 = vunpack.c.l.b16 %v1034
        %v1291 = vunpack.c.l.b16 %v1035
        %v1292 = vunpack.c.l.b16 %v1036
        %v1293 = vunpack.c.l.b16 %v1037
        %v1294 = vunpack.c.l.b16 %v1038
        %v1295 = vunpack.c.l.b16 %v1039
        %v1296 = vunpack.c.l.b16 %v1040
        %v1297 = vunpack.c.l.b16 %v1041
        %v1298 = vunpack.c.l.b16 %v1042
        %v1299 = vunpack.c.l.b16 %v1043
        %v1300 = vunpack.c.l.b16 %v1044
        %v1301 = vunpack.c.l.b16 %v1045
        %v1302 = vunpack.c.l.b16 %v1046
        %v1303 = vunpack.c.l.b16 %v1047
        %v1304 = vunpack.c.l.b16 %v1048
        %v1305 = vunpack.c.l.b16 %v1049
        %v1306 = vunpack.c.l.b16 %v1050
        %v1307 = vunpack.c.l.b16 %v1051
        %v1308 = vunpack.c.l.b16 %v1052
        %v1309 = vunpack.c.l.b16 %v1053
        %v1310 = vunpack.c.l.b16 %v1054
        %v1311 = vunpack.c.l.b16 %v1055
        %v1312 = vunpack.c.l.b16 %v1056
        %v1313 = vunpack.c.l.b16 %v1057
        %v1314 = vunpack.c.l.b16 %v1058
        %v1315 = vunpack.c.l.b16 %v1059
        %v1316 = vunpack.c.l.b16 %v1060
        %v1317 = vunpack.c.l.b16 %v1061
        %v1318 = vunpack.c.l.b16 %v1062
        %v1319 = vunpack.c.l.b16 %v1063
        %v1320 = vpack.c.b16 %v1193, %v1192
        %v1321 = vpack.c.b16 %v1195, %v1194
        %v1322 = vpack.c.b16 %v1197, %v1196
        %v1323 = vpack.c.b16 %v1199, %v1198
        %v1324 = vpack.c.b16 %v1201, %v1200
        %v1325 = vpack.c.b16 %v1203, %v1202
        %v1326 = vpack.c.b16 %v1205, %v1204
        %v1327 = vpack.c.b16 %v1207, %v1206
        %v1328 = vpack.c.b16 %v1209, %v1208
        %v1329 = vpack.c.b16 %v1211, %v1210
        %v1330 = vpack.c.b16 %v1213, %v1212
        %v1331 = vpack.c.b16 %v1215, %v1214
        %v1332 = vpack.c.b16 %v1217, %v1216
        %v1333 = vpack.c.b16 %v1219, %v1218
        %v1334 = vpack.c.b16 %v1221, %v1220
        %v1335 = vpack.c.b16 %v1223, %v1222
        %v1336 = vpack.c.b16 %v1225, %v1224
        %v1337 = vpack.c.b16 %v1227, %v1226
        %v1338 = vpack.c.b16 %v1229, %v1228
        %v1339 = vpack.c.b16 %v1231, %v1230
        %v1340 = vpack.c.b16 %v1233, %v1232
        %v1341 = vpack.c.b16 %v1235, %v1234
        %v1342 = vpack.c.b16 %v1237, %v1236
        %v1343 = vpack.c.b16 %v1239, %v1238
        %v1344 = vpack.c.b16 %v1241, %v1240
        %v1345 = vpack.c.b16 %v1243, %v1242
        %v1346 = vpack.c.b16 %v1245, %v1244
        %v1347 = vpack.c.b16 %v1247, %v1246
        %v1348 = vpack.c.b16 %v1249, %v1248
        %v1349 = vpack.c.b16 %v1251, %v1250
        %v1350 = vpack.c.b16 %v1253, %v1252
        %v1351 = vpack.c.b16 %v1255, %v1254
        %v1352 = vpack.c.b16 %v1257, %v1256
        %v1353 = vpack.c.b16 %v1259, %v1258
        %v1354 = vpack.c.b16 %v1261, %v1260
        %v1355 = vpack.c.b16 %v1263, %v1262
        %v1356 = vpack.c.b16 %v1265, %v1264
        %v1357 = vpack.c.b16 %v1267, %v1266
        %v1358 = vpack.c.b16 %v1269, %v1268
        %v1359 = vpack.c.b16 %v1271, %v1270
        %v1360 = vpack.c.b16 %v1273, %v1272
        %v1361 = vpack.c.b16 %v1275, %v1274
        %v1362 = vpack.c.b16 %v1277, %v1276
        %v1363 = vpack.c.b16 %v1279, %v1278
        %v1364 = vpack.c.b16 %v1281, %v1280
        %v1365 = vpack.c.b16 %v1283, %v1282
        %v1366 = vpack.c.b16 %v1285, %v1284
        %v1367 = vpack.c.b16 %v1287, %v1286
        %v1368 = vpack.c.b16 %v1289, %v1288
        %v1369 = vpack.c.b16 %v1291, %v1290
        %v1370 = vpack.c.b16 %v1293, %v1292
        %v1371 = vpack.c.b16 %v1295, %v1294
        %v1372 = vpack.c.b16 %v1297, %v1296
        %v1373 = vpack.c.b16 %v1299, %v1298
        %v1374 = vpack.c.b16 %v1301, %v1300
        %v1375 = vpack.c.b16 %v1303, %v1302
        %v1376 = vpack.c.b16 %v1305, %v1304
        %v1377 = vpack.c.b16 %v1307, %v1306
        %v1378 = vpack.c.b16 %v1309, %v1308
        %v1379 = vpack.c.b16 %v1311, %v1310
        %v1380 = vpack.c.b16 %v1313, %v1312
        %v1381 = vpack.c.b16 %v1315, %v1314
        %v1382 = vpack.c.b16 %v1317, %v1316
        %v1383 = vpack.c.b16 %v1319, %v1318
        %1448 = vmatprep.subr.bf16.mxu0 0
        %1449 = vmatpush1.bf16.msra.mxu0 %v1320
        %1450 = vmatprep.subr.bf16.mxu0 0
        %1451 = vmatpush1.bf16.msra.mxu0 %v1321
        %1452 = vmatprep.subr.bf16.mxu0 0
        %1453 = vmatpush1.bf16.msra.mxu0 %v1322
        %1454 = vmatprep.subr.bf16.mxu0 0
        %1455 = vmatpush1.bf16.msra.mxu0 %v1323
        %1456 = vmatprep.subr.bf16.mxu0 0
        %1457 = vmatpush1.bf16.msra.mxu0 %v1324
        %1458 = vmatprep.subr.bf16.mxu0 0
        %1459 = vmatpush1.bf16.msra.mxu0 %v1325
        %1460 = vmatprep.subr.bf16.mxu0 0
        %1461 = vmatpush1.bf16.msra.mxu0 %v1326
        %1462 = vmatprep.subr.bf16.mxu0 0
        %1463 = vmatpush1.bf16.msra.mxu0 %v1327
        %1464 = vmatprep.subr.bf16.mxu0 0
        %1465 = vmatpush1.bf16.msra.mxu0 %v1328
        %1466 = vmatprep.subr.bf16.mxu0 0
        %1467 = vmatpush1.bf16.msra.mxu0 %v1329
        %1468 = vmatprep.subr.bf16.mxu0 0
        %1469 = vmatpush1.bf16.msra.mxu0 %v1330
        %1470 = vmatprep.subr.bf16.mxu0 0
        %1471 = vmatpush1.bf16.msra.mxu0 %v1331
        %1472 = vmatprep.subr.bf16.mxu0 0
        %1473 = vmatpush1.bf16.msra.mxu0 %v1332
        %1474 = vmatprep.subr.bf16.mxu0 0
        %1475 = vmatpush1.bf16.msra.mxu0 %v1333
        %1476 = vmatprep.subr.bf16.mxu0 0
        %1477 = vmatpush1.bf16.msra.mxu0 %v1334
        %1478 = vmatprep.subr.bf16.mxu0 0
        %1479 = vmatpush1.bf16.msra.mxu0 %v1335
        %1480 = vmatprep.mubr.bf16.mxu0 %v929
        %1481 = vmatmul.mubr.bf16.gmra.mrb[0].mxu0 %v928
        %v1482 = vpop.f32.mrb[0].mxu0
        %v1483 = vadd.f32 0.0, %v1482
        %v1484 = vpop.f32.mrb[0].mxu0
        %v1485 = vpop.f32.mrb[0].mxu0
        %v1486 = vpop.f32.mrb[0].mxu0
        %1487 = vdwg.mxu0
        %1488 = vmatprep.subr.bf16.mxu0 0
        %1489 = vmatpush1.bf16.msra.mxu0 %v1336
        %1490 = vmatprep.subr.bf16.mxu0 0
        %1491 = vmatpush1.bf16.msra.mxu0 %v1337
        %1492 = vmatprep.subr.bf16.mxu0 0
        %1493 = vmatpush1.bf16.msra.mxu0 %v1338
        %1494 = vmatprep.subr.bf16.mxu0 0
        %1495 = vmatpush1.bf16.msra.mxu0 %v1339
        %1496 = vmatprep.subr.bf16.mxu0 0
        %1497 = vmatpush1.bf16.msra.mxu0 %v1340
        %1498 = vmatprep.subr.bf16.mxu0 0
        %1499 = vmatpush1.bf16.msra.mxu0 %v1341
        %1500 = vmatprep.subr.bf16.mxu0 0
        %1501 = vmatpush1.bf16.msra.mxu0 %v1342
        %1502 = vmatprep.subr.bf16.mxu0 0
        %1503 = vmatpush1.bf16.msra.mxu0 %v1343
        %1504 = vmatprep.subr.bf16.mxu0 0
        %1505 = vmatpush1.bf16.msra.mxu0 %v1344
        %1506 = vmatprep.subr.bf16.mxu0 0
        %1507 = vmatpush1.bf16.msra.mxu0 %v1345
        %1508 = vmatprep.subr.bf16.mxu0 0
        %1509 = vmatpush1.bf16.msra.mxu0 %v1346
        %1510 = vmatprep.subr.bf16.mxu0 0
        %1511 = vmatpush1.bf16.msra.mxu0 %v1347
        %1512 = vmatprep.subr.bf16.mxu0 0
        %1513 = vmatpush1.bf16.msra.mxu0 %v1348
        %1514 = vmatprep.subr.bf16.mxu0 0
        %1515 = vmatpush1.bf16.msra.mxu0 %v1349
        %1516 = vmatprep.subr.bf16.mxu0 0
        %1517 = vmatpush1.bf16.msra.mxu0 %v1350
        %1518 = vmatprep.subr.bf16.mxu0 0
        %1519 = vmatpush1.bf16.msra.mxu0 %v1351
        %1520 = vmatprep.mubr.bf16.mxu0 %v931
        %1521 = vmatmul.mubr.bf16.gmra.mrb[0].mxu0 %v930
        %v1522 = vpop.f32.mrb[0].mxu0
        %v1523 = vadd.f32 %v1483, %v1522
        %v1524 = vpop.f32.mrb[0].mxu0
        %v1525 = vpop.f32.mrb[0].mxu0
        %v1526 = vpop.f32.mrb[0].mxu0
        %1527 = vdwg.mxu0
        %1528 = vmatprep.subr.bf16.mxu0 0
        %1529 = vmatpush1.bf16.msra.mxu0 %v1352
        %1530 = vmatprep.subr.bf16.mxu0 0
        %1531 = vmatpush1.bf16.msra.mxu0 %v1353
        %1532 = vmatprep.subr.bf16.mxu0 0
        %1533 = vmatpush1.bf16.msra.mxu0 %v1354
        %1534 = vmatprep.subr.bf16.mxu0 0
        %1535 = vmatpush1.bf16.msra.mxu0 %v1355
        %1536 = vmatprep.subr.bf16.mxu0 0
        %1537 = vmatpush1.bf16.msra.mxu0 %v1356
        %1538 = vmatprep.subr.bf16.mxu0 0
        %1539 = vmatpush1.bf16.msra.mxu0 %v1357
        %1540 = vmatprep.subr.bf16.mxu0 0
        %1541 = vmatpush1.bf16.msra.mxu0 %v1358
        %1542 = vmatprep.subr.bf16.mxu0 0
        %1543 = vmatpush1.bf16.msra.mxu0 %v1359
        %1544 = vmatprep.subr.bf16.mxu0 0
        %1545 = vmatpush1.bf16.msra.mxu0 %v1360
        %1546 = vmatprep.subr.bf16.mxu0 0
        %1547 = vmatpush1.bf16.msra.mxu0 %v1361
        %1548 = vmatprep.subr.bf16.mxu0 0
        %1549 = vmatpush1.bf16.msra.mxu0 %v1362
        %1550 = vmatprep.subr.bf16.mxu0 0
        %1551 = vmatpush1.bf16.msra.mxu0 %v1363
        %1552 = vmatprep.subr.bf16.mxu0 0
        %1553 = vmatpush1.bf16.msra.mxu0 %v1364
        %1554 = vmatprep.subr.bf16.mxu0 0
        %1555 = vmatpush1.bf16.msra.mxu0 %v1365
        %1556 = vmatprep.subr.bf16.mxu0 0
        %1557 = vmatpush1.bf16.msra.mxu0 %v1366
        %1558 = vmatprep.subr.bf16.mxu0 0
        %1559 = vmatpush1.bf16.msra.mxu0 %v1367
        %1560 = vmatprep.mubr.bf16.mxu0 %v933
        %1561 = vmatmul.mubr.bf16.gmra.mrb[0].mxu0 %v932
        %v1562 = vpop.f32.mrb[0].mxu0
        %v1563 = vadd.f32 %v1523, %v1562
        %v1564 = vpop.f32.mrb[0].mxu0
        %v1565 = vpop.f32.mrb[0].mxu0
        %v1566 = vpop.f32.mrb[0].mxu0
        %1567 = vdwg.mxu0
        %1568 = vmatprep.subr.bf16.mxu0 0
        %1569 = vmatpush1.bf16.msra.mxu0 %v1368
        %1570 = vmatprep.subr.bf16.mxu0 0
        %1571 = vmatpush1.bf16.msra.mxu0 %v1369
        %1572 = vmatprep.subr.bf16.mxu0 0
        %1573 = vmatpush1.bf16.msra.mxu0 %v1370
        %1574 = vmatprep.subr.bf16.mxu0 0
        %1575 = vmatpush1.bf16.msra.mxu0 %v1371
        %1576 = vmatprep.subr.bf16.mxu0 0
        %1577 = vmatpush1.bf16.msra.mxu0 %v1372
        %1578 = vmatprep.subr.bf16.mxu0 0
        %1579 = vmatpush1.bf16.msra.mxu0 %v1373
        %1580 = vmatprep.subr.bf16.mxu0 0
        %1581 = vmatpush1.bf16.msra.mxu0 %v1374
        %1582 = vmatprep.subr.bf16.mxu0 0
        %1583 = vmatpush1.bf16.msra.mxu0 %v1375
        %1584 = vmatprep.subr.bf16.mxu0 0
        %1585 = vmatpush1.bf16.msra.mxu0 %v1376
        %1586 = vmatprep.subr.bf16.mxu0 0
        %1587 = vmatpush1.bf16.msra.mxu0 %v1377
        %1588 = vmatprep.subr.bf16.mxu0 0
        %1589 = vmatpush1.bf16.msra.mxu0 %v1378
        %1590 = vmatprep.subr.bf16.mxu0 0
        %1591 = vmatpush1.bf16.msra.mxu0 %v1379
        %1592 = vmatprep.subr.bf16.mxu0 0
        %1593 = vmatpush1.bf16.msra.mxu0 %v1380
        %1594 = vmatprep.subr.bf16.mxu0 0
        %1595 = vmatpush1.bf16.msra.mxu0 %v1381
        %1596 = vmatprep.subr.bf16.mxu0 0
        %1597 = vmatpush1.bf16.msra.mxu0 %v1382
        %1598 = vmatprep.subr.bf16.mxu0 0
        %1599 = vmatpush1.bf16.msra.mxu0 %v1383
        %1600 = vmatprep.mubr.bf16.mxu0 %v935
        %1601 = vmatmul.mubr.bf16.gmra.mrb[0].mxu0 %v934
        %v1602 = vpop.f32.mrb[0].mxu0
        %v1603 = vadd.f32 %v1563, %v1602
        %v1604 = vpop.f32.mrb[0].mxu0
        %v1605 = vpop.f32.mrb[0].mxu0
        %v1606 = vpop.f32.mrb[0].mxu0
        %1607 = vdwg.mxu0
        %v1608 = vadd.f32 %v927, %v1603
        %1609 = vst [vmem:[#allocation2] sm:$0xff] %v1608
        // Predicated region
        $region61: #{tpu_custom_call.1} parent=39 // pred_check
          %p1610 = pneg %p322
        $region62: #{tpu_custom_call.1} parent=39 // pred_check_branch
          %1612 = sbr.rel (%p1610) target = $region64
        $region63: #{tpu_custom_call.1} parent=39 // pred_region
          %v1613 = vld [vmem:[#allocation2] sm:$0xff]
          %v1614 = vld [vmem:[%s4] sm:$0x1]
          %v1616 = vlaneseq
          %v1617 = vshrl.u32 %v1616, 7
          %v1618 = vsub.s32 0, %v1617
          %v1619 = vrot.slane %v1614, %v1618
          %v1621 = vadd.f32 %v1613, %v1619
          %1622 = vst [vmem:[%s317] sm:$0xff] %v1621
        $region64: #{tpu_custom_call.1} parent=39 // pred_fallthru
          _
        %s1623 = sand.u32 %s169, 1
        %s1624 = scalar_lea.sflag [#allocation5], %s1623
        %s1625 = sand.u32 %s169, 1
        %s1626 = smul.addr %s1625, 8
        %s1627 = scalar_lea.vmem [#allocation11], %s1626
        // Predicated region
        $region65: #{tpu_custom_call.1} parent=39 // pred_check
          %p1628 = pneg %p179
        $region66: #{tpu_custom_call.1} parent=39 // pred_check_branch
          %1630 = sbr.rel (%p1628) target = $region68
        $region67: #{tpu_custom_call.1} parent=39 // pred_region
          %s1632 = ssub.s32 128, 128
          %1633 = vsyncadd %s1624, %s1632
          %s1634 = smul.addr %s28, 128
          %s1635 = scalar_lea.hbm %s5, %s1634
          %s1637 = sshll.u32 %s1627, 4
          %s1638 = int_to_ptr.vmem [resolvable:$true] %s1637
          %1640 = dma.vmem_to_hbm [thread:$0]  %s1638, 128, %s1635, %s1624
        $region68: #{tpu_custom_call.1} parent=39 // pred_fallthru
          _
      $region40: #{tpu_custom_call.1} parent=5 // pred_fallthru
        _
      %p1641 = scmp.le.s32.totalorder 2, %s19
      // Predicated region
      $region69: #{tpu_custom_call.1} parent=5 // pred_check
        %p1642 = pneg %p1641
      $region70: #{tpu_custom_call.1} parent=5 // pred_check_branch
        %1644 = sbr.rel (%p1642) target = $region72
      $region71: #{tpu_custom_call.1} parent=5 // pred_region
        %s1645 = ssub.s32 %s19, 2
        // Predicated region
        $region73: #{tpu_custom_call.1} parent=71 // pred_check
          %p1646 = pneg %p185
        $region74: #{tpu_custom_call.1} parent=71 // pred_check_branch
          %1648 = sbr.rel (%p1646) target = $region76
        $region75: #{tpu_custom_call.1} parent=71 // pred_region
          %s1649 = sand.u32 %s170, 1
          %s1650 = scalar_lea.sflag [#allocation5], %s1649
          %s1651 = sand.u32 %s170, 1
          %s1652 = smul.addr %s1651, 8
          %s1653 = scalar_lea.vmem [#allocation11], %s1652
          %1654 = dma.done %s1650, 128
        $region76: #{tpu_custom_call.1} parent=71 // pred_fallthru
          _
      $region72: #{tpu_custom_call.1} parent=5 // pred_fallthru
        _
    $region6: #{tpu_custom_call.1} parent=1 // loop_footer
      %s23 = sadd.s32 1, %s19
    $region7: #{tpu_custom_call.1} parent=1 // loop_footer_branch
      %18 = sbr.rel target = $region3
    $region8: #{tpu_custom_call.1} parent=1 // loop_exit
      _
    %1655 = vsyncpa [#allocation4], 1
    %s1656 = scalar_lea.sflag [#allocation4], 1
    %1657 = vsyncpa %s1656, 1
    %1658 = vsyncpa [#allocation7], 1
    %1659 = vsyncpa [#allocation10], 1
    %1660 = vsyncpa [#allocation5], 1
    %s1661 = scalar_lea.sflag [#allocation5], 1
    %1662 = vsyncpa %s1661, 1

</llo_original>
